<compile_context>
chip_gen: v6e
topology: v6e:2x2x1
jax: 0.10.0
libtpu: 0.0.40
codegen_flags: <defaults>
</compile_context>

<pallas_src>
import functools

import numpy as np
import jax
import jax.numpy as jnp
from jax.experimental import pallas as pl
from jax.experimental.pallas import tpu as pltpu

EPS = 1e-5          # nn.InstanceNorm2d default eps
NHIDDEN = 128       # SPADE nhidden
KS = 3              # kernel size from "spadeinstance3x3"
PW = KS // 2
CSEG = 8            # segmap channels zero-padded to one sublane group

_TAPS = [(ky, kx) for ky in range(KS) for kx in range(KS)]


def _spade_kernel(x_ref, seg_ref, colmask_ref, ws_ref, bs_ref, wgb_ref,
                  bgb_ref, o_ref, seg_ext, actv_ext, *, H, W, lpad):
    # x_ref      : (1, C, H*W)              f32   input features (channels-first)
    # seg_ref    : (1, CSEG, H*W)           bf16  nearest-resized segmap, ch padded to 8
    # colmask_ref: (2, H*W)                 f32   column-edge masks (x>0, x<W-1)
    # ws_ref     : (9, NH, CSEG)            bf16  mlp_shared weight, per tap
    # bs_ref     : (NH, 1)                  f32
    # wgb_ref    : (9, 2C, NH)              bf16  fused [gamma; beta] weight, per tap
    # bgb_ref    : (2C, 1)                  f32
    # o_ref      : (1, C, H*W)              f32
    # seg_ext    : VMEM (CSEG, 2*lpad+H*W)  bf16  width-padded segmap
    # actv_ext   : VMEM (NH,   2*lpad+H*W)  bf16  width-padded hidden activation
    HW = H * W
    C = x_ref.shape[1]
    NH = ws_ref.shape[1]
    CS = seg_ref.shape[1]

    # ---- param-free norm: InstanceNorm2d(affine=False), two-pass stats ------
    x = x_ref[0]                                             # (C, HW) f32
    mean = jnp.sum(x, axis=1, keepdims=True) * (1.0 / HW)
    xc = x - mean
    var = jnp.sum(xc * xc, axis=1, keepdims=True) * (1.0 / HW)   # biased variance
    normalized = xc * jax.lax.rsqrt(var + EPS)

    # ---- column-edge masks ---------------------------------------------------
    mask_f = colmask_ref[...]                                # (2, HW) f32
    mask_bf = mask_f.astype(jnp.bfloat16)                    # bf16 copy for seg taps

    # ---- segmap into width-padded scratch; aligned 128-wide halo zeroing -----
    # (kept per-step rather than under program_id==0 so megacore sharding of the
    #  "parallel" batch axis can never skip the init)
    zero_s = jnp.zeros((CS, lpad), jnp.bfloat16)
    seg_ext[:, 0:lpad] = zero_s
    seg_ext[:, lpad + HW:lpad + HW + lpad] = zero_s
    seg_ext[:, lpad:lpad + HW] = seg_ref[0]                  # lane-aligned store

    # ---- mlp_shared: 9 per-tap (NH,CS)@(CS,HW) MXU matmuls, f32 accumulate ---
    h = None
    for tap, (ky, kx) in enumerate(_TAPS):
        shift = (ky - PW) * W + (kx - PW)
        t = seg_ext[:, lpad + shift:lpad + shift + HW]       # (CS, HW) bf16
        if kx == 0:                                          # mask tiny input taps
            t = t * mask_bf[0:1, :]
        elif kx == KS - 1:
            t = t * mask_bf[1:2, :]
        p = jnp.dot(ws_ref[tap], t, preferred_element_type=jnp.float32)
        h = p if h is None else h + p
    actv = jnp.maximum(h + bs_ref[...], 0.0)                 # (NH, HW) f32
    actv_bf = actv.astype(jnp.bfloat16)

    # ---- hidden activation into its width-padded scratch ---------------------
    zero_a = jnp.zeros((NH, lpad), jnp.bfloat16)
    actv_ext[:, 0:lpad] = zero_a
    actv_ext[:, lpad + HW:lpad + HW + lpad] = zero_a
    actv_ext[:, lpad:lpad + HW] = actv_bf                    # lane-aligned store

    # ---- fused gamma/beta conv: 9 per-tap (2C,NH)@(NH,HW) matmuls ------------
    # edge masks applied to the 8-row f32 partials (W@(m*t) == m*(W@t))
    gb = None
    for tap, (ky, kx) in enumerate(_TAPS):
        shift = (ky - PW) * W + (kx - PW)
        if shift == 0:
            t = actv_bf                                      # center tap from register
        else:
            t = actv_ext[:, lpad + shift:lpad + shift + HW]  # (NH, HW) bf16
        p = jnp.dot(wgb_ref[tap], t, preferred_element_type=jnp.float32)
        if kx == 0:
            p = p * mask_f[0:1, :]
        elif kx == KS - 1:
            p = p * mask_f[1:2, :]
        gb = p if gb is None else gb + p
    gb = gb + bgb_ref[...]                                   # (2C, HW) f32
    gamma = gb[:C, :]
    beta = gb[C:2 * C, :]

    # ---- SPADE modulation (lane-dense output store) --------------------------
    o_ref[0] = normalized * (1.0 + gamma) + beta


def spade_forward(x, segmap, params):
    """SPADE forward. x: (N, C, H, W) f32, segmap: (N, Cl, Hs, Ws) f32 (NCHW)."""
    N, C, H, W = x.shape
    _, Cl, Hs, Ws = segmap.shape
    HW = H * W

    # -- glue: nearest resize of the segmap (matches F.interpolate 'nearest') --
    idx_h = (jnp.arange(H) * Hs) // H
    idx_w = (jnp.arange(W) * Ws) // W
    seg_rs = segmap[:, :, idx_h, :][:, :, :, idx_w]          # (N, Cl, H, W)
    seg8 = jnp.pad(seg_rs.reshape(N, Cl, HW),
                   ((0, 0), (0, CSEG - Cl), (0, 0))).astype(jnp.bfloat16)

    ws, bs = params["ws"], params["bs"]                      # (3,3,Cl,NH), (1,NH)
    wg, bg = params["wg"], params["bg"]                      # (3,3,NH,C), (1,C)
    wb, bb = params["wb"], params["bb"]
    NH = ws.shape[-1]

    # -- glue: per-tap weight packing, cast to bf16 -----------------------------
    ws3 = jnp.transpose(ws, (0, 1, 3, 2)).reshape(KS * KS, NH, Cl)
    ws3 = jnp.pad(ws3, ((0, 0), (0, 0), (0, CSEG - Cl))).astype(jnp.bfloat16)
    bs_col = bs.reshape(NH, 1).astype(jnp.float32)

    wgb = jnp.concatenate([wg, wb], axis=3)                  # (3,3,NH,2C)
    wgb3 = jnp.transpose(wgb, (0, 1, 3, 2)).reshape(KS * KS, 2 * C, NH)
    wgb3 = wgb3.astype(jnp.bfloat16)
    bgb_col = jnp.concatenate([bg.reshape(C), bb.reshape(C)]).reshape(2 * C, 1)
    bgb_col = bgb_col.astype(jnp.float32)

    # -- glue: static column-edge masks for the width-boundary taps ------------
    col = np.arange(HW) % W
    colmask = jnp.asarray(np.stack([(col > 0), (col < W - 1)]).astype(np.float32))

    x_flat = x.reshape(N, C, HW)

    # lane-aligned halo width (>= W+1, multiple of 128)
    lpad = ((W + 1 + 127) // 128) * 128
    kernel = functools.partial(_spade_kernel, H=H, W=W, lpad=lpad)

    # -- VMEM budget: scratch + 2x each pipelined block (+ headroom) -----------
    def nbytes(shape, itemsize):
        return int(np.prod(shape)) * itemsize

    scratch_bytes = (nbytes((CSEG, 2 * lpad + HW), 2) +
                     nbytes((NH, 2 * lpad + HW), 2))
    block_bytes = 2 * (nbytes((1, C, HW), 4) +               # x
                       nbytes((1, CSEG, HW), 2) +            # seg
                       nbytes((2, HW), 4) +                  # colmask
                       nbytes((KS * KS, NH, CSEG), 2) +      # ws
                       nbytes((NH, 1), 4) +                  # bs
                       nbytes((KS * KS, 2 * C, NH), 2) +     # wgb
                       nbytes((2 * C, 1), 4) +               # bgb
                       nbytes((1, C, HW), 4))                # out
    vmem_limit = int(min(max(scratch_bytes + block_bytes + (4 << 20), 16 << 20),
                         127 << 20))

    grid_spec = pltpu.PrefetchScalarGridSpec(
        num_scalar_prefetch=0,
        grid=(N,),
        in_specs=[
            pl.BlockSpec((1, C, HW), lambda n: (n, 0, 0)),
            pl.BlockSpec((1, CSEG, HW), lambda n: (n, 0, 0)),
            pl.BlockSpec((2, HW), lambda n: (0, 0)),
            pl.BlockSpec((KS * KS, NH, CSEG), lambda n: (0, 0, 0)),
            pl.BlockSpec((NH, 1), lambda n: (0, 0)),
            pl.BlockSpec((KS * KS, 2 * C, NH), lambda n: (0, 0, 0)),
            pl.BlockSpec((2 * C, 1), lambda n: (0, 0)),
        ],
        out_specs=pl.BlockSpec((1, C, HW), lambda n: (n, 0, 0)),
        scratch_shapes=[pltpu.VMEM((CSEG, 2 * lpad + HW), jnp.bfloat16),
                        pltpu.VMEM((NH, 2 * lpad + HW), jnp.bfloat16)],
    )
    out = pl.pallas_call(
        kernel,
        out_shape=jax.ShapeDtypeStruct((N, C, HW), jnp.float32),
        grid_spec=grid_spec,
        compiler_params=pltpu.CompilerParams(
            dimension_semantics=("parallel",),
            vmem_limit_bytes=vmem_limit),
    )(x_flat, seg8, colmask, ws3, bs_col, wgb3, bgb_col)
    return out.reshape(N, C, H, W)


def spade_reference(x, segmap, params, conv_dtype=jnp.float32):
    """Pure-JAX reference mirroring the PyTorch forward (NCHW)."""
    N, C, H, W = x.shape
    _, Cl, Hs, Ws = segmap.shape
    mean = jnp.mean(x, axis=(2, 3), keepdims=True)
    var = jnp.mean((x - mean) ** 2, axis=(2, 3), keepdims=True)
    normalized = (x - mean) * jax.lax.rsqrt(var + EPS)

    idx_h = (jnp.arange(H) * Hs) // H
    idx_w = (jnp.arange(W) * Ws) // W
    seg_rs = segmap[:, :, idx_h, :][:, :, :, idx_w]

    prec = (jax.lax.Precision.HIGHEST if conv_dtype == jnp.float32
            else jax.lax.Precision.DEFAULT)

    def conv(inp, w, b):
        y = jax.lax.conv_general_dilated(
            inp.astype(conv_dtype), w.astype(conv_dtype),
            window_strides=(1, 1), padding=((PW, PW), (PW, PW)),
            dimension_numbers=("NCHW", "HWIO", "NCHW"),
            preferred_element_type=jnp.float32, precision=prec)
        return y + b.reshape(1, -1, 1, 1)

    actv = jax.nn.relu(conv(seg_rs, params["ws"], params["bs"]))
    gamma = conv(actv, params["wg"], params["bg"])
    beta = conv(actv, params["wb"], params["bb"])
    return normalized * (1.0 + gamma) + beta


if __name__ == "__main__":
    # SPADE('spadeinstance3x3', norm_nc=4, label_nc=3) at small shapes.
    N, C, H, W = 2, 4, 16, 16
    Cl, Hs, Ws = 3, 8, 8

    key = jax.random.PRNGKey(0)
    k = jax.random.split(key, 8)
    x = jax.random.normal(k[0], (N, C, H, W), jnp.float32)      # NCHW like PyTorch
    seg = jax.random.normal(k[1], (N, Cl, Hs, Ws), jnp.float32)

    params = {
        "ws": 0.1 * jax.random.normal(k[2], (KS, KS, Cl, NHIDDEN), jnp.float32),
        "bs": 0.1 * jax.random.normal(k[3], (1, NHIDDEN), jnp.float32),
        "wg": 0.1 * jax.random.normal(k[4], (KS, KS, NHIDDEN, C), jnp.float32),
        "bg": 0.1 * jax.random.normal(k[5], (1, C), jnp.float32),
        "wb": 0.1 * jax.random.normal(k[6], (KS, KS, NHIDDEN, C), jnp.float32),
        "bb": 0.1 * jax.random.normal(k[7], (1, C), jnp.float32),
    }

    out = jax.block_until_ready(spade_forward(x, seg, params))
    assert out.shape == (N, C, H, W)

    # precision-matched reference (bf16 conv inputs, f32 accumulation)
    ref_bf16 = spade_reference(x, seg, params, conv_dtype=jnp.bfloat16)
    err_bf16 = jnp.max(jnp.abs(out - ref_bf16))
    assert jnp.allclose(out, ref_bf16, rtol=5e-3, atol=5e-3), \
        f"max abs err vs bf16-matched ref {err_bf16}"

    # loose semantic sanity check against the full-f32 reference
    ref_f32 = spade_reference(x, seg, params, conv_dtype=jnp.float32)
    err_f32 = jnp.max(jnp.abs(out - ref_f32))
    assert jnp.allclose(out, ref_f32, rtol=1e-1, atol=1e-1), \
        f"max abs err vs f32 ref {err_f32}"

    print("KERNEL_OK")
</pallas_src>

<mosaic_0001>
module attributes {stable_mosaic.version = 11 : i64} {
  func.func @_spade_kernel(%arg0: i32, %arg1: memref<1x4x256xf32, #tpu.memory_space<vmem>>, %arg2: memref<1x8x256xbf16, #tpu.memory_space<vmem>>, %arg3: memref<2x256xf32, #tpu.memory_space<vmem>>, %arg4: memref<9x128x8xbf16, #tpu.memory_space<vmem>>, %arg5: memref<128x1xf32, #tpu.memory_space<vmem>>, %arg6: memref<9x8x128xbf16, #tpu.memory_space<vmem>>, %arg7: memref<8x1xf32, #tpu.memory_space<vmem>>, %arg8: memref<1x4x256xf32, #tpu.memory_space<vmem>>, %arg9: memref<8x512xbf16, #tpu.memory_space<vmem>>, %arg10: memref<128x512xbf16, #tpu.memory_space<vmem>>) attributes {dimension_semantics = [#tpu.dimension_semantics<parallel>], iteration_bounds = array<i64: 2>, scalar_prefetch = 0 : i64, scratch_operands = 2 : i64, tpu.core_type = #tpu.core_type<tc>, window_params = [{transform_indices = @transform_0, window_bounds = array<i64: 1, 4, 256>}, {transform_indices = @transform_1, window_bounds = array<i64: 1, 8, 256>}, {pipeline_mode = #tpu.pipeline_mode<synchronous>, transform_indices = @transform_2, window_bounds = array<i64: 2, 256>}, {pipeline_mode = #tpu.pipeline_mode<synchronous>, transform_indices = @transform_3, window_bounds = array<i64: 9, 128, 8>}, {pipeline_mode = #tpu.pipeline_mode<synchronous>, transform_indices = @transform_4, window_bounds = array<i64: 128, 1>}, {pipeline_mode = #tpu.pipeline_mode<synchronous>, transform_indices = @transform_5, window_bounds = array<i64: 9, 8, 128>}, {pipeline_mode = #tpu.pipeline_mode<synchronous>, transform_indices = @transform_6, window_bounds = array<i64: 8, 1>}, {transform_indices = @transform_7, window_bounds = array<i64: 1, 4, 256>}]} {
    %c0 = arith.constant 0 : index
    %c0_0 = arith.constant 0 : index
    %c0_1 = arith.constant 0 : index
    %0 = vector.load %arg1[%c0, %c0_0, %c0_1] : memref<1x4x256xf32, #tpu.memory_space<vmem>>, vector<1x4x256xf32>
    %1 = vector.shape_cast %0 : vector<1x4x256xf32> to vector<4x256xf32>
    %cst = arith.constant dense<0.000000e+00> : vector<4xf32>
    %2 = vector.multi_reduction <add>, %1, %cst [1] : vector<4x256xf32> to vector<4xf32>
    %3 = vector.shape_cast %2 : vector<4xf32> to vector<4x1xf32>
    %cst_2 = arith.constant 3.906250e-03 : f32
    %4 = vector.broadcast %cst_2 : f32 to vector<4x1xf32>
    %5 = arith.mulf %3, %4 : vector<4x1xf32>
    %6 = vector.broadcast %5 : vector<4x1xf32> to vector<4x256xf32>
    %7 = arith.subf %1, %6 : vector<4x256xf32>
    %8 = arith.mulf %7, %7 : vector<4x256xf32>
    %cst_3 = arith.constant dense<0.000000e+00> : vector<4xf32>
    %9 = vector.multi_reduction <add>, %8, %cst_3 [1] : vector<4x256xf32> to vector<4xf32>
    %10 = vector.shape_cast %9 : vector<4xf32> to vector<4x1xf32>
    %cst_4 = arith.constant 3.906250e-03 : f32
    %11 = vector.broadcast %cst_4 : f32 to vector<4x1xf32>
    %12 = arith.mulf %10, %11 : vector<4x1xf32>
    %cst_5 = arith.constant 9.99999974E-6 : f32
    %13 = vector.broadcast %cst_5 : f32 to vector<4x1xf32>
    %14 = arith.addf %12, %13 : vector<4x1xf32>
    %15 = math.rsqrt %14 : vector<4x1xf32>
    %16 = vector.broadcast %15 : vector<4x1xf32> to vector<4x256xf32>
    %17 = arith.mulf %7, %16 : vector<4x256xf32>
    %c0_6 = arith.constant 0 : index
    %c0_7 = arith.constant 0 : index
    %18 = vector.load %arg3[%c0_6, %c0_7] : memref<2x256xf32, #tpu.memory_space<vmem>>, vector<2x256xf32>
    %19 = arith.truncf %18 : vector<2x256xf32> to vector<2x256xbf16>
    %cst_8 = arith.constant 0.000000e+00 : bf16
    %20 = vector.broadcast %cst_8 : bf16 to vector<8x128xbf16>
    %c0_9 = arith.constant 0 : index
    %c0_10 = arith.constant 0 : index
    %21 = vector.load %arg9[%c0_9, %c0_10] : memref<8x512xbf16, #tpu.memory_space<vmem>>, vector<8x128xbf16>
    tpu.vector_store %arg9[%c0_9, %c0_10], %20 {strides = array<i32>} : memref<8x512xbf16, #tpu.memory_space<vmem>>, vector<8x128xbf16>,
    %c0_11 = arith.constant 0 : index
    %c384 = arith.constant 384 : index
    %22 = vector.load %arg9[%c0_11, %c384] : memref<8x512xbf16, #tpu.memory_space<vmem>>, vector<8x128xbf16>
    tpu.vector_store %arg9[%c0_11, %c384], %20 {strides = array<i32>} : memref<8x512xbf16, #tpu.memory_space<vmem>>, vector<8x128xbf16>,
    %c0_12 = arith.constant 0 : index
    %c0_13 = arith.constant 0 : index
    %c0_14 = arith.constant 0 : index
    %23 = vector.load %arg2[%c0_12, %c0_13, %c0_14] : memref<1x8x256xbf16, #tpu.memory_space<vmem>>, vector<1x8x256xbf16>
    %24 = vector.shape_cast %23 : vector<1x8x256xbf16> to vector<8x256xbf16>
    %c0_15 = arith.constant 0 : index
    %c128 = arith.constant 128 : index
    %25 = vector.load %arg9[%c0_15, %c128] : memref<8x512xbf16, #tpu.memory_space<vmem>>, vector<8x256xbf16>
    tpu.vector_store %arg9[%c0_15, %c128], %24 {strides = array<i32>} : memref<8x512xbf16, #tpu.memory_space<vmem>>, vector<8x256xbf16>,
    %c0_16 = arith.constant 0 : index
    %c111 = arith.constant 111 : index
    %26 = vector.load %arg9[%c0_16, %c111] : memref<8x512xbf16, #tpu.memory_space<vmem>>, vector<8x256xbf16>
    %27 = vector.extract_strided_slice %19 {offsets = [0, 0], sizes = [1, 256], strides = [1, 1]} : vector<2x256xbf16> to vector<1x256xbf16>
    %28 = vector.broadcast %27 : vector<1x256xbf16> to vector<8x256xbf16>
    %29 = arith.mulf %26, %28 : vector<8x256xbf16>
    %c0_17 = arith.constant 0 : index
    %c0_18 = arith.constant 0 : index
    %c0_19 = arith.constant 0 : index
    %30 = vector.load %arg4[%c0_17, %c0_18, %c0_19] : memref<9x128x8xbf16, #tpu.memory_space<vmem>>, vector<1x128x8xbf16>
    %31 = vector.shape_cast %30 : vector<1x128x8xbf16> to vector<128x8xbf16>
    %cst_20 = arith.constant dense<0.000000e+00> : vector<128x256xf32>
    %32 = tpu.matmul %31, %29, %cst_20 {dimension_numbers = #tpu.dot_dimension_numbers<[1], [0], [0], [1], [0, 0, 1, 1], [], []>} : vector<128x8xbf16>, vector<8x256xbf16>, vector<128x256xf32> -> vector<128x256xf32>
    %c0_21 = arith.constant 0 : index
    %c112 = arith.constant 112 : index
    %33 = vector.load %arg9[%c0_21, %c112] : memref<8x512xbf16, #tpu.memory_space<vmem>>, vector<8x256xbf16>
    %c1 = arith.constant 1 : index
    %c0_22 = arith.constant 0 : index
    %c0_23 = arith.constant 0 : index
    %34 = vector.load %arg4[%c1, %c0_22, %c0_23] : memref<9x128x8xbf16, #tpu.memory_space<vmem>>, vector<1x128x8xbf16>
    %35 = vector.shape_cast %34 : vector<1x128x8xbf16> to vector<128x8xbf16>
    %cst_24 = arith.constant dense<0.000000e+00> : vector<128x256xf32>
    %36 = tpu.matmul %35, %33, %cst_24 {dimension_numbers = #tpu.dot_dimension_numbers<[1], [0], [0], [1], [0, 0, 1, 1], [], []>} : vector<128x8xbf16>, vector<8x256xbf16>, vector<128x256xf32> -> vector<128x256xf32>
    %37 = arith.addf %32, %36 : vector<128x256xf32>
    %c0_25 = arith.constant 0 : index
    %c113 = arith.constant 113 : index
    %38 = vector.load %arg9[%c0_25, %c113] : memref<8x512xbf16, #tpu.memory_space<vmem>>, vector<8x256xbf16>
    %39 = vector.extract_strided_slice %19 {offsets = [1, 0], sizes = [1, 256], strides = [1, 1]} : vector<2x256xbf16> to vector<1x256xbf16>
    %40 = vector.broadcast %39 : vector<1x256xbf16> to vector<8x256xbf16>
    %41 = arith.mulf %38, %40 : vector<8x256xbf16>
    %c2 = arith.constant 2 : index
    %c0_26 = arith.constant 0 : index
    %c0_27 = arith.constant 0 : index
    %42 = vector.load %arg4[%c2, %c0_26, %c0_27] : memref<9x128x8xbf16, #tpu.memory_space<vmem>>, vector<1x128x8xbf16>
    %43 = vector.shape_cast %42 : vector<1x128x8xbf16> to vector<128x8xbf16>
    %cst_28 = arith.constant dense<0.000000e+00> : vector<128x256xf32>
    %44 = tpu.matmul %43, %41, %cst_28 {dimension_numbers = #tpu.dot_dimension_numbers<[1], [0], [0], [1], [0, 0, 1, 1], [], []>} : vector<128x8xbf16>, vector<8x256xbf16>, vector<128x256xf32> -> vector<128x256xf32>
    %45 = arith.addf %37, %44 : vector<128x256xf32>
    %c0_29 = arith.constant 0 : index
    %c127 = arith.constant 127 : index
    %46 = vector.load %arg9[%c0_29, %c127] : memref<8x512xbf16, #tpu.memory_space<vmem>>, vector<8x256xbf16>
    %47 = vector.extract_strided_slice %19 {offsets = [0, 0], sizes = [1, 256], strides = [1, 1]} : vector<2x256xbf16> to vector<1x256xbf16>
    %48 = vector.broadcast %47 : vector<1x256xbf16> to vector<8x256xbf16>
    %49 = arith.mulf %46, %48 : vector<8x256xbf16>
    %c3 = arith.constant 3 : index
    %c0_30 = arith.constant 0 : index
    %c0_31 = arith.constant 0 : index
    %50 = vector.load %arg4[%c3, %c0_30, %c0_31] : memref<9x128x8xbf16, #tpu.memory_space<vmem>>, vector<1x128x8xbf16>
    %51 = vector.shape_cast %50 : vector<1x128x8xbf16> to vector<128x8xbf16>
    %cst_32 = arith.constant dense<0.000000e+00> : vector<128x256xf32>
    %52 = tpu.matmul %51, %49, %cst_32 {dimension_numbers = #tpu.dot_dimension_numbers<[1], [0], [0], [1], [0, 0, 1, 1], [], []>} : vector<128x8xbf16>, vector<8x256xbf16>, vector<128x256xf32> -> vector<128x256xf32>
    %53 = arith.addf %45, %52 : vector<128x256xf32>
    %c0_33 = arith.constant 0 : index
    %c128_34 = arith.constant 128 : index
    %54 = vector.load %arg9[%c0_33, %c128_34] : memref<8x512xbf16, #tpu.memory_space<vmem>>, vector<8x256xbf16>
    %c4 = arith.constant 4 : index
    %c0_35 = arith.constant 0 : index
    %c0_36 = arith.constant 0 : index
    %55 = vector.load %arg4[%c4, %c0_35, %c0_36] : memref<9x128x8xbf16, #tpu.memory_space<vmem>>, vector<1x128x8xbf16>
    %56 = vector.shape_cast %55 : vector<1x128x8xbf16> to vector<128x8xbf16>
    %cst_37 = arith.constant dense<0.000000e+00> : vector<128x256xf32>
    %57 = tpu.matmul %56, %54, %cst_37 {dimension_numbers = #tpu.dot_dimension_numbers<[1], [0], [0], [1], [0, 0, 1, 1], [], []>} : vector<128x8xbf16>, vector<8x256xbf16>, vector<128x256xf32> -> vector<128x256xf32>
    %58 = arith.addf %53, %57 : vector<128x256xf32>
    %c0_38 = arith.constant 0 : index
    %c129 = arith.constant 129 : index
    %59 = vector.load %arg9[%c0_38, %c129] : memref<8x512xbf16, #tpu.memory_space<vmem>>, vector<8x256xbf16>
    %60 = vector.extract_strided_slice %19 {offsets = [1, 0], sizes = [1, 256], strides = [1, 1]} : vector<2x256xbf16> to vector<1x256xbf16>
    %61 = vector.broadcast %60 : vector<1x256xbf16> to vector<8x256xbf16>
    %62 = arith.mulf %59, %61 : vector<8x256xbf16>
    %c5 = arith.constant 5 : index
    %c0_39 = arith.constant 0 : index
    %c0_40 = arith.constant 0 : index
    %63 = vector.load %arg4[%c5, %c0_39, %c0_40] : memref<9x128x8xbf16, #tpu.memory_space<vmem>>, vector<1x128x8xbf16>
    %64 = vector.shape_cast %63 : vector<1x128x8xbf16> to vector<128x8xbf16>
    %cst_41 = arith.constant dense<0.000000e+00> : vector<128x256xf32>
    %65 = tpu.matmul %64, %62, %cst_41 {dimension_numbers = #tpu.dot_dimension_numbers<[1], [0], [0], [1], [0, 0, 1, 1], [], []>} : vector<128x8xbf16>, vector<8x256xbf16>, vector<128x256xf32> -> vector<128x256xf32>
    %66 = arith.addf %58, %65 : vector<128x256xf32>
    %c0_42 = arith.constant 0 : index
    %c143 = arith.constant 143 : index
    %67 = vector.load %arg9[%c0_42, %c143] : memref<8x512xbf16, #tpu.memory_space<vmem>>, vector<8x256xbf16>
    %68 = vector.extract_strided_slice %19 {offsets = [0, 0], sizes = [1, 256], strides = [1, 1]} : vector<2x256xbf16> to vector<1x256xbf16>
    %69 = vector.broadcast %68 : vector<1x256xbf16> to vector<8x256xbf16>
    %70 = arith.mulf %67, %69 : vector<8x256xbf16>
    %c6 = arith.constant 6 : index
    %c0_43 = arith.constant 0 : index
    %c0_44 = arith.constant 0 : index
    %71 = vector.load %arg4[%c6, %c0_43, %c0_44] : memref<9x128x8xbf16, #tpu.memory_space<vmem>>, vector<1x128x8xbf16>
    %72 = vector.shape_cast %71 : vector<1x128x8xbf16> to vector<128x8xbf16>
    %cst_45 = arith.constant dense<0.000000e+00> : vector<128x256xf32>
    %73 = tpu.matmul %72, %70, %cst_45 {dimension_numbers = #tpu.dot_dimension_numbers<[1], [0], [0], [1], [0, 0, 1, 1], [], []>} : vector<128x8xbf16>, vector<8x256xbf16>, vector<128x256xf32> -> vector<128x256xf32>
    %74 = arith.addf %66, %73 : vector<128x256xf32>
    %c0_46 = arith.constant 0 : index
    %c144 = arith.constant 144 : index
    %75 = vector.load %arg9[%c0_46, %c144] : memref<8x512xbf16, #tpu.memory_space<vmem>>, vector<8x256xbf16>
    %c7 = arith.constant 7 : index
    %c0_47 = arith.constant 0 : index
    %c0_48 = arith.constant 0 : index
    %76 = vector.load %arg4[%c7, %c0_47, %c0_48] : memref<9x128x8xbf16, #tpu.memory_space<vmem>>, vector<1x128x8xbf16>
    %77 = vector.shape_cast %76 : vector<1x128x8xbf16> to vector<128x8xbf16>
    %cst_49 = arith.constant dense<0.000000e+00> : vector<128x256xf32>
    %78 = tpu.matmul %77, %75, %cst_49 {dimension_numbers = #tpu.dot_dimension_numbers<[1], [0], [0], [1], [0, 0, 1, 1], [], []>} : vector<128x8xbf16>, vector<8x256xbf16>, vector<128x256xf32> -> vector<128x256xf32>
    %79 = arith.addf %74, %78 : vector<128x256xf32>
    %c0_50 = arith.constant 0 : index
    %c145 = arith.constant 145 : index
    %80 = vector.load %arg9[%c0_50, %c145] : memref<8x512xbf16, #tpu.memory_space<vmem>>, vector<8x256xbf16>
    %81 = vector.extract_strided_slice %19 {offsets = [1, 0], sizes = [1, 256], strides = [1, 1]} : vector<2x256xbf16> to vector<1x256xbf16>
    %82 = vector.broadcast %81 : vector<1x256xbf16> to vector<8x256xbf16>
    %83 = arith.mulf %80, %82 : vector<8x256xbf16>
    %c8 = arith.constant 8 : index
    %c0_51 = arith.constant 0 : index
    %c0_52 = arith.constant 0 : index
    %84 = vector.load %arg4[%c8, %c0_51, %c0_52] : memref<9x128x8xbf16, #tpu.memory_space<vmem>>, vector<1x128x8xbf16>
    %85 = vector.shape_cast %84 : vector<1x128x8xbf16> to vector<128x8xbf16>
    %cst_53 = arith.constant dense<0.000000e+00> : vector<128x256xf32>
    %86 = tpu.matmul %85, %83, %cst_53 {dimension_numbers = #tpu.dot_dimension_numbers<[1], [0], [0], [1], [0, 0, 1, 1], [], []>} : vector<128x8xbf16>, vector<8x256xbf16>, vector<128x256xf32> -> vector<128x256xf32>
    %87 = arith.addf %79, %86 : vector<128x256xf32>
    %c0_54 = arith.constant 0 : index
    %c0_55 = arith.constant 0 : index
    %88 = vector.load %arg5[%c0_54, %c0_55] : memref<128x1xf32, #tpu.memory_space<vmem>>, vector<128x1xf32>
    %89 = vector.broadcast %88 : vector<128x1xf32> to vector<128x256xf32>
    %90 = arith.addf %87, %89 : vector<128x256xf32>
    %cst_56 = arith.constant 0.000000e+00 : f32
    %91 = vector.broadcast %cst_56 : f32 to vector<128x256xf32>
    %92 = arith.maximumf %90, %91 : vector<128x256xf32>
    %93 = arith.truncf %92 : vector<128x256xf32> to vector<128x256xbf16>
    %cst_57 = arith.constant 0.000000e+00 : bf16
    %94 = vector.broadcast %cst_57 : bf16 to vector<128x128xbf16>
    %c0_58 = arith.constant 0 : index
    %c0_59 = arith.constant 0 : index
    %95 = vector.load %arg10[%c0_58, %c0_59] : memref<128x512xbf16, #tpu.memory_space<vmem>>, vector<128x128xbf16>
    tpu.vector_store %arg10[%c0_58, %c0_59], %94 {strides = array<i32>} : memref<128x512xbf16, #tpu.memory_space<vmem>>, vector<128x128xbf16>,
    %c0_60 = arith.constant 0 : index
    %c384_61 = arith.constant 384 : index
    %96 = vector.load %arg10[%c0_60, %c384_61] : memref<128x512xbf16, #tpu.memory_space<vmem>>, vector<128x128xbf16>
    tpu.vector_store %arg10[%c0_60, %c384_61], %94 {strides = array<i32>} : memref<128x512xbf16, #tpu.memory_space<vmem>>, vector<128x128xbf16>,
    %c0_62 = arith.constant 0 : index
    %c128_63 = arith.constant 128 : index
    %97 = vector.load %arg10[%c0_62, %c128_63] : memref<128x512xbf16, #tpu.memory_space<vmem>>, vector<128x256xbf16>
    tpu.vector_store %arg10[%c0_62, %c128_63], %93 {strides = array<i32>} : memref<128x512xbf16, #tpu.memory_space<vmem>>, vector<128x256xbf16>,
    %c0_64 = arith.constant 0 : index
    %c111_65 = arith.constant 111 : index
    %98 = vector.load %arg10[%c0_64, %c111_65] : memref<128x512xbf16, #tpu.memory_space<vmem>>, vector<128x256xbf16>
    %c0_66 = arith.constant 0 : index
    %c0_67 = arith.constant 0 : index
    %c0_68 = arith.constant 0 : index
    %99 = vector.load %arg6[%c0_66, %c0_67, %c0_68] : memref<9x8x128xbf16, #tpu.memory_space<vmem>>, vector<1x8x128xbf16>
    %100 = vector.shape_cast %99 : vector<1x8x128xbf16> to vector<8x128xbf16>
    %cst_69 = arith.constant dense<0.000000e+00> : vector<8x256xf32>
    %101 = tpu.matmul %100, %98, %cst_69 {dimension_numbers = #tpu.dot_dimension_numbers<[1], [0], [0], [1], [0, 0, 1, 1], [], []>} : vector<8x128xbf16>, vector<128x256xbf16>, vector<8x256xf32> -> vector<8x256xf32>
    %102 = vector.extract_strided_slice %18 {offsets = [0, 0], sizes = [1, 256], strides = [1, 1]} : vector<2x256xf32> to vector<1x256xf32>
    %103 = vector.broadcast %102 : vector<1x256xf32> to vector<8x256xf32>
    %104 = arith.mulf %101, %103 : vector<8x256xf32>
    %c0_70 = arith.constant 0 : index
    %c112_71 = arith.constant 112 : index
    %105 = vector.load %arg10[%c0_70, %c112_71] : memref<128x512xbf16, #tpu.memory_space<vmem>>, vector<128x256xbf16>
    %c1_72 = arith.constant 1 : index
    %c0_73 = arith.constant 0 : index
    %c0_74 = arith.constant 0 : index
    %106 = vector.load %arg6[%c1_72, %c0_73, %c0_74] : memref<9x8x128xbf16, #tpu.memory_space<vmem>>, vector<1x8x128xbf16>
    %107 = vector.shape_cast %106 : vector<1x8x128xbf16> to vector<8x128xbf16>
    %cst_75 = arith.constant dense<0.000000e+00> : vector<8x256xf32>
    %108 = tpu.matmul %107, %105, %cst_75 {dimension_numbers = #tpu.dot_dimension_numbers<[1], [0], [0], [1], [0, 0, 1, 1], [], []>} : vector<8x128xbf16>, vector<128x256xbf16>, vector<8x256xf32> -> vector<8x256xf32>
    %109 = arith.addf %104, %108 : vector<8x256xf32>
    %c0_76 = arith.constant 0 : index
    %c113_77 = arith.constant 113 : index
    %110 = vector.load %arg10[%c0_76, %c113_77] : memref<128x512xbf16, #tpu.memory_space<vmem>>, vector<128x256xbf16>
    %c2_78 = arith.constant 2 : index
    %c0_79 = arith.constant 0 : index
    %c0_80 = arith.constant 0 : index
    %111 = vector.load %arg6[%c2_78, %c0_79, %c0_80] : memref<9x8x128xbf16, #tpu.memory_space<vmem>>, vector<1x8x128xbf16>
    %112 = vector.shape_cast %111 : vector<1x8x128xbf16> to vector<8x128xbf16>
    %cst_81 = arith.constant dense<0.000000e+00> : vector<8x256xf32>
    %113 = tpu.matmul %112, %110, %cst_81 {dimension_numbers = #tpu.dot_dimension_numbers<[1], [0], [0], [1], [0, 0, 1, 1], [], []>} : vector<8x128xbf16>, vector<128x256xbf16>, vector<8x256xf32> -> vector<8x256xf32>
    %114 = vector.extract_strided_slice %18 {offsets = [1, 0], sizes = [1, 256], strides = [1, 1]} : vector<2x256xf32> to vector<1x256xf32>
    %115 = vector.broadcast %114 : vector<1x256xf32> to vector<8x256xf32>
    %116 = arith.mulf %113, %115 : vector<8x256xf32>
    %117 = arith.addf %109, %116 : vector<8x256xf32>
    %c0_82 = arith.constant 0 : index
    %c127_83 = arith.constant 127 : index
    %118 = vector.load %arg10[%c0_82, %c127_83] : memref<128x512xbf16, #tpu.memory_space<vmem>>, vector<128x256xbf16>
    %c3_84 = arith.constant 3 : index
    %c0_85 = arith.constant 0 : index
    %c0_86 = arith.constant 0 : index
    %119 = vector.load %arg6[%c3_84, %c0_85, %c0_86] : memref<9x8x128xbf16, #tpu.memory_space<vmem>>, vector<1x8x128xbf16>
    %120 = vector.shape_cast %119 : vector<1x8x128xbf16> to vector<8x128xbf16>
    %cst_87 = arith.constant dense<0.000000e+00> : vector<8x256xf32>
    %121 = tpu.matmul %120, %118, %cst_87 {dimension_numbers = #tpu.dot_dimension_numbers<[1], [0], [0], [1], [0, 0, 1, 1], [], []>} : vector<8x128xbf16>, vector<128x256xbf16>, vector<8x256xf32> -> vector<8x256xf32>
    %122 = vector.extract_strided_slice %18 {offsets = [0, 0], sizes = [1, 256], strides = [1, 1]} : vector<2x256xf32> to vector<1x256xf32>
    %123 = vector.broadcast %122 : vector<1x256xf32> to vector<8x256xf32>
    %124 = arith.mulf %121, %123 : vector<8x256xf32>
    %125 = arith.addf %117, %124 : vector<8x256xf32>
    %c4_88 = arith.constant 4 : index
    %c0_89 = arith.constant 0 : index
    %c0_90 = arith.constant 0 : index
    %126 = vector.load %arg6[%c4_88, %c0_89, %c0_90] : memref<9x8x128xbf16, #tpu.memory_space<vmem>>, vector<1x8x128xbf16>
    %127 = vector.shape_cast %126 : vector<1x8x128xbf16> to vector<8x128xbf16>
    %cst_91 = arith.constant dense<0.000000e+00> : vector<8x256xf32>
    %128 = tpu.matmul %127, %93, %cst_91 {dimension_numbers = #tpu.dot_dimension_numbers<[1], [0], [0], [1], [0, 0, 1, 1], [], []>} : vector<8x128xbf16>, vector<128x256xbf16>, vector<8x256xf32> -> vector<8x256xf32>
    %129 = arith.addf %125, %128 : vector<8x256xf32>
    %c0_92 = arith.constant 0 : index
    %c129_93 = arith.constant 129 : index
    %130 = vector.load %arg10[%c0_92, %c129_93] : memref<128x512xbf16, #tpu.memory_space<vmem>>, vector<128x256xbf16>
    %c5_94 = arith.constant 5 : index
    %c0_95 = arith.constant 0 : index
    %c0_96 = arith.constant 0 : index
    %131 = vector.load %arg6[%c5_94, %c0_95, %c0_96] : memref<9x8x128xbf16, #tpu.memory_space<vmem>>, vector<1x8x128xbf16>
    %132 = vector.shape_cast %131 : vector<1x8x128xbf16> to vector<8x128xbf16>
    %cst_97 = arith.constant dense<0.000000e+00> : vector<8x256xf32>
    %133 = tpu.matmul %132, %130, %cst_97 {dimension_numbers = #tpu.dot_dimension_numbers<[1], [0], [0], [1], [0, 0, 1, 1], [], []>} : vector<8x128xbf16>, vector<128x256xbf16>, vector<8x256xf32> -> vector<8x256xf32>
    %134 = vector.extract_strided_slice %18 {offsets = [1, 0], sizes = [1, 256], strides = [1, 1]} : vector<2x256xf32> to vector<1x256xf32>
    %135 = vector.broadcast %134 : vector<1x256xf32> to vector<8x256xf32>
    %136 = arith.mulf %133, %135 : vector<8x256xf32>
    %137 = arith.addf %129, %136 : vector<8x256xf32>
    %c0_98 = arith.constant 0 : index
    %c143_99 = arith.constant 143 : index
    %138 = vector.load %arg10[%c0_98, %c143_99] : memref<128x512xbf16, #tpu.memory_space<vmem>>, vector<128x256xbf16>
    %c6_100 = arith.constant 6 : index
    %c0_101 = arith.constant 0 : index
    %c0_102 = arith.constant 0 : index
    %139 = vector.load %arg6[%c6_100, %c0_101, %c0_102] : memref<9x8x128xbf16, #tpu.memory_space<vmem>>, vector<1x8x128xbf16>
    %140 = vector.shape_cast %139 : vector<1x8x128xbf16> to vector<8x128xbf16>
    %cst_103 = arith.constant dense<0.000000e+00> : vector<8x256xf32>
    %141 = tpu.matmul %140, %138, %cst_103 {dimension_numbers = #tpu.dot_dimension_numbers<[1], [0], [0], [1], [0, 0, 1, 1], [], []>} : vector<8x128xbf16>, vector<128x256xbf16>, vector<8x256xf32> -> vector<8x256xf32>
    %142 = vector.extract_strided_slice %18 {offsets = [0, 0], sizes = [1, 256], strides = [1, 1]} : vector<2x256xf32> to vector<1x256xf32>
    %143 = vector.broadcast %142 : vector<1x256xf32> to vector<8x256xf32>
    %144 = arith.mulf %141, %143 : vector<8x256xf32>
    %145 = arith.addf %137, %144 : vector<8x256xf32>
    %c0_104 = arith.constant 0 : index
    %c144_105 = arith.constant 144 : index
    %146 = vector.load %arg10[%c0_104, %c144_105] : memref<128x512xbf16, #tpu.memory_space<vmem>>, vector<128x256xbf16>
    %c7_106 = arith.constant 7 : index
    %c0_107 = arith.constant 0 : index
    %c0_108 = arith.constant 0 : index
    %147 = vector.load %arg6[%c7_106, %c0_107, %c0_108] : memref<9x8x128xbf16, #tpu.memory_space<vmem>>, vector<1x8x128xbf16>
    %148 = vector.shape_cast %147 : vector<1x8x128xbf16> to vector<8x128xbf16>
    %cst_109 = arith.constant dense<0.000000e+00> : vector<8x256xf32>
    %149 = tpu.matmul %148, %146, %cst_109 {dimension_numbers = #tpu.dot_dimension_numbers<[1], [0], [0], [1], [0, 0, 1, 1], [], []>} : vector<8x128xbf16>, vector<128x256xbf16>, vector<8x256xf32> -> vector<8x256xf32>
    %150 = arith.addf %145, %149 : vector<8x256xf32>
    %c0_110 = arith.constant 0 : index
    %c145_111 = arith.constant 145 : index
    %151 = vector.load %arg10[%c0_110, %c145_111] : memref<128x512xbf16, #tpu.memory_space<vmem>>, vector<128x256xbf16>
    %c8_112 = arith.constant 8 : index
    %c0_113 = arith.constant 0 : index
    %c0_114 = arith.constant 0 : index
    %152 = vector.load %arg6[%c8_112, %c0_113, %c0_114] : memref<9x8x128xbf16, #tpu.memory_space<vmem>>, vector<1x8x128xbf16>
    %153 = vector.shape_cast %152 : vector<1x8x128xbf16> to vector<8x128xbf16>
    %cst_115 = arith.constant dense<0.000000e+00> : vector<8x256xf32>
    %154 = tpu.matmul %153, %151, %cst_115 {dimension_numbers = #tpu.dot_dimension_numbers<[1], [0], [0], [1], [0, 0, 1, 1], [], []>} : vector<8x128xbf16>, vector<128x256xbf16>, vector<8x256xf32> -> vector<8x256xf32>
    %155 = vector.extract_strided_slice %18 {offsets = [1, 0], sizes = [1, 256], strides = [1, 1]} : vector<2x256xf32> to vector<1x256xf32>
    %156 = vector.broadcast %155 : vector<1x256xf32> to vector<8x256xf32>
    %157 = arith.mulf %154, %156 : vector<8x256xf32>
    %158 = arith.addf %150, %157 : vector<8x256xf32>
    %c0_116 = arith.constant 0 : index
    %c0_117 = arith.constant 0 : index
    %159 = vector.load %arg7[%c0_116, %c0_117] : memref<8x1xf32, #tpu.memory_space<vmem>>, vector<8x1xf32>
    %160 = vector.broadcast %159 : vector<8x1xf32> to vector<8x256xf32>
    %161 = arith.addf %158, %160 : vector<8x256xf32>
    %162 = vector.extract_strided_slice %161 {offsets = [0, 0], sizes = [4, 256], strides = [1, 1]} : vector<8x256xf32> to vector<4x256xf32>
    %163 = vector.extract_strided_slice %161 {offsets = [4, 0], sizes = [4, 256], strides = [1, 1]} : vector<8x256xf32> to vector<4x256xf32>
    %cst_118 = arith.constant 1.000000e+00 : f32
    %164 = vector.broadcast %cst_118 : f32 to vector<4x256xf32>
    %165 = arith.addf %164, %162 : vector<4x256xf32>
    %166 = arith.mulf %17, %165 : vector<4x256xf32>
    %167 = arith.addf %166, %163 : vector<4x256xf32>
    %c0_119 = arith.constant 0 : index
    %c0_120 = arith.constant 0 : index
    %c0_121 = arith.constant 0 : index
    %168 = vector.load %arg8[%c0_119, %c0_120, %c0_121] : memref<1x4x256xf32, #tpu.memory_space<vmem>>, vector<1x4x256xf32>
    %169 = vector.shape_cast %168 : vector<1x4x256xf32> to vector<4x256xf32>
    %170 = vector.shape_cast %167 : vector<4x256xf32> to vector<1x4x256xf32>
    tpu.vector_store %arg8[%c0_119, %c0_120, %c0_121], %170 {strides = array<i32>} : memref<1x4x256xf32, #tpu.memory_space<vmem>>, vector<1x4x256xf32>,
    return
  }
  func.func @transform_0(%arg0: i32) -> (i32, i32, i32) {
    %c0_i32 = arith.constant 0 : i32
    %c0_i32_0 = arith.constant 0 : i32
    %c0_i32_1 = arith.constant 0 : i32
    return %arg0, %c0_i32, %c0_i32_0 : i32, i32, i32
  }
  func.func @transform_1(%arg0: i32) -> (i32, i32, i32) {
    %c0_i32 = arith.constant 0 : i32
    %c0_i32_0 = arith.constant 0 : i32
    %c0_i32_1 = arith.constant 0 : i32
    return %arg0, %c0_i32, %c0_i32_0 : i32, i32, i32
  }
  func.func @transform_2(%arg0: i32) -> (i32, i32) {
    %c0_i32 = arith.constant 0 : i32
    %c0_i32_0 = arith.constant 0 : i32
    %c0_i32_1 = arith.constant 0 : i32
    return %c0_i32, %c0_i32_0 : i32, i32
  }
  func.func @transform_3(%arg0: i32) -> (i32, i32, i32) {
    %c0_i32 = arith.constant 0 : i32
    %c0_i32_0 = arith.constant 0 : i32
    %c0_i32_1 = arith.constant 0 : i32
    %c0_i32_2 = arith.constant 0 : i32
    return %c0_i32, %c0_i32_0, %c0_i32_1 : i32, i32, i32
  }
  func.func @transform_4(%arg0: i32) -> (i32, i32) {
    %c0_i32 = arith.constant 0 : i32
    %c0_i32_0 = arith.constant 0 : i32
    %c0_i32_1 = arith.constant 0 : i32
    return %c0_i32, %c0_i32_0 : i32, i32
  }
  func.func @transform_5(%arg0: i32) -> (i32, i32, i32) {
    %c0_i32 = arith.constant 0 : i32
    %c0_i32_0 = arith.constant 0 : i32
    %c0_i32_1 = arith.constant 0 : i32
    %c0_i32_2 = arith.constant 0 : i32
    return %c0_i32, %c0_i32_0, %c0_i32_1 : i32, i32, i32
  }
  func.func @transform_6(%arg0: i32) -> (i32, i32) {
    %c0_i32 = arith.constant 0 : i32
    %c0_i32_0 = arith.constant 0 : i32
    %c0_i32_1 = arith.constant 0 : i32
    return %c0_i32, %c0_i32_0 : i32, i32
  }
  func.func @transform_7(%arg0: i32) -> (i32, i32, i32) {
    %c0_i32 = arith.constant 0 : i32
    %c0_i32_0 = arith.constant 0 : i32
    %c0_i32_1 = arith.constant 0 : i32
    return %arg0, %c0_i32, %c0_i32_0 : i32, i32, i32
  }
}

</mosaic_0001>

<llo_original>
// kernel: tpu_custom_call.1
$region0: #{tpu_custom_call.1}
  #allocation0 [shape = 'u32[]', space=smem, size = 0x4, offset = 0x4, fixed_abs, tag = 'smem constant byte address 0x4 - core index']
  #allocation1 [shape = 'u32[144,128]{1,0:T(1,128)}', space=vmem, size = 0x12000, scoped, tag = 'internal scratch']
  #allocation2 [shape = 'bf16[8,512]{1,0:T(8,128)(2,1)}', space=vmem, size = 0x2000, scoped, tag = 'scratch operand']
  #allocation3 [shape = 'bf16[128,512]{1,0:T(8,128)(2,1)}', space=vmem, size = 0x20000, scoped, tag = 'scratch operand']
  %s0 = inlined_call_operand.vmem [shape: f32[2,4,256], index: 0, kind: input, shape index: {}]
  %s1 = inlined_call_operand.vmem [shape: bf16[2,8,256], index: 1, kind: input, shape index: {}]
  %s2 = inlined_call_operand.vmem [shape: f32[2,256], index: 2, kind: input, shape index: {}]
  %s3 = inlined_call_operand.vmem [shape: bf16[9,128,8], index: 3, kind: input, shape index: {}]
  %s4 = inlined_call_operand.vmem [shape: f32[128,1], index: 4, kind: input, shape index: {}]
  %s5 = inlined_call_operand.vmem [shape: bf16[9,8,128], index: 5, kind: input, shape index: {}]
  %s6 = inlined_call_operand.vmem [shape: f32[8,1], index: 6, kind: input, shape index: {}]
  %s7 = inlined_call_operand.hbm [shape: f32[2,4,256], index: 7, kind: output, shape index: {}]
  %s8 = sld [smem:[#allocation0]]
  $region61: #{tpu_custom_call.1} parent=0
    _
  %s10 = ssub.s32 1, %s8
  %s11 = scalar_select 0, %s10, %s8
  $region1: #{tpu_custom_call.1} parent=0
    #allocation4 [shape = 'u8[8192]{0}', space=vmem, size = 0x2000, scoped, tag = 'output window, operand 0']
    #allocation5 [shape = 's32[2]{0}', space=sflag, size = 0x8, scoped, tag = 'scoped memory for tpu_custom_call.1']
    %12 = vsyncpa [#allocation5], 0
    %s13 = scalar_lea.sflag [#allocation5], 1
    %14 = vsyncpa %s13, 0
    loop: start=0, step=1, limit=4
    $region2: #{tpu_custom_call.1} parent=1 // loop_pre_header
      _
    $region3: #{tpu_custom_call.1} parent=1 // loop_header
      %s16 = sphi 0, %s20
      %p17 = scmp.ge.s32.totalorder %s16, 4
      %s26 = sphi 0, %s28
      %s29 = sphi 0, %s26
      %s30 = sphi 0, %s29
      %s46 = sphi 0, %s30
      %s52 = sphi 0, %s54
      %s55 = sphi 0, %s52
      %s56 = sphi 0, %s55
      %s72 = sphi 0, %s56
      %s76 = sphi 0, %s76
      %s78 = sphi 0, %s76
      %s79 = sphi 0, %s78
      %s93 = sphi 0, %s79
      %s97 = sphi 0, %s97
      %s99 = sphi 0, %s97
      %s100 = sphi 0, %s99
      %s114 = sphi 0, %s100
      %s118 = sphi 0, %s118
      %s120 = sphi 0, %s118
      %s121 = sphi 0, %s120
      %s135 = sphi 0, %s121
      %s139 = sphi 0, %s139
      %s141 = sphi 0, %s139
      %s142 = sphi 0, %s141
      %s156 = sphi 0, %s142
      %s160 = sphi 0, %s160
      %s162 = sphi 0, %s160
      %s163 = sphi 0, %s162
      %s177 = sphi 0, %s163
      %s183 = sphi 0, %s185
      %s186 = sphi 0, %s183
      %s187 = sphi 0, %s186
      %s203 = sphi 0, %s187
    $region4: #{tpu_custom_call.1} parent=1 // loop_header_branch
      %19 = sbr.rel (%p17) target = $region8
    $region5: #{tpu_custom_call.1} parent=1 // loop_body
      %s21 = ssub.s32 %s16, 1
      %s22 = ssub.s32 %s16, 2
      %s23 = sadd.s32 %s16, 1
      %s24 = ssub.s32 %s16, %s23
      %p25 = scmp.eq.s32.totalorder %s24, 0
      %s27 = sadd.s32 %s26, 1
      %s28 = scalar_select %p25, %s26, %s27
      %p31 = pneg %p25
      %p32 = scmp.eq.s32.totalorder %s16, 1
      %p33 = por %p31, %p32
      %p34 = scmp.ne.s32.totalorder %s26, %s29
      %p35 = scmp.eq.s32.totalorder %s16, 0
      %p36 = por %p34, %p35
      %p37 = scmp.ne.s32.totalorder %s26, %s29
      %p38 = scmp.eq.s32.totalorder %s21, 1
      %p39 = por %p37, %p38
      %p40 = scmp.ne.s32.totalorder %s29, %s30
      %p41 = scmp.eq.s32.totalorder %s21, 0
      %p42 = por %p40, %p41
      %p43 = scmp.ne.s32.totalorder %s29, %s30
      %p44 = scmp.eq.s32.totalorder %s22, 1
      %p45 = por %p43, %p44
      %p47 = scmp.ne.s32.totalorder %s30, %s46
      %p48 = scmp.eq.s32.totalorder %s22, 0
      %p49 = por %p47, %p48
      %s50 = ssub.s32 %s16, %s23
      %p51 = scmp.eq.s32.totalorder %s50, 0
      %s53 = sadd.s32 %s52, 1
      %s54 = scalar_select %p51, %s52, %s53
      %p57 = pneg %p51
      %p58 = scmp.eq.s32.totalorder %s16, 1
      %p59 = por %p57, %p58
      %p60 = scmp.ne.s32.totalorder %s52, %s55
      %p61 = scmp.eq.s32.totalorder %s16, 0
      %p62 = por %p60, %p61
      %p63 = scmp.ne.s32.totalorder %s52, %s55
      %p64 = scmp.eq.s32.totalorder %s21, 1
      %p65 = por %p63, %p64
      %p66 = scmp.ne.s32.totalorder %s55, %s56
      %p67 = scmp.eq.s32.totalorder %s21, 0
      %p68 = por %p66, %p67
      %p69 = scmp.ne.s32.totalorder %s55, %s56
      %p70 = scmp.eq.s32.totalorder %s22, 1
      %p71 = por %p69, %p70
      %p73 = scmp.ne.s32.totalorder %s56, %s72
      %p74 = scmp.eq.s32.totalorder %s22, 0
      %p75 = por %p73, %p74
      %s77 = sadd.s32 %s76, 1
      %p80 = scmp.eq.s32.totalorder %s16, 1
      %p81 = scmp.ne.s32.totalorder %s76, %s78
      %p82 = scmp.eq.s32.totalorder %s16, 0
      %p83 = por %p81, %p82
      %p84 = scmp.ne.s32.totalorder %s76, %s78
      %p85 = scmp.eq.s32.totalorder %s21, 1
      %p86 = por %p84, %p85
      %p87 = scmp.ne.s32.totalorder %s78, %s79
      %p88 = scmp.eq.s32.totalorder %s21, 0
      %p89 = por %p87, %p88
      %p90 = scmp.ne.s32.totalorder %s78, %s79
      %p91 = scmp.eq.s32.totalorder %s22, 1
      %p92 = por %p90, %p91
      %p94 = scmp.ne.s32.totalorder %s79, %s93
      %p95 = scmp.eq.s32.totalorder %s22, 0
      %p96 = por %p94, %p95
      %s98 = sadd.s32 %s97, 1
      %p101 = scmp.eq.s32.totalorder %s16, 1
      %p102 = scmp.ne.s32.totalorder %s97, %s99
      %p103 = scmp.eq.s32.totalorder %s16, 0
      %p104 = por %p102, %p103
      %p105 = scmp.ne.s32.totalorder %s97, %s99
      %p106 = scmp.eq.s32.totalorder %s21, 1
      %p107 = por %p105, %p106
      %p108 = scmp.ne.s32.totalorder %s99, %s100
      %p109 = scmp.eq.s32.totalorder %s21, 0
      %p110 = por %p108, %p109
      %p111 = scmp.ne.s32.totalorder %s99, %s100
      %p112 = scmp.eq.s32.totalorder %s22, 1
      %p113 = por %p111, %p112
      %p115 = scmp.ne.s32.totalorder %s100, %s114
      %p116 = scmp.eq.s32.totalorder %s22, 0
      %p117 = por %p115, %p116
      %s119 = sadd.s32 %s118, 1
      %p122 = scmp.eq.s32.totalorder %s16, 1
      %p123 = scmp.ne.s32.totalorder %s118, %s120
      %p124 = scmp.eq.s32.totalorder %s16, 0
      %p125 = por %p123, %p124
      %p126 = scmp.ne.s32.totalorder %s118, %s120
      %p127 = scmp.eq.s32.totalorder %s21, 1
      %p128 = por %p126, %p127
      %p129 = scmp.ne.s32.totalorder %s120, %s121
      %p130 = scmp.eq.s32.totalorder %s21, 0
      %p131 = por %p129, %p130
      %p132 = scmp.ne.s32.totalorder %s120, %s121
      %p133 = scmp.eq.s32.totalorder %s22, 1
      %p134 = por %p132, %p133
      %p136 = scmp.ne.s32.totalorder %s121, %s135
      %p137 = scmp.eq.s32.totalorder %s22, 0
      %p138 = por %p136, %p137
      %s140 = sadd.s32 %s139, 1
      %p143 = scmp.eq.s32.totalorder %s16, 1
      %p144 = scmp.ne.s32.totalorder %s139, %s141
      %p145 = scmp.eq.s32.totalorder %s16, 0
      %p146 = por %p144, %p145
      %p147 = scmp.ne.s32.totalorder %s139, %s141
      %p148 = scmp.eq.s32.totalorder %s21, 1
      %p149 = por %p147, %p148
      %p150 = scmp.ne.s32.totalorder %s141, %s142
      %p151 = scmp.eq.s32.totalorder %s21, 0
      %p152 = por %p150, %p151
      %p153 = scmp.ne.s32.totalorder %s141, %s142
      %p154 = scmp.eq.s32.totalorder %s22, 1
      %p155 = por %p153, %p154
      %p157 = scmp.ne.s32.totalorder %s142, %s156
      %p158 = scmp.eq.s32.totalorder %s22, 0
      %p159 = por %p157, %p158
      %s161 = sadd.s32 %s160, 1
      %p164 = scmp.eq.s32.totalorder %s16, 1
      %p165 = scmp.ne.s32.totalorder %s160, %s162
      %p166 = scmp.eq.s32.totalorder %s16, 0
      %p167 = por %p165, %p166
      %p168 = scmp.ne.s32.totalorder %s160, %s162
      %p169 = scmp.eq.s32.totalorder %s21, 1
      %p170 = por %p168, %p169
      %p171 = scmp.ne.s32.totalorder %s162, %s163
      %p172 = scmp.eq.s32.totalorder %s21, 0
      %p173 = por %p171, %p172
      %p174 = scmp.ne.s32.totalorder %s162, %s163
      %p175 = scmp.eq.s32.totalorder %s22, 1
      %p176 = por %p174, %p175
      %p178 = scmp.ne.s32.totalorder %s163, %s177
      %p179 = scmp.eq.s32.totalorder %s22, 0
      %p180 = por %p178, %p179
      %s181 = ssub.s32 %s16, %s23
      %p182 = scmp.eq.s32.totalorder %s181, 0
      %s184 = sadd.s32 %s183, 1
      %s185 = scalar_select %p182, %s183, %s184
      %p188 = pneg %p182
      %p189 = scmp.eq.s32.totalorder %s16, 1
      %p190 = por %p188, %p189
      %p191 = scmp.ne.s32.totalorder %s183, %s186
      %p192 = scmp.eq.s32.totalorder %s16, 0
      %p193 = por %p191, %p192
      %p194 = scmp.ne.s32.totalorder %s183, %s186
      %p195 = scmp.eq.s32.totalorder %s21, 1
      %p196 = por %p194, %p195
      %p197 = scmp.ne.s32.totalorder %s186, %s187
      %p198 = scmp.eq.s32.totalorder %s21, 0
      %p199 = por %p197, %p198
      %p200 = scmp.ne.s32.totalorder %s186, %s187
      %p201 = scmp.eq.s32.totalorder %s22, 1
      %p202 = por %p200, %p201
      %p204 = scmp.ne.s32.totalorder %s187, %s203
      %p205 = scmp.eq.s32.totalorder %s22, 0
      %p206 = por %p204, %p205
      %p207 = scmp.le.s32.totalorder 1, %s16
      %p208 = scmp.lt.s32.totalorder %s16, 3
      %p209 = pnand %p207, %p208
      %p210 = pneg %p209
      // Predicated region
      $region9: #{tpu_custom_call.1} parent=5 // pred_check
        _
      $region10: #{tpu_custom_call.1} parent=5 // pred_check_branch
        %212 = sbr.rel (%p209) target = $region12
      $region11: #{tpu_custom_call.1} parent=5 // pred_region
        %s213 = ssub.s32 %s16, 1
        // Predicated region
        $region13: #{tpu_custom_call.1} parent=11 // pred_check
          %p214 = pneg %p89
        $region14: #{tpu_custom_call.1} parent=11 // pred_check_branch
          %216 = sbr.rel (%p214) target = $region16
        $region15: #{tpu_custom_call.1} parent=11 // pred_region
          _
        $region16: #{tpu_custom_call.1} parent=11 // pred_fallthru
          _
        // Predicated region
        $region17: #{tpu_custom_call.1} parent=11 // pred_check
          %p217 = pneg %p110
        $region18: #{tpu_custom_call.1} parent=11 // pred_check_branch
          %219 = sbr.rel (%p217) target = $region20
        $region19: #{tpu_custom_call.1} parent=11 // pred_region
          _
        $region20: #{tpu_custom_call.1} parent=11 // pred_fallthru
          _
        // Predicated region
        $region21: #{tpu_custom_call.1} parent=11 // pred_check
          %p220 = pneg %p131
        $region22: #{tpu_custom_call.1} parent=11 // pred_check_branch
          %222 = sbr.rel (%p220) target = $region24
        $region23: #{tpu_custom_call.1} parent=11 // pred_region
          _
        $region24: #{tpu_custom_call.1} parent=11 // pred_fallthru
          _
        // Predicated region
        $region25: #{tpu_custom_call.1} parent=11 // pred_check
          %p223 = pneg %p152
        $region26: #{tpu_custom_call.1} parent=11 // pred_check_branch
          %225 = sbr.rel (%p223) target = $region28
        $region27: #{tpu_custom_call.1} parent=11 // pred_region
          _
        $region28: #{tpu_custom_call.1} parent=11 // pred_fallthru
          _
        // Predicated region
        $region29: #{tpu_custom_call.1} parent=11 // pred_check
          %p226 = pneg %p173
        $region30: #{tpu_custom_call.1} parent=11 // pred_check_branch
          %228 = sbr.rel (%p226) target = $region32
        $region31: #{tpu_custom_call.1} parent=11 // pred_region
          _
        $region32: #{tpu_custom_call.1} parent=11 // pred_fallthru
          _
      $region12: #{tpu_custom_call.1} parent=5 // pred_fallthru
        _
      %p229 = scmp.lt.s32.totalorder %s16, 2
      // Predicated region
      $region33: #{tpu_custom_call.1} parent=5 // pred_check
        %p230 = pneg %p229
      $region34: #{tpu_custom_call.1} parent=5 // pred_check_branch
        %232 = sbr.rel (%p230) target = $region36
      $region35: #{tpu_custom_call.1} parent=5 // pred_region
        // Predicated region
        $region37: #{tpu_custom_call.1} parent=35 // pred_check
          %p233 = pneg %p36
        $region38: #{tpu_custom_call.1} parent=35 // pred_check_branch
          %235 = sbr.rel (%p233) target = $region40
        $region39: #{tpu_custom_call.1} parent=35 // pred_region
          %p236 = scmp.lt.s32.totalorder %s16, 1
          %s237 = scalar_select %p236, %s16, 1
          %s238 = smul.addr %s237, 2
          %s239 = smul.addr %s238, 4
          %s240 = scalar_lea.vmem %s0, %s239
        $region40: #{tpu_custom_call.1} parent=35 // pred_fallthru
          _
        // Predicated region
        $region41: #{tpu_custom_call.1} parent=35 // pred_check
          %p241 = pneg %p62
        $region42: #{tpu_custom_call.1} parent=35 // pred_check_branch
          %243 = sbr.rel (%p241) target = $region44
        $region43: #{tpu_custom_call.1} parent=35 // pred_region
          %p244 = scmp.lt.s32.totalorder %s16, 1
          %s245 = scalar_select %p244, %s16, 1
          %s246 = smul.addr %s245, 2
          %s247 = smul.addr %s246, 4
          %s248 = scalar_lea.vmem %s1, %s247
        $region44: #{tpu_custom_call.1} parent=35 // pred_fallthru
          _
      $region36: #{tpu_custom_call.1} parent=5 // pred_fallthru
        _
      %p249 = scmp.le.s32.totalorder 1, %s16
      %p250 = scmp.lt.s32.totalorder %s16, 3
      %p251 = pnand %p249, %p250
      %p252 = pneg %p251
      // Predicated region
      $region45: #{tpu_custom_call.1} parent=5 // pred_check
        _
      $region46: #{tpu_custom_call.1} parent=5 // pred_check_branch
        %254 = sbr.rel (%p251) target = $region48
      $region47: #{tpu_custom_call.1} parent=5 // pred_region
        %s255 = ssub.s32 %s16, 1
        %p256 = scmp.lt.s32.totalorder %s21, 1
        %s257 = scalar_select %p256, %s21, 1
        %s258 = smul.addr %s257, 2
        %s259 = smul.addr %s258, 4
        %s260 = scalar_lea.vmem %s0, %s259
        %p261 = pneg %p42
        %p262 = pneg %p39
        %p263 = scmp.lt.s32.totalorder %s21, 1
        %s264 = scalar_select %p263, %s21, 1
        %s265 = smul.addr %s264, 2
        %s266 = smul.addr %s265, 4
        %s267 = scalar_lea.vmem %s1, %s266
        %p268 = pneg %p68
        %p269 = pneg %p65
        %p270 = pneg %p89
        %p271 = pneg %p86
        %p272 = pneg %p110
        %p273 = pneg %p107
        %p274 = pneg %p131
        %p275 = pneg %p128
        %p276 = pneg %p152
        %p277 = pneg %p149
        %p278 = pneg %p173
        %p279 = pneg %p170
        %p280 = pneg %p199
        %p281 = pneg %p196
        %s282 = sand.u32 %s186, 1
        %s283 = scalar_lea.sflag [#allocation5], %s282
        %s284 = sand.u32 %s186, 1
        %s285 = smul.addr %s284, 8
        %s286 = scalar_lea.vmem [#allocation4], %s285
        %p287 = scmp.lt.s32.totalorder %s21, 1
        %s288 = scalar_select %p287, %s21, 1
        %s289 = smul.addr %s288, 2
        %s290 = smul.addr %s289, 4
        %s291 = scalar_lea.vmem %s0, %s290
        %p292 = scmp.lt.s32.totalorder %s21, 1
        %s293 = scalar_select %p292, %s21, 1
        %s294 = smul.addr %s293, 2
        %s295 = smul.addr %s294, 4
        %s296 = scalar_lea.vmem %s1, %s295
        %v298 = vld [vmem:[%s291] sm:$0xff]
        %v300 = vcombine.high %v298, %v298
        %vm302 = vcmask 1043456
        %v303 = vsel %vm302, %v298, 0.0
        %v304 = vsel %vm302, %v300, 0.0
        %v305 = vadd.f32 %v303, %v304
        %306 = vadd.xlane.f32.xlu0 %v305
        %v307 = vpop.xlane.xlu0 %306
        %v308 = vmul.f32 %v307, 0.00390625
        %v311 = vunpack.c.l.s4 839922192
        %v312 = vunpack.c.0.s8 %v311
        %v313 = vlaneseq
        %v314 = vshrl.u32 %v313, 7
        %v315 = vsub.s32 %v312, %v314
        %v316 = vrot.slane %v308, %v315
        %v318 = vsub.f32 %v298, %v316
        %v319 = vmul.f32 %v318, %v318
        %v321 = vcombine.high %v319, %v319
        %v323 = vsel %vm302, %v319, 0.0
        %v324 = vsel %vm302, %v321, 0.0
        %v325 = vadd.f32 %v323, %v324
        %326 = vadd.xlane.f32.xlu0 %v325
        %v327 = vpop.xlane.xlu0 %326
        %v328 = vmul.f32 %v327, 0.00390625
        %v329 = vadd.f32 %v328, 1e-05
        %v330 = vrsqrt.pop %v329
        %v333 = vunpack.c.l.s4 839922192
        %v334 = vunpack.c.0.s8 %v333
        %v335 = vlaneseq
        %v336 = vshrl.u32 %v335, 7
        %v337 = vsub.s32 %v334, %v336
        %v338 = vrot.slane %v330, %v337
        %v340 = vmul.f32 %v318, %v338
        %v341 = vld [vmem:[%s2] sm:$0xf]
        %v344 = vunpack.c.l.s4 1983009808
        %v345 = vunpack.c.0.s8 %v344
        %v346 = vlaneseq
        %v347 = vshrl.u32 %v346, 7
        %v348 = vsub.s32 %v345, %v347
        %v349 = vrot.slane %v341, %v348
        %v350 = vcombine.high %v349, %v349
        %v353 = vpack.c.bf16 %v349, %v349
        %v354 = vpack.c.bf16 %v350, %v350
        %355 = vst [vmem:[#allocation2] sm:$0xf] 0
        %356 = vst [vmem:[#allocation2 + $0xc] sm:$0xf] 0
        %v357 = vld [vmem:[%s296] sm:$0xff]
        %358 = vst [vmem:[#allocation2 + $0x4] sm:$0xff] %v357
        %v359 = vld [vmem:[#allocation2] sm:$0xff]
        %v360 = vld [vmem:[#allocation2 + $0x8] sm:$0xf]
        %v362 = vpack.i.b16 %v353, %v353
        %v364 = vlaneseq
        %v365 = vshrl.u32 %v364, 7
        %v366 = vsub.s32 0, %v365
        %v367 = vrot.slane %v362, %v366
        %v369 = vpack.i.b16 %v354, %v354
        %v371 = vlaneseq
        %v372 = vshrl.u32 %v371, 7
        %v373 = vsub.s32 0, %v372
        %v374 = vrot.slane %v369, %v373
        %v377 = vunpack.c.l.b16 %v367
        %v378 = vunpack.c.l.b16 %v374
        %v379 = vpack.c.b16 %v378, %v377
        %380 = vrot.lane.b32.xlu0 %v379, 111
        %v381 = vpop.permute.xlu0 %380
        %v382 = vrot.slane %v381, 4
        %vm383 = vcmask 908288
        %v384 = vsel %vm383, %v382, %v381
        %v387 = vmul.bf16 %v359, %v384
        %v388 = vmul.bf16 %v360, %v382
        %v389 = vld [vmem:[%s3] sm:$0xf]
        %v390 = vld [vmem:[%s3 + $0x4] sm:$0xf]
        %v391 = vld [vmem:[%s3 + $0x8] sm:$0xf]
        %v392 = vld [vmem:[%s3 + $0xc] sm:$0xf]
        %v393 = vld [vmem:[%s3 + $0x10] sm:$0xf]
        %v394 = vld [vmem:[%s3 + $0x14] sm:$0xf]
        %v395 = vld [vmem:[%s3 + $0x18] sm:$0xf]
        %v396 = vld [vmem:[%s3 + $0x1c] sm:$0xf]
        %v397 = vld [vmem:[%s3 + $0x20] sm:$0xf]
        %v398 = vld [vmem:[%s3 + $0x24] sm:$0xf]
        %v399 = vld [vmem:[%s3 + $0x28] sm:$0xf]
        %v400 = vld [vmem:[%s3 + $0x2c] sm:$0xf]
        %v401 = vld [vmem:[%s3 + $0x30] sm:$0xf]
        %v402 = vld [vmem:[%s3 + $0x34] sm:$0xf]
        %v403 = vld [vmem:[%s3 + $0x38] sm:$0xf]
        %v404 = vld [vmem:[%s3 + $0x3c] sm:$0xf]
        %s405 = scalar_lea.vmem %s3, 64
        %v406 = vld [vmem:[%s405] sm:$0xf]
        %v407 = vld [vmem:[%s405 + $0x4] sm:$0xf]
        %v408 = vld [vmem:[%s405 + $0x8] sm:$0xf]
        %v409 = vld [vmem:[%s405 + $0xc] sm:$0xf]
        %v410 = vld [vmem:[%s405 + $0x10] sm:$0xf]
        %v411 = vld [vmem:[%s405 + $0x14] sm:$0xf]
        %v412 = vld [vmem:[%s405 + $0x18] sm:$0xf]
        %v413 = vld [vmem:[%s405 + $0x1c] sm:$0xf]
        %v414 = vld [vmem:[%s405 + $0x20] sm:$0xf]
        %v415 = vld [vmem:[%s405 + $0x24] sm:$0xf]
        %v416 = vld [vmem:[%s405 + $0x28] sm:$0xf]
        %v417 = vld [vmem:[%s405 + $0x2c] sm:$0xf]
        %v418 = vld [vmem:[%s405 + $0x30] sm:$0xf]
        %v419 = vld [vmem:[%s405 + $0x34] sm:$0xf]
        %v420 = vld [vmem:[%s405 + $0x38] sm:$0xf]
        %v421 = vld [vmem:[%s405 + $0x3c] sm:$0xf]
        %v438 = vunpack.c.l.b16 %v406
        %v439 = vunpack.c.l.b16 %v407
        %v440 = vunpack.c.l.b16 %v408
        %v441 = vunpack.c.l.b16 %v409
        %v442 = vunpack.c.l.b16 %v410
        %v443 = vunpack.c.l.b16 %v411
        %v444 = vunpack.c.l.b16 %v412
        %v445 = vunpack.c.l.b16 %v413
        %v446 = vunpack.c.l.b16 %v414
        %v447 = vunpack.c.l.b16 %v415
        %v448 = vunpack.c.l.b16 %v416
        %v449 = vunpack.c.l.b16 %v417
        %v450 = vunpack.c.l.b16 %v418
        %v451 = vunpack.c.l.b16 %v419
        %v452 = vunpack.c.l.b16 %v420
        %v453 = vunpack.c.l.b16 %v421
        %v454 = vpack.c.b16 %v439, %v438
        %v455 = vpack.c.b16 %v441, %v440
        %v456 = vpack.c.b16 %v443, %v442
        %v457 = vpack.c.b16 %v445, %v444
        %v458 = vpack.c.b16 %v447, %v446
        %v459 = vpack.c.b16 %v449, %v448
        %v460 = vpack.c.b16 %v451, %v450
        %v461 = vpack.c.b16 %v453, %v452
        %v464 = vunpack.c.l.b16 %v359
        %v465 = vunpack.c.h.b16 %v359
        %v466 = vunpack.c.l.b16 %v360
        %v467 = vpack.c.b16 %v464, %v464
        %v468 = vpack.c.b16 %v465, %v465
        %v469 = vpack.c.b16 %v466, %v466
        %470 = vrot.lane.b32.xlu0 %v467, 16
        %v471 = vpop.permute.xlu0 %470
        %472 = vrot.lane.b32.xlu0 %v468, 16
        %v473 = vpop.permute.xlu0 %472
        %474 = vrot.lane.b32.xlu0 %v469, 16
        %v475 = vpop.permute.xlu0 %474
        %vm476 = vcmask 130048
        %v477 = vsel %vm476, %v471, %v473
        %v478 = vsel %vm476, %v473, %v475
        %vm479 = vcmask 64512
        %v481 = vsel %vm479, %v454, 0
        %v484 = vsel %vm479, %v455, 0
        %v487 = vsel %vm479, %v456, 0
        %v490 = vsel %vm479, %v457, 0
        %v493 = vsel %vm479, %v458, 0
        %v496 = vsel %vm479, %v459, 0
        %v499 = vsel %vm479, %v460, 0
        %v502 = vsel %vm479, %v461, 0
        %v505 = vsel %vm302, %v477, 0
        %v508 = vsel %vm302, %v478, 0
        %510 = vmatprep.subr.bf16.mxu0 0
        %511 = vmatpush1.bf16.msra.mxu0 0
        %512 = vmatprep.subr.bf16.mxu0 0
        %513 = vmatpush1.bf16.msra.mxu0 0
        %514 = vmatprep.subr.bf16.mxu0 0
        %515 = vmatpush1.bf16.msra.mxu0 0
        %516 = vmatprep.subr.bf16.mxu0 0
        %517 = vmatpush1.bf16.msra.mxu0 0
        %518 = vmatprep.subr.bf16.mxu0 0
        %519 = vmatpush1.bf16.msra.mxu0 0
        %520 = vmatprep.subr.bf16.mxu0 0
        %521 = vmatpush1.bf16.msra.mxu0 0
        %522 = vmatprep.subr.bf16.mxu0 0
        %523 = vmatpush1.bf16.msra.mxu0 0
        %524 = vmatprep.subr.bf16.mxu0 %v508
        %525 = vmatpush1.bf16.msra.mxu0 %v505
        %526 = vmatprep.subr.bf16.mxu0 0
        %527 = vmatpush2.bf16.msra.mxu0 0
        %528 = vmatprep.subr.bf16.mxu0 0
        %529 = vmatpush2.bf16.msra.mxu0 0
        %530 = vmatprep.subr.bf16.mxu0 0
        %531 = vmatpush2.bf16.msra.mxu0 0
        %532 = vmatprep.subr.bf16.mxu0 0
        %533 = vmatpush2.bf16.msra.mxu0 0
        %534 = vmatprep.subr.bf16.mxu0 0
        %535 = vmatpush2.bf16.msra.mxu0 0
        %536 = vmatprep.subr.bf16.mxu0 0
        %537 = vmatpush2.bf16.msra.mxu0 0
        %538 = vmatprep.subr.bf16.mxu0 0
        %539 = vmatpush2.bf16.msra.mxu0 0
        %540 = vmatprep.subr.bf16.mxu0 0
        %541 = vmatpush2.bf16.msra.mxu0 0
        %542 = vmatprep.mubr.bf16.mxu0 0
        %543 = vmatmul.mubr.bf16.gmra.mxu0 %v481
        %v544 = vpop.f32.mrf.mxu0
        %v545 = vadd.f32 0.0, %v544
        %v546 = vpop.f32.mrf.mxu0
        %v547 = vadd.f32 0.0, %v546
        %v548 = vpop.f32.mrf.mxu0
        %v549 = vadd.f32 0.0, %v548
        %v550 = vpop.f32.mrf.mxu0
        %v551 = vadd.f32 0.0, %v550
        %552 = vmatprep.mubr.bf16.mxu0 0
        %553 = vmatmul.mubr.bf16.gmra.mxu0 %v484
        %v554 = vpop.f32.mrf.mxu0
        %v555 = vadd.f32 0.0, %v554
        %v556 = vpop.f32.mrf.mxu0
        %v557 = vadd.f32 0.0, %v556
        %v558 = vpop.f32.mrf.mxu0
        %v559 = vadd.f32 0.0, %v558
        %v560 = vpop.f32.mrf.mxu0
        %v561 = vadd.f32 0.0, %v560
        %562 = vmatprep.mubr.bf16.mxu0 0
        %563 = vmatmul.mubr.bf16.gmra.mxu0 %v487
        %v564 = vpop.f32.mrf.mxu0
        %v565 = vadd.f32 0.0, %v564
        %v566 = vpop.f32.mrf.mxu0
        %v567 = vadd.f32 0.0, %v566
        %v568 = vpop.f32.mrf.mxu0
        %v569 = vadd.f32 0.0, %v568
        %v570 = vpop.f32.mrf.mxu0
        %v571 = vadd.f32 0.0, %v570
        %572 = vmatprep.mubr.bf16.mxu0 0
        %573 = vmatmul.mubr.bf16.gmra.mxu0 %v490
        %v574 = vpop.f32.mrf.mxu0
        %v575 = vadd.f32 0.0, %v574
        %v576 = vpop.f32.mrf.mxu0
        %v577 = vadd.f32 0.0, %v576
        %v578 = vpop.f32.mrf.mxu0
        %v579 = vadd.f32 0.0, %v578
        %v580 = vpop.f32.mrf.mxu0
        %v581 = vadd.f32 0.0, %v580
        %582 = vmatprep.mubr.bf16.mxu0 0
        %583 = vmatmul.mubr.bf16.gmra.mxu0 %v493
        %v584 = vpop.f32.mrf.mxu0
        %v585 = vadd.f32 0.0, %v584
        %v586 = vpop.f32.mrf.mxu0
        %v587 = vadd.f32 0.0, %v586
        %v588 = vpop.f32.mrf.mxu0
        %v589 = vadd.f32 0.0, %v588
        %v590 = vpop.f32.mrf.mxu0
        %v591 = vadd.f32 0.0, %v590
        %592 = vmatprep.mubr.bf16.mxu0 0
        %593 = vmatmul.mubr.bf16.gmra.mxu0 %v496
        %v594 = vpop.f32.mrf.mxu0
        %v595 = vadd.f32 0.0, %v594
        %v596 = vpop.f32.mrf.mxu0
        %v597 = vadd.f32 0.0, %v596
        %v598 = vpop.f32.mrf.mxu0
        %v599 = vadd.f32 0.0, %v598
        %v600 = vpop.f32.mrf.mxu0
        %v601 = vadd.f32 0.0, %v600
        %602 = vmatprep.mubr.bf16.mxu0 0
        %603 = vmatmul.mubr.bf16.gmra.mxu0 %v499
        %v604 = vpop.f32.mrf.mxu0
        %v605 = vadd.f32 0.0, %v604
        %v606 = vpop.f32.mrf.mxu0
        %v607 = vadd.f32 0.0, %v606
        %v608 = vpop.f32.mrf.mxu0
        %v609 = vadd.f32 0.0, %v608
        %v610 = vpop.f32.mrf.mxu0
        %v611 = vadd.f32 0.0, %v610
        %612 = vmatprep.mubr.bf16.mxu0 0
        %613 = vmatmul.mubr.bf16.gmra.mxu0 %v502
        %v614 = vpop.f32.mrf.mxu0
        %v615 = vadd.f32 0.0, %v614
        %v616 = vpop.f32.mrf.mxu0
        %v617 = vadd.f32 0.0, %v616
        %v618 = vpop.f32.mrf.mxu0
        %v619 = vadd.f32 0.0, %v618
        %v620 = vpop.f32.mrf.mxu0
        %v621 = vadd.f32 0.0, %v620
        %622 = vdwg.mxu0
        %v639 = vunpack.c.l.b16 %v389
        %v640 = vunpack.c.l.b16 %v390
        %v641 = vunpack.c.l.b16 %v391
        %v642 = vunpack.c.l.b16 %v392
        %v643 = vunpack.c.l.b16 %v393
        %v644 = vunpack.c.l.b16 %v394
        %v645 = vunpack.c.l.b16 %v395
        %v646 = vunpack.c.l.b16 %v396
        %v647 = vunpack.c.l.b16 %v397
        %v648 = vunpack.c.l.b16 %v398
        %v649 = vunpack.c.l.b16 %v399
        %v650 = vunpack.c.l.b16 %v400
        %v651 = vunpack.c.l.b16 %v401
        %v652 = vunpack.c.l.b16 %v402
        %v653 = vunpack.c.l.b16 %v403
        %v654 = vunpack.c.l.b16 %v404
        %v655 = vpack.c.b16 %v640, %v639
        %v656 = vpack.c.b16 %v642, %v641
        %v657 = vpack.c.b16 %v644, %v643
        %v658 = vpack.c.b16 %v646, %v645
        %v659 = vpack.c.b16 %v648, %v647
        %v660 = vpack.c.b16 %v650, %v649
        %v661 = vpack.c.b16 %v652, %v651
        %v662 = vpack.c.b16 %v654, %v653
        %v665 = vunpack.c.l.b16 %v387
        %v666 = vunpack.c.h.b16 %v387
        %v667 = vunpack.c.l.b16 %v388
        %v668 = vpack.c.b16 %v665, %v665
        %v669 = vpack.c.b16 %v666, %v666
        %v670 = vpack.c.b16 %v667, %v667
        %671 = vrot.lane.b32.xlu0 %v668, 17
        %v672 = vpop.permute.xlu0 %671
        %673 = vrot.lane.b32.xlu0 %v669, 17
        %v674 = vpop.permute.xlu0 %673
        %675 = vrot.lane.b32.xlu0 %v670, 17
        %v676 = vpop.permute.xlu0 %675
        %vm677 = vcmask 138240
        %v678 = vsel %vm677, %v672, %v674
        %v679 = vsel %vm677, %v674, %v676
        %v681 = vsel %vm479, %v655, 0
        %v684 = vsel %vm479, %v656, 0
        %v687 = vsel %vm479, %v657, 0
        %v690 = vsel %vm479, %v658, 0
        %v693 = vsel %vm479, %v659, 0
        %v696 = vsel %vm479, %v660, 0
        %v699 = vsel %vm479, %v661, 0
        %v702 = vsel %vm479, %v662, 0
        %v705 = vsel %vm302, %v678, 0
        %v708 = vsel %vm302, %v679, 0
        %710 = vmatprep.subr.bf16.mxu0 0
        %711 = vmatpush1.bf16.msra.mxu0 0
        %712 = vmatprep.subr.bf16.mxu0 0
        %713 = vmatpush1.bf16.msra.mxu0 0
        %714 = vmatprep.subr.bf16.mxu0 0
        %715 = vmatpush1.bf16.msra.mxu0 0
        %716 = vmatprep.subr.bf16.mxu0 0
        %717 = vmatpush1.bf16.msra.mxu0 0
        %718 = vmatprep.subr.bf16.mxu0 0
        %719 = vmatpush1.bf16.msra.mxu0 0
        %720 = vmatprep.subr.bf16.mxu0 0
        %721 = vmatpush1.bf16.msra.mxu0 0
        %722 = vmatprep.subr.bf16.mxu0 0
        %723 = vmatpush1.bf16.msra.mxu0 0
        %724 = vmatprep.subr.bf16.mxu0 %v708
        %725 = vmatpush1.bf16.msra.mxu0 %v705
        %726 = vmatprep.subr.bf16.mxu0 0
        %727 = vmatpush2.bf16.msra.mxu0 0
        %728 = vmatprep.subr.bf16.mxu0 0
        %729 = vmatpush2.bf16.msra.mxu0 0
        %730 = vmatprep.subr.bf16.mxu0 0
        %731 = vmatpush2.bf16.msra.mxu0 0
        %732 = vmatprep.subr.bf16.mxu0 0
        %733 = vmatpush2.bf16.msra.mxu0 0
        %734 = vmatprep.subr.bf16.mxu0 0
        %735 = vmatpush2.bf16.msra.mxu0 0
        %736 = vmatprep.subr.bf16.mxu0 0
        %737 = vmatpush2.bf16.msra.mxu0 0
        %738 = vmatprep.subr.bf16.mxu0 0
        %739 = vmatpush2.bf16.msra.mxu0 0
        %740 = vmatprep.subr.bf16.mxu0 0
        %741 = vmatpush2.bf16.msra.mxu0 0
        %742 = vmatprep.mubr.bf16.mxu0 0
        %743 = vmatmul.mubr.bf16.gmra.mxu0 %v681
        %v744 = vpop.f32.mrf.mxu0
        %v745 = vadd.f32 %v545, %v744
        %v746 = vpop.f32.mrf.mxu0
        %v747 = vadd.f32 %v547, %v746
        %v748 = vpop.f32.mrf.mxu0
        %v749 = vadd.f32 %v549, %v748
        %v750 = vpop.f32.mrf.mxu0
        %v751 = vadd.f32 %v551, %v750
        %752 = vmatprep.mubr.bf16.mxu0 0
        %753 = vmatmul.mubr.bf16.gmra.mxu0 %v684
        %v754 = vpop.f32.mrf.mxu0
        %v755 = vadd.f32 %v555, %v754
        %v756 = vpop.f32.mrf.mxu0
        %v757 = vadd.f32 %v557, %v756
        %v758 = vpop.f32.mrf.mxu0
        %v759 = vadd.f32 %v559, %v758
        %v760 = vpop.f32.mrf.mxu0
        %v761 = vadd.f32 %v561, %v760
        %762 = vmatprep.mubr.bf16.mxu0 0
        %763 = vmatmul.mubr.bf16.gmra.mxu0 %v687
        %v764 = vpop.f32.mrf.mxu0
        %v765 = vadd.f32 %v565, %v764
        %v766 = vpop.f32.mrf.mxu0
        %v767 = vadd.f32 %v567, %v766
        %v768 = vpop.f32.mrf.mxu0
        %v769 = vadd.f32 %v569, %v768
        %v770 = vpop.f32.mrf.mxu0
        %v771 = vadd.f32 %v571, %v770
        %772 = vmatprep.mubr.bf16.mxu0 0
        %773 = vmatmul.mubr.bf16.gmra.mxu0 %v690
        %v774 = vpop.f32.mrf.mxu0
        %v775 = vadd.f32 %v575, %v774
        %v776 = vpop.f32.mrf.mxu0
        %v777 = vadd.f32 %v577, %v776
        %v778 = vpop.f32.mrf.mxu0
        %v779 = vadd.f32 %v579, %v778
        %v780 = vpop.f32.mrf.mxu0
        %v781 = vadd.f32 %v581, %v780
        %782 = vmatprep.mubr.bf16.mxu0 0
        %783 = vmatmul.mubr.bf16.gmra.mxu0 %v693
        %v784 = vpop.f32.mrf.mxu0
        %v785 = vadd.f32 %v585, %v784
        %v786 = vpop.f32.mrf.mxu0
        %v787 = vadd.f32 %v587, %v786
        %v788 = vpop.f32.mrf.mxu0
        %v789 = vadd.f32 %v589, %v788
        %v790 = vpop.f32.mrf.mxu0
        %v791 = vadd.f32 %v591, %v790
        %792 = vmatprep.mubr.bf16.mxu0 0
        %793 = vmatmul.mubr.bf16.gmra.mxu0 %v696
        %v794 = vpop.f32.mrf.mxu0
        %v795 = vadd.f32 %v595, %v794
        %v796 = vpop.f32.mrf.mxu0
        %v797 = vadd.f32 %v597, %v796
        %v798 = vpop.f32.mrf.mxu0
        %v799 = vadd.f32 %v599, %v798
        %v800 = vpop.f32.mrf.mxu0
        %v801 = vadd.f32 %v601, %v800
        %802 = vmatprep.mubr.bf16.mxu0 0
        %803 = vmatmul.mubr.bf16.gmra.mxu0 %v699
        %v804 = vpop.f32.mrf.mxu0
        %v805 = vadd.f32 %v605, %v804
        %v806 = vpop.f32.mrf.mxu0
        %v807 = vadd.f32 %v607, %v806
        %v808 = vpop.f32.mrf.mxu0
        %v809 = vadd.f32 %v609, %v808
        %v810 = vpop.f32.mrf.mxu0
        %v811 = vadd.f32 %v611, %v810
        %812 = vmatprep.mubr.bf16.mxu0 0
        %813 = vmatmul.mubr.bf16.gmra.mxu0 %v702
        %v814 = vpop.f32.mrf.mxu0
        %v815 = vadd.f32 %v615, %v814
        %v816 = vpop.f32.mrf.mxu0
        %v817 = vadd.f32 %v617, %v816
        %v818 = vpop.f32.mrf.mxu0
        %v819 = vadd.f32 %v619, %v818
        %v820 = vpop.f32.mrf.mxu0
        %v821 = vadd.f32 %v621, %v820
        %822 = vdwg.mxu0
        %v823 = vshrl.u32 %v353, 16
        %v824 = vpack.i.b16 %v823, %v823
        %v826 = vlaneseq
        %v827 = vshrl.u32 %v826, 7
        %v828 = vsub.s32 0, %v827
        %v829 = vrot.slane %v824, %v828
        %v830 = vshrl.u32 %v354, 16
        %v831 = vpack.i.b16 %v830, %v830
        %v833 = vlaneseq
        %v834 = vshrl.u32 %v833, 7
        %v835 = vsub.s32 0, %v834
        %v836 = vrot.slane %v831, %v835
        %v839 = vunpack.c.l.b16 %v829
        %v840 = vunpack.c.l.b16 %v836
        %v841 = vpack.c.b16 %v840, %v839
        %842 = vrot.lane.b32.xlu0 %v841, 113
        %v843 = vpop.permute.xlu0 %842
        %v844 = vrot.slane %v843, 4
        %vm845 = vcmask 924672
        %v846 = vsel %vm845, %v844, %v843
        %v849 = vmul.bf16 %v359, %v846
        %v850 = vmul.bf16 %v360, %v844
        %s851 = scalar_lea.vmem %s3, 128
        %v852 = vld [vmem:[%s851] sm:$0xf]
        %v853 = vld [vmem:[%s851 + $0x4] sm:$0xf]
        %v854 = vld [vmem:[%s851 + $0x8] sm:$0xf]
        %v855 = vld [vmem:[%s851 + $0xc] sm:$0xf]
        %v856 = vld [vmem:[%s851 + $0x10] sm:$0xf]
        %v857 = vld [vmem:[%s851 + $0x14] sm:$0xf]
        %v858 = vld [vmem:[%s851 + $0x18] sm:$0xf]
        %v859 = vld [vmem:[%s851 + $0x1c] sm:$0xf]
        %v860 = vld [vmem:[%s851 + $0x20] sm:$0xf]
        %v861 = vld [vmem:[%s851 + $0x24] sm:$0xf]
        %v862 = vld [vmem:[%s851 + $0x28] sm:$0xf]
        %v863 = vld [vmem:[%s851 + $0x2c] sm:$0xf]
        %v864 = vld [vmem:[%s851 + $0x30] sm:$0xf]
        %v865 = vld [vmem:[%s851 + $0x34] sm:$0xf]
        %v866 = vld [vmem:[%s851 + $0x38] sm:$0xf]
        %v867 = vld [vmem:[%s851 + $0x3c] sm:$0xf]
        %v884 = vunpack.c.l.b16 %v852
        %v885 = vunpack.c.l.b16 %v853
        %v886 = vunpack.c.l.b16 %v854
        %v887 = vunpack.c.l.b16 %v855
        %v888 = vunpack.c.l.b16 %v856
        %v889 = vunpack.c.l.b16 %v857
        %v890 = vunpack.c.l.b16 %v858
        %v891 = vunpack.c.l.b16 %v859
        %v892 = vunpack.c.l.b16 %v860
        %v893 = vunpack.c.l.b16 %v861
        %v894 = vunpack.c.l.b16 %v862
        %v895 = vunpack.c.l.b16 %v863
        %v896 = vunpack.c.l.b16 %v864
        %v897 = vunpack.c.l.b16 %v865
        %v898 = vunpack.c.l.b16 %v866
        %v899 = vunpack.c.l.b16 %v867
        %v900 = vpack.c.b16 %v885, %v884
        %v901 = vpack.c.b16 %v887, %v886
        %v902 = vpack.c.b16 %v889, %v888
        %v903 = vpack.c.b16 %v891, %v890
        %v904 = vpack.c.b16 %v893, %v892
        %v905 = vpack.c.b16 %v895, %v894
        %v906 = vpack.c.b16 %v897, %v896
        %v907 = vpack.c.b16 %v899, %v898
        %v910 = vunpack.c.l.b16 %v849
        %v911 = vunpack.c.h.b16 %v849
        %v912 = vunpack.c.l.b16 %v850
        %v913 = vpack.c.b16 %v910, %v910
        %v914 = vpack.c.b16 %v911, %v911
        %v915 = vpack.c.b16 %v912, %v912
        %916 = vrot.lane.b32.xlu0 %v913, 15
        %v917 = vpop.permute.xlu0 %916
        %918 = vrot.lane.b32.xlu0 %v914, 15
        %v919 = vpop.permute.xlu0 %918
        %920 = vrot.lane.b32.xlu0 %v915, 15
        %v921 = vpop.permute.xlu0 %920
        %vm922 = vcmask 121856
        %v923 = vsel %vm922, %v917, %v919
        %v924 = vsel %vm922, %v919, %v921
        %v926 = vsel %vm479, %v900, 0
        %v929 = vsel %vm479, %v901, 0
        %v932 = vsel %vm479, %v902, 0
        %v935 = vsel %vm479, %v903, 0
        %v938 = vsel %vm479, %v904, 0
        %v941 = vsel %vm479, %v905, 0
        %v944 = vsel %vm479, %v906, 0
        %v947 = vsel %vm479, %v907, 0
        %v950 = vsel %vm302, %v923, 0
        %v953 = vsel %vm302, %v924, 0
        %955 = vmatprep.subr.bf16.mxu0 0
        %956 = vmatpush1.bf16.msra.mxu0 0
        %957 = vmatprep.subr.bf16.mxu0 0
        %958 = vmatpush1.bf16.msra.mxu0 0
        %959 = vmatprep.subr.bf16.mxu0 0
        %960 = vmatpush1.bf16.msra.mxu0 0
        %961 = vmatprep.subr.bf16.mxu0 0
        %962 = vmatpush1.bf16.msra.mxu0 0
        %963 = vmatprep.subr.bf16.mxu0 0
        %964 = vmatpush1.bf16.msra.mxu0 0
        %965 = vmatprep.subr.bf16.mxu0 0
        %966 = vmatpush1.bf16.msra.mxu0 0
        %967 = vmatprep.subr.bf16.mxu0 0
        %968 = vmatpush1.bf16.msra.mxu0 0
        %969 = vmatprep.subr.bf16.mxu0 %v953
        %970 = vmatpush1.bf16.msra.mxu0 %v950
        %971 = vmatprep.subr.bf16.mxu0 0
        %972 = vmatpush2.bf16.msra.mxu0 0
        %973 = vmatprep.subr.bf16.mxu0 0
        %974 = vmatpush2.bf16.msra.mxu0 0
        %975 = vmatprep.subr.bf16.mxu0 0
        %976 = vmatpush2.bf16.msra.mxu0 0
        %977 = vmatprep.subr.bf16.mxu0 0
        %978 = vmatpush2.bf16.msra.mxu0 0
        %979 = vmatprep.subr.bf16.mxu0 0
        %980 = vmatpush2.bf16.msra.mxu0 0
        %981 = vmatprep.subr.bf16.mxu0 0
        %982 = vmatpush2.bf16.msra.mxu0 0
        %983 = vmatprep.subr.bf16.mxu0 0
        %984 = vmatpush2.bf16.msra.mxu0 0
        %985 = vmatprep.subr.bf16.mxu0 0
        %986 = vmatpush2.bf16.msra.mxu0 0
        %987 = vmatprep.mubr.bf16.mxu0 0
        %988 = vmatmul.mubr.bf16.gmra.mxu0 %v926
        %v989 = vpop.f32.mrf.mxu0
        %v990 = vadd.f32 0.0, %v989
        %v991 = vpop.f32.mrf.mxu0
        %v992 = vadd.f32 0.0, %v991
        %v993 = vpop.f32.mrf.mxu0
        %v994 = vadd.f32 0.0, %v993
        %v995 = vpop.f32.mrf.mxu0
        %v996 = vadd.f32 0.0, %v995
        %997 = vmatprep.mubr.bf16.mxu0 0
        %998 = vmatmul.mubr.bf16.gmra.mxu0 %v929
        %v999 = vpop.f32.mrf.mxu0
        %v1000 = vadd.f32 0.0, %v999
        %v1001 = vpop.f32.mrf.mxu0
        %v1002 = vadd.f32 0.0, %v1001
        %v1003 = vpop.f32.mrf.mxu0
        %v1004 = vadd.f32 0.0, %v1003
        %v1005 = vpop.f32.mrf.mxu0
        %v1006 = vadd.f32 0.0, %v1005
        %1007 = vmatprep.mubr.bf16.mxu0 0
        %1008 = vmatmul.mubr.bf16.gmra.mxu0 %v932
        %v1009 = vpop.f32.mrf.mxu0
        %v1010 = vadd.f32 0.0, %v1009
        %v1011 = vpop.f32.mrf.mxu0
        %v1012 = vadd.f32 0.0, %v1011
        %v1013 = vpop.f32.mrf.mxu0
        %v1014 = vadd.f32 0.0, %v1013
        %v1015 = vpop.f32.mrf.mxu0
        %v1016 = vadd.f32 0.0, %v1015
        %1017 = vmatprep.mubr.bf16.mxu0 0
        %1018 = vmatmul.mubr.bf16.gmra.mxu0 %v935
        %v1019 = vpop.f32.mrf.mxu0
        %v1020 = vadd.f32 0.0, %v1019
        %v1021 = vpop.f32.mrf.mxu0
        %v1022 = vadd.f32 0.0, %v1021
        %v1023 = vpop.f32.mrf.mxu0
        %v1024 = vadd.f32 0.0, %v1023
        %v1025 = vpop.f32.mrf.mxu0
        %v1026 = vadd.f32 0.0, %v1025
        %1027 = vmatprep.mubr.bf16.mxu0 0
        %1028 = vmatmul.mubr.bf16.gmra.mxu0 %v938
        %v1029 = vpop.f32.mrf.mxu0
        %v1030 = vadd.f32 0.0, %v1029
        %v1031 = vpop.f32.mrf.mxu0
        %v1032 = vadd.f32 0.0, %v1031
        %v1033 = vpop.f32.mrf.mxu0
        %v1034 = vadd.f32 0.0, %v1033
        %v1035 = vpop.f32.mrf.mxu0
        %v1036 = vadd.f32 0.0, %v1035
        %1037 = vmatprep.mubr.bf16.mxu0 0
        %1038 = vmatmul.mubr.bf16.gmra.mxu0 %v941
        %v1039 = vpop.f32.mrf.mxu0
        %v1040 = vadd.f32 0.0, %v1039
        %v1041 = vpop.f32.mrf.mxu0
        %v1042 = vadd.f32 0.0, %v1041
        %v1043 = vpop.f32.mrf.mxu0
        %v1044 = vadd.f32 0.0, %v1043
        %v1045 = vpop.f32.mrf.mxu0
        %v1046 = vadd.f32 0.0, %v1045
        %1047 = vmatprep.mubr.bf16.mxu0 0
        %1048 = vmatmul.mubr.bf16.gmra.mxu0 %v944
        %v1049 = vpop.f32.mrf.mxu0
        %v1050 = vadd.f32 0.0, %v1049
        %v1051 = vpop.f32.mrf.mxu0
        %v1052 = vadd.f32 0.0, %v1051
        %v1053 = vpop.f32.mrf.mxu0
        %v1054 = vadd.f32 0.0, %v1053
        %v1055 = vpop.f32.mrf.mxu0
        %v1056 = vadd.f32 0.0, %v1055
        %1057 = vmatprep.mubr.bf16.mxu0 0
        %1058 = vmatmul.mubr.bf16.gmra.mxu0 %v947
        %v1059 = vpop.f32.mrf.mxu0
        %v1060 = vadd.f32 0.0, %v1059
        %v1061 = vpop.f32.mrf.mxu0
        %v1062 = vadd.f32 0.0, %v1061
        %v1063 = vpop.f32.mrf.mxu0
        %v1064 = vadd.f32 0.0, %v1063
        %v1065 = vpop.f32.mrf.mxu0
        %v1066 = vadd.f32 0.0, %v1065
        %1067 = vdwg.mxu0
        %v1068 = vadd.f32 %v745, %v990
        %v1069 = vadd.f32 %v747, %v992
        %v1070 = vadd.f32 %v749, %v994
        %v1071 = vadd.f32 %v751, %v996
        %v1072 = vadd.f32 %v755, %v1000
        %v1073 = vadd.f32 %v757, %v1002
        %v1074 = vadd.f32 %v759, %v1004
        %v1075 = vadd.f32 %v761, %v1006
        %v1076 = vadd.f32 %v765, %v1010
        %v1077 = vadd.f32 %v767, %v1012
        %v1078 = vadd.f32 %v769, %v1014
        %v1079 = vadd.f32 %v771, %v1016
        %v1080 = vadd.f32 %v775, %v1020
        %v1081 = vadd.f32 %v777, %v1022
        %v1082 = vadd.f32 %v779, %v1024
        %v1083 = vadd.f32 %v781, %v1026
        %v1084 = vadd.f32 %v785, %v1030
        %v1085 = vadd.f32 %v787, %v1032
        %v1086 = vadd.f32 %v789, %v1034
        %v1087 = vadd.f32 %v791, %v1036
        %v1088 = vadd.f32 %v795, %v1040
        %v1089 = vadd.f32 %v797, %v1042
        %v1090 = vadd.f32 %v799, %v1044
        %v1091 = vadd.f32 %v801, %v1046
        %v1092 = vadd.f32 %v805, %v1050
        %v1093 = vadd.f32 %v807, %v1052
        %v1094 = vadd.f32 %v809, %v1054
        %v1095 = vadd.f32 %v811, %v1056
        %v1096 = vadd.f32 %v815, %v1060
        %v1097 = vadd.f32 %v817, %v1062
        %v1098 = vadd.f32 %v819, %v1064
        %v1099 = vadd.f32 %v821, %v1066
        %1100 = vrot.lane.b32.xlu0 %v379, 127
        %v1101 = vpop.permute.xlu0 %1100
        %v1102 = vrot.slane %v1101, 4
        %vm1103 = vcmask 1039360
        %v1104 = vsel %vm1103, %v1102, %v1101
        %v1107 = vmul.bf16 %v359, %v1104
        %v1108 = vmul.bf16 %v360, %v1102
        %s1109 = scalar_lea.vmem %s3, 192
        %v1110 = vld [vmem:[%s1109] sm:$0xf]
        %v1111 = vld [vmem:[%s1109 + $0x4] sm:$0xf]
        %v1112 = vld [vmem:[%s1109 + $0x8] sm:$0xf]
        %v1113 = vld [vmem:[%s1109 + $0xc] sm:$0xf]
        %v1114 = vld [vmem:[%s1109 + $0x10] sm:$0xf]
        %v1115 = vld [vmem:[%s1109 + $0x14] sm:$0xf]
        %v1116 = vld [vmem:[%s1109 + $0x18] sm:$0xf]
        %v1117 = vld [vmem:[%s1109 + $0x1c] sm:$0xf]
        %v1118 = vld [vmem:[%s1109 + $0x20] sm:$0xf]
        %v1119 = vld [vmem:[%s1109 + $0x24] sm:$0xf]
        %v1120 = vld [vmem:[%s1109 + $0x28] sm:$0xf]
        %v1121 = vld [vmem:[%s1109 + $0x2c] sm:$0xf]
        %v1122 = vld [vmem:[%s1109 + $0x30] sm:$0xf]
        %v1123 = vld [vmem:[%s1109 + $0x34] sm:$0xf]
        %v1124 = vld [vmem:[%s1109 + $0x38] sm:$0xf]
        %v1125 = vld [vmem:[%s1109 + $0x3c] sm:$0xf]
        %v1142 = vunpack.c.l.b16 %v1110
        %v1143 = vunpack.c.l.b16 %v1111
        %v1144 = vunpack.c.l.b16 %v1112
        %v1145 = vunpack.c.l.b16 %v1113
        %v1146 = vunpack.c.l.b16 %v1114
        %v1147 = vunpack.c.l.b16 %v1115
        %v1148 = vunpack.c.l.b16 %v1116
        %v1149 = vunpack.c.l.b16 %v1117
        %v1150 = vunpack.c.l.b16 %v1118
        %v1151 = vunpack.c.l.b16 %v1119
        %v1152 = vunpack.c.l.b16 %v1120
        %v1153 = vunpack.c.l.b16 %v1121
        %v1154 = vunpack.c.l.b16 %v1122
        %v1155 = vunpack.c.l.b16 %v1123
        %v1156 = vunpack.c.l.b16 %v1124
        %v1157 = vunpack.c.l.b16 %v1125
        %v1158 = vpack.c.b16 %v1143, %v1142
        %v1159 = vpack.c.b16 %v1145, %v1144
        %v1160 = vpack.c.b16 %v1147, %v1146
        %v1161 = vpack.c.b16 %v1149, %v1148
        %v1162 = vpack.c.b16 %v1151, %v1150
        %v1163 = vpack.c.b16 %v1153, %v1152
        %v1164 = vpack.c.b16 %v1155, %v1154
        %v1165 = vpack.c.b16 %v1157, %v1156
        %v1168 = vunpack.c.l.b16 %v1107
        %v1169 = vunpack.c.h.b16 %v1107
        %v1170 = vunpack.c.l.b16 %v1108
        %v1171 = vpack.c.b16 %v1168, %v1168
        %v1172 = vpack.c.b16 %v1169, %v1169
        %v1173 = vpack.c.b16 %v1170, %v1170
        %1174 = vrot.lane.b32.xlu0 %v1171, 1
        %v1175 = vpop.permute.xlu0 %1174
        %1176 = vrot.lane.b32.xlu0 %v1172, 1
        %v1177 = vpop.permute.xlu0 %1176
        %1178 = vrot.lane.b32.xlu0 %v1173, 1
        %v1179 = vpop.permute.xlu0 %1178
        %vm1180 = vcmask 7168
        %v1181 = vsel %vm1180, %v1175, %v1177
        %v1182 = vsel %vm1180, %v1177, %v1179
        %v1184 = vsel %vm479, %v1158, 0
        %v1187 = vsel %vm479, %v1159, 0
        %v1190 = vsel %vm479, %v1160, 0
        %v1193 = vsel %vm479, %v1161, 0
        %v1196 = vsel %vm479, %v1162, 0
        %v1199 = vsel %vm479, %v1163, 0
        %v1202 = vsel %vm479, %v1164, 0
        %v1205 = vsel %vm479, %v1165, 0
        %v1208 = vsel %vm302, %v1181, 0
        %v1211 = vsel %vm302, %v1182, 0
        %1213 = vmatprep.subr.bf16.mxu0 0
        %1214 = vmatpush1.bf16.msra.mxu0 0
        %1215 = vmatprep.subr.bf16.mxu0 0
        %1216 = vmatpush1.bf16.msra.mxu0 0
        %1217 = vmatprep.subr.bf16.mxu0 0
        %1218 = vmatpush1.bf16.msra.mxu0 0
        %1219 = vmatprep.subr.bf16.mxu0 0
        %1220 = vmatpush1.bf16.msra.mxu0 0
        %1221 = vmatprep.subr.bf16.mxu0 0
        %1222 = vmatpush1.bf16.msra.mxu0 0
        %1223 = vmatprep.subr.bf16.mxu0 0
        %1224 = vmatpush1.bf16.msra.mxu0 0
        %1225 = vmatprep.subr.bf16.mxu0 0
        %1226 = vmatpush1.bf16.msra.mxu0 0
        %1227 = vmatprep.subr.bf16.mxu0 %v1211
        %1228 = vmatpush1.bf16.msra.mxu0 %v1208
        %1229 = vmatprep.subr.bf16.mxu0 0
        %1230 = vmatpush2.bf16.msra.mxu0 0
        %1231 = vmatprep.subr.bf16.mxu0 0
        %1232 = vmatpush2.bf16.msra.mxu0 0
        %1233 = vmatprep.subr.bf16.mxu0 0
        %1234 = vmatpush2.bf16.msra.mxu0 0
        %1235 = vmatprep.subr.bf16.mxu0 0
        %1236 = vmatpush2.bf16.msra.mxu0 0
        %1237 = vmatprep.subr.bf16.mxu0 0
        %1238 = vmatpush2.bf16.msra.mxu0 0
        %1239 = vmatprep.subr.bf16.mxu0 0
        %1240 = vmatpush2.bf16.msra.mxu0 0
        %1241 = vmatprep.subr.bf16.mxu0 0
        %1242 = vmatpush2.bf16.msra.mxu0 0
        %1243 = vmatprep.subr.bf16.mxu0 0
        %1244 = vmatpush2.bf16.msra.mxu0 0
        %1245 = vmatprep.mubr.bf16.mxu0 0
        %1246 = vmatmul.mubr.bf16.gmra.mxu0 %v1184
        %v1247 = vpop.f32.mrf.mxu0
        %v1248 = vadd.f32 0.0, %v1247
        %v1249 = vpop.f32.mrf.mxu0
        %v1250 = vadd.f32 0.0, %v1249
        %v1251 = vpop.f32.mrf.mxu0
        %v1252 = vadd.f32 0.0, %v1251
        %v1253 = vpop.f32.mrf.mxu0
        %v1254 = vadd.f32 0.0, %v1253
        %1255 = vmatprep.mubr.bf16.mxu0 0
        %1256 = vmatmul.mubr.bf16.gmra.mxu0 %v1187
        %v1257 = vpop.f32.mrf.mxu0
        %v1258 = vadd.f32 0.0, %v1257
        %v1259 = vpop.f32.mrf.mxu0
        %v1260 = vadd.f32 0.0, %v1259
        %v1261 = vpop.f32.mrf.mxu0
        %v1262 = vadd.f32 0.0, %v1261
        %v1263 = vpop.f32.mrf.mxu0
        %v1264 = vadd.f32 0.0, %v1263
        %1265 = vmatprep.mubr.bf16.mxu0 0
        %1266 = vmatmul.mubr.bf16.gmra.mxu0 %v1190
        %v1267 = vpop.f32.mrf.mxu0
        %v1268 = vadd.f32 0.0, %v1267
        %v1269 = vpop.f32.mrf.mxu0
        %v1270 = vadd.f32 0.0, %v1269
        %v1271 = vpop.f32.mrf.mxu0
        %v1272 = vadd.f32 0.0, %v1271
        %v1273 = vpop.f32.mrf.mxu0
        %v1274 = vadd.f32 0.0, %v1273
        %1275 = vmatprep.mubr.bf16.mxu0 0
        %1276 = vmatmul.mubr.bf16.gmra.mxu0 %v1193
        %v1277 = vpop.f32.mrf.mxu0
        %v1278 = vadd.f32 0.0, %v1277
        %v1279 = vpop.f32.mrf.mxu0
        %v1280 = vadd.f32 0.0, %v1279
        %v1281 = vpop.f32.mrf.mxu0
        %v1282 = vadd.f32 0.0, %v1281
        %v1283 = vpop.f32.mrf.mxu0
        %v1284 = vadd.f32 0.0, %v1283
        %1285 = vmatprep.mubr.bf16.mxu0 0
        %1286 = vmatmul.mubr.bf16.gmra.mxu0 %v1196
        %v1287 = vpop.f32.mrf.mxu0
        %v1288 = vadd.f32 0.0, %v1287
        %v1289 = vpop.f32.mrf.mxu0
        %v1290 = vadd.f32 0.0, %v1289
        %v1291 = vpop.f32.mrf.mxu0
        %v1292 = vadd.f32 0.0, %v1291
        %v1293 = vpop.f32.mrf.mxu0
        %v1294 = vadd.f32 0.0, %v1293
        %1295 = vmatprep.mubr.bf16.mxu0 0
        %1296 = vmatmul.mubr.bf16.gmra.mxu0 %v1199
        %v1297 = vpop.f32.mrf.mxu0
        %v1298 = vadd.f32 0.0, %v1297
        %v1299 = vpop.f32.mrf.mxu0
        %v1300 = vadd.f32 0.0, %v1299
        %v1301 = vpop.f32.mrf.mxu0
        %v1302 = vadd.f32 0.0, %v1301
        %v1303 = vpop.f32.mrf.mxu0
        %v1304 = vadd.f32 0.0, %v1303
        %1305 = vmatprep.mubr.bf16.mxu0 0
        %1306 = vmatmul.mubr.bf16.gmra.mxu0 %v1202
        %v1307 = vpop.f32.mrf.mxu0
        %v1308 = vadd.f32 0.0, %v1307
        %v1309 = vpop.f32.mrf.mxu0
        %v1310 = vadd.f32 0.0, %v1309
        %v1311 = vpop.f32.mrf.mxu0
        %v1312 = vadd.f32 0.0, %v1311
        %v1313 = vpop.f32.mrf.mxu0
        %v1314 = vadd.f32 0.0, %v1313
        %1315 = vmatprep.mubr.bf16.mxu0 0
        %1316 = vmatmul.mubr.bf16.gmra.mxu0 %v1205
        %v1317 = vpop.f32.mrf.mxu0
        %v1318 = vadd.f32 0.0, %v1317
        %v1319 = vpop.f32.mrf.mxu0
        %v1320 = vadd.f32 0.0, %v1319
        %v1321 = vpop.f32.mrf.mxu0
        %v1322 = vadd.f32 0.0, %v1321
        %v1323 = vpop.f32.mrf.mxu0
        %v1324 = vadd.f32 0.0, %v1323
        %1325 = vdwg.mxu0
        %v1326 = vadd.f32 %v1068, %v1248
        %v1327 = vadd.f32 %v1069, %v1250
        %v1328 = vadd.f32 %v1070, %v1252
        %v1329 = vadd.f32 %v1071, %v1254
        %v1330 = vadd.f32 %v1072, %v1258
        %v1331 = vadd.f32 %v1073, %v1260
        %v1332 = vadd.f32 %v1074, %v1262
        %v1333 = vadd.f32 %v1075, %v1264
        %v1334 = vadd.f32 %v1076, %v1268
        %v1335 = vadd.f32 %v1077, %v1270
        %v1336 = vadd.f32 %v1078, %v1272
        %v1337 = vadd.f32 %v1079, %v1274
        %v1338 = vadd.f32 %v1080, %v1278
        %v1339 = vadd.f32 %v1081, %v1280
        %v1340 = vadd.f32 %v1082, %v1282
        %v1341 = vadd.f32 %v1083, %v1284
        %v1342 = vadd.f32 %v1084, %v1288
        %v1343 = vadd.f32 %v1085, %v1290
        %v1344 = vadd.f32 %v1086, %v1292
        %v1345 = vadd.f32 %v1087, %v1294
        %v1346 = vadd.f32 %v1088, %v1298
        %v1347 = vadd.f32 %v1089, %v1300
        %v1348 = vadd.f32 %v1090, %v1302
        %v1349 = vadd.f32 %v1091, %v1304
        %v1350 = vadd.f32 %v1092, %v1308
        %v1351 = vadd.f32 %v1093, %v1310
        %v1352 = vadd.f32 %v1094, %v1312
        %v1353 = vadd.f32 %v1095, %v1314
        %v1354 = vadd.f32 %v1096, %v1318
        %v1355 = vadd.f32 %v1097, %v1320
        %v1356 = vadd.f32 %v1098, %v1322
        %v1357 = vadd.f32 %v1099, %v1324
        %v1358 = vld [vmem:[#allocation2 + $0x4] sm:$0xff]
        %s1359 = scalar_lea.vmem %s3, 256
        %v1360 = vld [vmem:[%s1359] sm:$0xf]
        %v1361 = vld [vmem:[%s1359 + $0x4] sm:$0xf]
        %v1362 = vld [vmem:[%s1359 + $0x8] sm:$0xf]
        %v1363 = vld [vmem:[%s1359 + $0xc] sm:$0xf]
        %v1364 = vld [vmem:[%s1359 + $0x10] sm:$0xf]
        %v1365 = vld [vmem:[%s1359 + $0x14] sm:$0xf]
        %v1366 = vld [vmem:[%s1359 + $0x18] sm:$0xf]
        %v1367 = vld [vmem:[%s1359 + $0x1c] sm:$0xf]
        %v1368 = vld [vmem:[%s1359 + $0x20] sm:$0xf]
        %v1369 = vld [vmem:[%s1359 + $0x24] sm:$0xf]
        %v1370 = vld [vmem:[%s1359 + $0x28] sm:$0xf]
        %v1371 = vld [vmem:[%s1359 + $0x2c] sm:$0xf]
        %v1372 = vld [vmem:[%s1359 + $0x30] sm:$0xf]
        %v1373 = vld [vmem:[%s1359 + $0x34] sm:$0xf]
        %v1374 = vld [vmem:[%s1359 + $0x38] sm:$0xf]
        %v1375 = vld [vmem:[%s1359 + $0x3c] sm:$0xf]
        %v1392 = vunpack.c.l.b16 %v1360
        %v1393 = vunpack.c.l.b16 %v1361
        %v1394 = vunpack.c.l.b16 %v1362
        %v1395 = vunpack.c.l.b16 %v1363
        %v1396 = vunpack.c.l.b16 %v1364
        %v1397 = vunpack.c.l.b16 %v1365
        %v1398 = vunpack.c.l.b16 %v1366
        %v1399 = vunpack.c.l.b16 %v1367
        %v1400 = vunpack.c.l.b16 %v1368
        %v1401 = vunpack.c.l.b16 %v1369
        %v1402 = vunpack.c.l.b16 %v1370
        %v1403 = vunpack.c.l.b16 %v1371
        %v1404 = vunpack.c.l.b16 %v1372
        %v1405 = vunpack.c.l.b16 %v1373
        %v1406 = vunpack.c.l.b16 %v1374
        %v1407 = vunpack.c.l.b16 %v1375
        %v1408 = vpack.c.b16 %v1393, %v1392
        %v1409 = vpack.c.b16 %v1395, %v1394
        %v1410 = vpack.c.b16 %v1397, %v1396
        %v1411 = vpack.c.b16 %v1399, %v1398
        %v1412 = vpack.c.b16 %v1401, %v1400
        %v1413 = vpack.c.b16 %v1403, %v1402
        %v1414 = vpack.c.b16 %v1405, %v1404
        %v1415 = vpack.c.b16 %v1407, %v1406
        %v1417 = vunpack.c.l.b16 %v1358
        %v1418 = vunpack.c.h.b16 %v1358
        %v1419 = vpack.c.b16 %v1417, %v1417
        %v1420 = vpack.c.b16 %v1418, %v1418
        %v1422 = vsel %vm479, %v1408, 0
        %v1425 = vsel %vm479, %v1409, 0
        %v1428 = vsel %vm479, %v1410, 0
        %v1431 = vsel %vm479, %v1411, 0
        %v1434 = vsel %vm479, %v1412, 0
        %v1437 = vsel %vm479, %v1413, 0
        %v1440 = vsel %vm479, %v1414, 0
        %v1443 = vsel %vm479, %v1415, 0
        %v1446 = vsel %vm302, %v1419, 0
        %v1449 = vsel %vm302, %v1420, 0
        %1451 = vmatprep.subr.bf16.mxu0 0
        %1452 = vmatpush1.bf16.msra.mxu0 0
        %1453 = vmatprep.subr.bf16.mxu0 0
        %1454 = vmatpush1.bf16.msra.mxu0 0
        %1455 = vmatprep.subr.bf16.mxu0 0
        %1456 = vmatpush1.bf16.msra.mxu0 0
        %1457 = vmatprep.subr.bf16.mxu0 0
        %1458 = vmatpush1.bf16.msra.mxu0 0
        %1459 = vmatprep.subr.bf16.mxu0 0
        %1460 = vmatpush1.bf16.msra.mxu0 0
        %1461 = vmatprep.subr.bf16.mxu0 0
        %1462 = vmatpush1.bf16.msra.mxu0 0
        %1463 = vmatprep.subr.bf16.mxu0 0
        %1464 = vmatpush1.bf16.msra.mxu0 0
        %1465 = vmatprep.subr.bf16.mxu0 %v1449
        %1466 = vmatpush1.bf16.msra.mxu0 %v1446
        %1467 = vmatprep.subr.bf16.mxu0 0
        %1468 = vmatpush2.bf16.msra.mxu0 0
        %1469 = vmatprep.subr.bf16.mxu0 0
        %1470 = vmatpush2.bf16.msra.mxu0 0
        %1471 = vmatprep.subr.bf16.mxu0 0
        %1472 = vmatpush2.bf16.msra.mxu0 0
        %1473 = vmatprep.subr.bf16.mxu0 0
        %1474 = vmatpush2.bf16.msra.mxu0 0
        %1475 = vmatprep.subr.bf16.mxu0 0
        %1476 = vmatpush2.bf16.msra.mxu0 0
        %1477 = vmatprep.subr.bf16.mxu0 0
        %1478 = vmatpush2.bf16.msra.mxu0 0
        %1479 = vmatprep.subr.bf16.mxu0 0
        %1480 = vmatpush2.bf16.msra.mxu0 0
        %1481 = vmatprep.subr.bf16.mxu0 0
        %1482 = vmatpush2.bf16.msra.mxu0 0
        %1483 = vmatprep.mubr.bf16.mxu0 0
        %1484 = vmatmul.mubr.bf16.gmra.mxu0 %v1422
        %v1485 = vpop.f32.mrf.mxu0
        %v1486 = vadd.f32 0.0, %v1485
        %v1487 = vpop.f32.mrf.mxu0
        %v1488 = vadd.f32 0.0, %v1487
        %v1489 = vpop.f32.mrf.mxu0
        %v1490 = vadd.f32 0.0, %v1489
        %v1491 = vpop.f32.mrf.mxu0
        %v1492 = vadd.f32 0.0, %v1491
        %1493 = vmatprep.mubr.bf16.mxu0 0
        %1494 = vmatmul.mubr.bf16.gmra.mxu0 %v1425
        %v1495 = vpop.f32.mrf.mxu0
        %v1496 = vadd.f32 0.0, %v1495
        %v1497 = vpop.f32.mrf.mxu0
        %v1498 = vadd.f32 0.0, %v1497
        %v1499 = vpop.f32.mrf.mxu0
        %v1500 = vadd.f32 0.0, %v1499
        %v1501 = vpop.f32.mrf.mxu0
        %v1502 = vadd.f32 0.0, %v1501
        %1503 = vmatprep.mubr.bf16.mxu0 0
        %1504 = vmatmul.mubr.bf16.gmra.mxu0 %v1428
        %v1505 = vpop.f32.mrf.mxu0
        %v1506 = vadd.f32 0.0, %v1505
        %v1507 = vpop.f32.mrf.mxu0
        %v1508 = vadd.f32 0.0, %v1507
        %v1509 = vpop.f32.mrf.mxu0
        %v1510 = vadd.f32 0.0, %v1509
        %v1511 = vpop.f32.mrf.mxu0
        %v1512 = vadd.f32 0.0, %v1511
        %1513 = vmatprep.mubr.bf16.mxu0 0
        %1514 = vmatmul.mubr.bf16.gmra.mxu0 %v1431
        %v1515 = vpop.f32.mrf.mxu0
        %v1516 = vadd.f32 0.0, %v1515
        %v1517 = vpop.f32.mrf.mxu0
        %v1518 = vadd.f32 0.0, %v1517
        %v1519 = vpop.f32.mrf.mxu0
        %v1520 = vadd.f32 0.0, %v1519
        %v1521 = vpop.f32.mrf.mxu0
        %v1522 = vadd.f32 0.0, %v1521
        %1523 = vmatprep.mubr.bf16.mxu0 0
        %1524 = vmatmul.mubr.bf16.gmra.mxu0 %v1434
        %v1525 = vpop.f32.mrf.mxu0
        %v1526 = vadd.f32 0.0, %v1525
        %v1527 = vpop.f32.mrf.mxu0
        %v1528 = vadd.f32 0.0, %v1527
        %v1529 = vpop.f32.mrf.mxu0
        %v1530 = vadd.f32 0.0, %v1529
        %v1531 = vpop.f32.mrf.mxu0
        %v1532 = vadd.f32 0.0, %v1531
        %1533 = vmatprep.mubr.bf16.mxu0 0
        %1534 = vmatmul.mubr.bf16.gmra.mxu0 %v1437
        %v1535 = vpop.f32.mrf.mxu0
        %v1536 = vadd.f32 0.0, %v1535
        %v1537 = vpop.f32.mrf.mxu0
        %v1538 = vadd.f32 0.0, %v1537
        %v1539 = vpop.f32.mrf.mxu0
        %v1540 = vadd.f32 0.0, %v1539
        %v1541 = vpop.f32.mrf.mxu0
        %v1542 = vadd.f32 0.0, %v1541
        %1543 = vmatprep.mubr.bf16.mxu0 0
        %1544 = vmatmul.mubr.bf16.gmra.mxu0 %v1440
        %v1545 = vpop.f32.mrf.mxu0
        %v1546 = vadd.f32 0.0, %v1545
        %v1547 = vpop.f32.mrf.mxu0
        %v1548 = vadd.f32 0.0, %v1547
        %v1549 = vpop.f32.mrf.mxu0
        %v1550 = vadd.f32 0.0, %v1549
        %v1551 = vpop.f32.mrf.mxu0
        %v1552 = vadd.f32 0.0, %v1551
        %1553 = vmatprep.mubr.bf16.mxu0 0
        %1554 = vmatmul.mubr.bf16.gmra.mxu0 %v1443
        %v1555 = vpop.f32.mrf.mxu0
        %v1556 = vadd.f32 0.0, %v1555
        %v1557 = vpop.f32.mrf.mxu0
        %v1558 = vadd.f32 0.0, %v1557
        %v1559 = vpop.f32.mrf.mxu0
        %v1560 = vadd.f32 0.0, %v1559
        %v1561 = vpop.f32.mrf.mxu0
        %v1562 = vadd.f32 0.0, %v1561
        %1563 = vdwg.mxu0
        %v1564 = vadd.f32 %v1326, %v1486
        %v1565 = vadd.f32 %v1327, %v1488
        %v1566 = vadd.f32 %v1328, %v1490
        %v1567 = vadd.f32 %v1329, %v1492
        %v1568 = vadd.f32 %v1330, %v1496
        %v1569 = vadd.f32 %v1331, %v1498
        %v1570 = vadd.f32 %v1332, %v1500
        %v1571 = vadd.f32 %v1333, %v1502
        %v1572 = vadd.f32 %v1334, %v1506
        %v1573 = vadd.f32 %v1335, %v1508
        %v1574 = vadd.f32 %v1336, %v1510
        %v1575 = vadd.f32 %v1337, %v1512
        %v1576 = vadd.f32 %v1338, %v1516
        %v1577 = vadd.f32 %v1339, %v1518
        %v1578 = vadd.f32 %v1340, %v1520
        %v1579 = vadd.f32 %v1341, %v1522
        %v1580 = vadd.f32 %v1342, %v1526
        %v1581 = vadd.f32 %v1343, %v1528
        %v1582 = vadd.f32 %v1344, %v1530
        %v1583 = vadd.f32 %v1345, %v1532
        %v1584 = vadd.f32 %v1346, %v1536
        %v1585 = vadd.f32 %v1347, %v1538
        %v1586 = vadd.f32 %v1348, %v1540
        %v1587 = vadd.f32 %v1349, %v1542
        %v1588 = vadd.f32 %v1350, %v1546
        %v1589 = vadd.f32 %v1351, %v1548
        %v1590 = vadd.f32 %v1352, %v1550
        %v1591 = vadd.f32 %v1353, %v1552
        %v1592 = vadd.f32 %v1354, %v1556
        %v1593 = vadd.f32 %v1355, %v1558
        %v1594 = vadd.f32 %v1356, %v1560
        %v1595 = vadd.f32 %v1357, %v1562
        %v1596 = vld [vmem:[#allocation2 + $0x4] sm:$0xff]
        %v1597 = vld [vmem:[#allocation2 + $0xc] sm:$0xf]
        %1598 = vrot.lane.b32.xlu0 %v841, 1
        %v1599 = vpop.permute.xlu0 %1598
        %v1600 = vrot.slane %v1599, 4
        %v1601 = vsel %vm1180, %v1600, %v1599
        %v1604 = vmul.bf16 %v1596, %v1601
        %v1605 = vmul.bf16 %v1597, %v1600
        %s1606 = scalar_lea.vmem %s3, 320
        %v1607 = vld [vmem:[%s1606] sm:$0xf]
        %v1608 = vld [vmem:[%s1606 + $0x4] sm:$0xf]
        %v1609 = vld [vmem:[%s1606 + $0x8] sm:$0xf]
        %v1610 = vld [vmem:[%s1606 + $0xc] sm:$0xf]
        %v1611 = vld [vmem:[%s1606 + $0x10] sm:$0xf]
        %v1612 = vld [vmem:[%s1606 + $0x14] sm:$0xf]
        %v1613 = vld [vmem:[%s1606 + $0x18] sm:$0xf]
        %v1614 = vld [vmem:[%s1606 + $0x1c] sm:$0xf]
        %v1615 = vld [vmem:[%s1606 + $0x20] sm:$0xf]
        %v1616 = vld [vmem:[%s1606 + $0x24] sm:$0xf]
        %v1617 = vld [vmem:[%s1606 + $0x28] sm:$0xf]
        %v1618 = vld [vmem:[%s1606 + $0x2c] sm:$0xf]
        %v1619 = vld [vmem:[%s1606 + $0x30] sm:$0xf]
        %v1620 = vld [vmem:[%s1606 + $0x34] sm:$0xf]
        %v1621 = vld [vmem:[%s1606 + $0x38] sm:$0xf]
        %v1622 = vld [vmem:[%s1606 + $0x3c] sm:$0xf]
        %v1639 = vunpack.c.l.b16 %v1607
        %v1640 = vunpack.c.l.b16 %v1608
        %v1641 = vunpack.c.l.b16 %v1609
        %v1642 = vunpack.c.l.b16 %v1610
        %v1643 = vunpack.c.l.b16 %v1611
        %v1644 = vunpack.c.l.b16 %v1612
        %v1645 = vunpack.c.l.b16 %v1613
        %v1646 = vunpack.c.l.b16 %v1614
        %v1647 = vunpack.c.l.b16 %v1615
        %v1648 = vunpack.c.l.b16 %v1616
        %v1649 = vunpack.c.l.b16 %v1617
        %v1650 = vunpack.c.l.b16 %v1618
        %v1651 = vunpack.c.l.b16 %v1619
        %v1652 = vunpack.c.l.b16 %v1620
        %v1653 = vunpack.c.l.b16 %v1621
        %v1654 = vunpack.c.l.b16 %v1622
        %v1655 = vpack.c.b16 %v1640, %v1639
        %v1656 = vpack.c.b16 %v1642, %v1641
        %v1657 = vpack.c.b16 %v1644, %v1643
        %v1658 = vpack.c.b16 %v1646, %v1645
        %v1659 = vpack.c.b16 %v1648, %v1647
        %v1660 = vpack.c.b16 %v1650, %v1649
        %v1661 = vpack.c.b16 %v1652, %v1651
        %v1662 = vpack.c.b16 %v1654, %v1653
        %v1665 = vunpack.c.l.b16 %v1604
        %v1666 = vunpack.c.h.b16 %v1604
        %v1667 = vunpack.c.l.b16 %v1605
        %v1668 = vpack.c.b16 %v1665, %v1665
        %v1669 = vpack.c.b16 %v1666, %v1666
        %v1670 = vpack.c.b16 %v1667, %v1667
        %1671 = vrot.lane.b32.xlu0 %v1668, 127
        %v1672 = vpop.permute.xlu0 %1671
        %1673 = vrot.lane.b32.xlu0 %v1669, 127
        %v1674 = vpop.permute.xlu0 %1673
        %1675 = vrot.lane.b32.xlu0 %v1670, 127
        %v1676 = vpop.permute.xlu0 %1675
        %v1677 = vsel %vm1103, %v1672, %v1674
        %v1678 = vsel %vm1103, %v1674, %v1676
        %v1680 = vsel %vm479, %v1655, 0
        %v1683 = vsel %vm479, %v1656, 0
        %v1686 = vsel %vm479, %v1657, 0
        %v1689 = vsel %vm479, %v1658, 0
        %v1692 = vsel %vm479, %v1659, 0
        %v1695 = vsel %vm479, %v1660, 0
        %v1698 = vsel %vm479, %v1661, 0
        %v1701 = vsel %vm479, %v1662, 0
        %v1704 = vsel %vm302, %v1677, 0
        %v1707 = vsel %vm302, %v1678, 0
        %1709 = vmatprep.subr.bf16.mxu0 0
        %1710 = vmatpush1.bf16.msra.mxu0 0
        %1711 = vmatprep.subr.bf16.mxu0 0
        %1712 = vmatpush1.bf16.msra.mxu0 0
        %1713 = vmatprep.subr.bf16.mxu0 0
        %1714 = vmatpush1.bf16.msra.mxu0 0
        %1715 = vmatprep.subr.bf16.mxu0 0
        %1716 = vmatpush1.bf16.msra.mxu0 0
        %1717 = vmatprep.subr.bf16.mxu0 0
        %1718 = vmatpush1.bf16.msra.mxu0 0
        %1719 = vmatprep.subr.bf16.mxu0 0
        %1720 = vmatpush1.bf16.msra.mxu0 0
        %1721 = vmatprep.subr.bf16.mxu0 0
        %1722 = vmatpush1.bf16.msra.mxu0 0
        %1723 = vmatprep.subr.bf16.mxu0 %v1707
        %1724 = vmatpush1.bf16.msra.mxu0 %v1704
        %1725 = vmatprep.subr.bf16.mxu0 0
        %1726 = vmatpush2.bf16.msra.mxu0 0
        %1727 = vmatprep.subr.bf16.mxu0 0
        %1728 = vmatpush2.bf16.msra.mxu0 0
        %1729 = vmatprep.subr.bf16.mxu0 0
        %1730 = vmatpush2.bf16.msra.mxu0 0
        %1731 = vmatprep.subr.bf16.mxu0 0
        %1732 = vmatpush2.bf16.msra.mxu0 0
        %1733 = vmatprep.subr.bf16.mxu0 0
        %1734 = vmatpush2.bf16.msra.mxu0 0
        %1735 = vmatprep.subr.bf16.mxu0 0
        %1736 = vmatpush2.bf16.msra.mxu0 0
        %1737 = vmatprep.subr.bf16.mxu0 0
        %1738 = vmatpush2.bf16.msra.mxu0 0
        %1739 = vmatprep.subr.bf16.mxu0 0
        %1740 = vmatpush2.bf16.msra.mxu0 0
        %1741 = vmatprep.mubr.bf16.mxu0 0
        %1742 = vmatmul.mubr.bf16.gmra.mxu0 %v1680
        %v1743 = vpop.f32.mrf.mxu0
        %v1744 = vadd.f32 0.0, %v1743
        %v1745 = vpop.f32.mrf.mxu0
        %v1746 = vadd.f32 0.0, %v1745
        %v1747 = vpop.f32.mrf.mxu0
        %v1748 = vadd.f32 0.0, %v1747
        %v1749 = vpop.f32.mrf.mxu0
        %v1750 = vadd.f32 0.0, %v1749
        %1751 = vmatprep.mubr.bf16.mxu0 0
        %1752 = vmatmul.mubr.bf16.gmra.mxu0 %v1683
        %v1753 = vpop.f32.mrf.mxu0
        %v1754 = vadd.f32 0.0, %v1753
        %v1755 = vpop.f32.mrf.mxu0
        %v1756 = vadd.f32 0.0, %v1755
        %v1757 = vpop.f32.mrf.mxu0
        %v1758 = vadd.f32 0.0, %v1757
        %v1759 = vpop.f32.mrf.mxu0
        %v1760 = vadd.f32 0.0, %v1759
        %1761 = vmatprep.mubr.bf16.mxu0 0
        %1762 = vmatmul.mubr.bf16.gmra.mxu0 %v1686
        %v1763 = vpop.f32.mrf.mxu0
        %v1764 = vadd.f32 0.0, %v1763
        %v1765 = vpop.f32.mrf.mxu0
        %v1766 = vadd.f32 0.0, %v1765
        %v1767 = vpop.f32.mrf.mxu0
        %v1768 = vadd.f32 0.0, %v1767
        %v1769 = vpop.f32.mrf.mxu0
        %v1770 = vadd.f32 0.0, %v1769
        %1771 = vmatprep.mubr.bf16.mxu0 0
        %1772 = vmatmul.mubr.bf16.gmra.mxu0 %v1689
        %v1773 = vpop.f32.mrf.mxu0
        %v1774 = vadd.f32 0.0, %v1773
        %v1775 = vpop.f32.mrf.mxu0
        %v1776 = vadd.f32 0.0, %v1775
        %v1777 = vpop.f32.mrf.mxu0
        %v1778 = vadd.f32 0.0, %v1777
        %v1779 = vpop.f32.mrf.mxu0
        %v1780 = vadd.f32 0.0, %v1779
        %1781 = vmatprep.mubr.bf16.mxu0 0
        %1782 = vmatmul.mubr.bf16.gmra.mxu0 %v1692
        %v1783 = vpop.f32.mrf.mxu0
        %v1784 = vadd.f32 0.0, %v1783
        %v1785 = vpop.f32.mrf.mxu0
        %v1786 = vadd.f32 0.0, %v1785
        %v1787 = vpop.f32.mrf.mxu0
        %v1788 = vadd.f32 0.0, %v1787
        %v1789 = vpop.f32.mrf.mxu0
        %v1790 = vadd.f32 0.0, %v1789
        %1791 = vmatprep.mubr.bf16.mxu0 0
        %1792 = vmatmul.mubr.bf16.gmra.mxu0 %v1695
        %v1793 = vpop.f32.mrf.mxu0
        %v1794 = vadd.f32 0.0, %v1793
        %v1795 = vpop.f32.mrf.mxu0
        %v1796 = vadd.f32 0.0, %v1795
        %v1797 = vpop.f32.mrf.mxu0
        %v1798 = vadd.f32 0.0, %v1797
        %v1799 = vpop.f32.mrf.mxu0
        %v1800 = vadd.f32 0.0, %v1799
        %1801 = vmatprep.mubr.bf16.mxu0 0
        %1802 = vmatmul.mubr.bf16.gmra.mxu0 %v1698
        %v1803 = vpop.f32.mrf.mxu0
        %v1804 = vadd.f32 0.0, %v1803
        %v1805 = vpop.f32.mrf.mxu0
        %v1806 = vadd.f32 0.0, %v1805
        %v1807 = vpop.f32.mrf.mxu0
        %v1808 = vadd.f32 0.0, %v1807
        %v1809 = vpop.f32.mrf.mxu0
        %v1810 = vadd.f32 0.0, %v1809
        %1811 = vmatprep.mubr.bf16.mxu0 0
        %1812 = vmatmul.mubr.bf16.gmra.mxu0 %v1701
        %v1813 = vpop.f32.mrf.mxu0
        %v1814 = vadd.f32 0.0, %v1813
        %v1815 = vpop.f32.mrf.mxu0
        %v1816 = vadd.f32 0.0, %v1815
        %v1817 = vpop.f32.mrf.mxu0
        %v1818 = vadd.f32 0.0, %v1817
        %v1819 = vpop.f32.mrf.mxu0
        %v1820 = vadd.f32 0.0, %v1819
        %1821 = vdwg.mxu0
        %v1822 = vadd.f32 %v1564, %v1744
        %v1823 = vadd.f32 %v1565, %v1746
        %v1824 = vadd.f32 %v1566, %v1748
        %v1825 = vadd.f32 %v1567, %v1750
        %v1826 = vadd.f32 %v1568, %v1754
        %v1827 = vadd.f32 %v1569, %v1756
        %v1828 = vadd.f32 %v1570, %v1758
        %v1829 = vadd.f32 %v1571, %v1760
        %v1830 = vadd.f32 %v1572, %v1764
        %v1831 = vadd.f32 %v1573, %v1766
        %v1832 = vadd.f32 %v1574, %v1768
        %v1833 = vadd.f32 %v1575, %v1770
        %v1834 = vadd.f32 %v1576, %v1774
        %v1835 = vadd.f32 %v1577, %v1776
        %v1836 = vadd.f32 %v1578, %v1778
        %v1837 = vadd.f32 %v1579, %v1780
        %v1838 = vadd.f32 %v1580, %v1784
        %v1839 = vadd.f32 %v1581, %v1786
        %v1840 = vadd.f32 %v1582, %v1788
        %v1841 = vadd.f32 %v1583, %v1790
        %v1842 = vadd.f32 %v1584, %v1794
        %v1843 = vadd.f32 %v1585, %v1796
        %v1844 = vadd.f32 %v1586, %v1798
        %v1845 = vadd.f32 %v1587, %v1800
        %v1846 = vadd.f32 %v1588, %v1804
        %v1847 = vadd.f32 %v1589, %v1806
        %v1848 = vadd.f32 %v1590, %v1808
        %v1849 = vadd.f32 %v1591, %v1810
        %v1850 = vadd.f32 %v1592, %v1814
        %v1851 = vadd.f32 %v1593, %v1816
        %v1852 = vadd.f32 %v1594, %v1818
        %v1853 = vadd.f32 %v1595, %v1820
        %1854 = vrot.lane.b32.xlu0 %v379, 15
        %v1855 = vpop.permute.xlu0 %1854
        %v1856 = vrot.slane %v1855, 4
        %v1857 = vsel %vm922, %v1856, %v1855
        %v1860 = vmul.bf16 %v1596, %v1857
        %v1861 = vmul.bf16 %v1597, %v1856
        %s1862 = scalar_lea.vmem %s3, 384
        %v1863 = vld [vmem:[%s1862] sm:$0xf]
        %v1864 = vld [vmem:[%s1862 + $0x4] sm:$0xf]
        %v1865 = vld [vmem:[%s1862 + $0x8] sm:$0xf]
        %v1866 = vld [vmem:[%s1862 + $0xc] sm:$0xf]
        %v1867 = vld [vmem:[%s1862 + $0x10] sm:$0xf]
        %v1868 = vld [vmem:[%s1862 + $0x14] sm:$0xf]
        %v1869 = vld [vmem:[%s1862 + $0x18] sm:$0xf]
        %v1870 = vld [vmem:[%s1862 + $0x1c] sm:$0xf]
        %v1871 = vld [vmem:[%s1862 + $0x20] sm:$0xf]
        %v1872 = vld [vmem:[%s1862 + $0x24] sm:$0xf]
        %v1873 = vld [vmem:[%s1862 + $0x28] sm:$0xf]
        %v1874 = vld [vmem:[%s1862 + $0x2c] sm:$0xf]
        %v1875 = vld [vmem:[%s1862 + $0x30] sm:$0xf]
        %v1876 = vld [vmem:[%s1862 + $0x34] sm:$0xf]
        %v1877 = vld [vmem:[%s1862 + $0x38] sm:$0xf]
        %v1878 = vld [vmem:[%s1862 + $0x3c] sm:$0xf]
        %v1895 = vunpack.c.l.b16 %v1863
        %v1896 = vunpack.c.l.b16 %v1864
        %v1897 = vunpack.c.l.b16 %v1865
        %v1898 = vunpack.c.l.b16 %v1866
        %v1899 = vunpack.c.l.b16 %v1867
        %v1900 = vunpack.c.l.b16 %v1868
        %v1901 = vunpack.c.l.b16 %v1869
        %v1902 = vunpack.c.l.b16 %v1870
        %v1903 = vunpack.c.l.b16 %v1871
        %v1904 = vunpack.c.l.b16 %v1872
        %v1905 = vunpack.c.l.b16 %v1873
        %v1906 = vunpack.c.l.b16 %v1874
        %v1907 = vunpack.c.l.b16 %v1875
        %v1908 = vunpack.c.l.b16 %v1876
        %v1909 = vunpack.c.l.b16 %v1877
        %v1910 = vunpack.c.l.b16 %v1878
        %v1911 = vpack.c.b16 %v1896, %v1895
        %v1912 = vpack.c.b16 %v1898, %v1897
        %v1913 = vpack.c.b16 %v1900, %v1899
        %v1914 = vpack.c.b16 %v1902, %v1901
        %v1915 = vpack.c.b16 %v1904, %v1903
        %v1916 = vpack.c.b16 %v1906, %v1905
        %v1917 = vpack.c.b16 %v1908, %v1907
        %v1918 = vpack.c.b16 %v1910, %v1909
        %v1921 = vunpack.c.l.b16 %v1860
        %v1922 = vunpack.c.h.b16 %v1860
        %v1923 = vunpack.c.l.b16 %v1861
        %v1924 = vpack.c.b16 %v1921, %v1921
        %v1925 = vpack.c.b16 %v1922, %v1922
        %v1926 = vpack.c.b16 %v1923, %v1923
        %1927 = vrot.lane.b32.xlu0 %v1924, 113
        %v1928 = vpop.permute.xlu0 %1927
        %1929 = vrot.lane.b32.xlu0 %v1925, 113
        %v1930 = vpop.permute.xlu0 %1929
        %1931 = vrot.lane.b32.xlu0 %v1926, 113
        %v1932 = vpop.permute.xlu0 %1931
        %v1933 = vsel %vm845, %v1928, %v1930
        %v1934 = vsel %vm845, %v1930, %v1932
        %v1936 = vsel %vm479, %v1911, 0
        %v1939 = vsel %vm479, %v1912, 0
        %v1942 = vsel %vm479, %v1913, 0
        %v1945 = vsel %vm479, %v1914, 0
        %v1948 = vsel %vm479, %v1915, 0
        %v1951 = vsel %vm479, %v1916, 0
        %v1954 = vsel %vm479, %v1917, 0
        %v1957 = vsel %vm479, %v1918, 0
        %v1960 = vsel %vm302, %v1933, 0
        %v1963 = vsel %vm302, %v1934, 0
        %1965 = vmatprep.subr.bf16.mxu0 0
        %1966 = vmatpush1.bf16.msra.mxu0 0
        %1967 = vmatprep.subr.bf16.mxu0 0
        %1968 = vmatpush1.bf16.msra.mxu0 0
        %1969 = vmatprep.subr.bf16.mxu0 0
        %1970 = vmatpush1.bf16.msra.mxu0 0
        %1971 = vmatprep.subr.bf16.mxu0 0
        %1972 = vmatpush1.bf16.msra.mxu0 0
        %1973 = vmatprep.subr.bf16.mxu0 0
        %1974 = vmatpush1.bf16.msra.mxu0 0
        %1975 = vmatprep.subr.bf16.mxu0 0
        %1976 = vmatpush1.bf16.msra.mxu0 0
        %1977 = vmatprep.subr.bf16.mxu0 0
        %1978 = vmatpush1.bf16.msra.mxu0 0
        %1979 = vmatprep.subr.bf16.mxu0 %v1963
        %1980 = vmatpush1.bf16.msra.mxu0 %v1960
        %1981 = vmatprep.subr.bf16.mxu0 0
        %1982 = vmatpush2.bf16.msra.mxu0 0
        %1983 = vmatprep.subr.bf16.mxu0 0
        %1984 = vmatpush2.bf16.msra.mxu0 0
        %1985 = vmatprep.subr.bf16.mxu0 0
        %1986 = vmatpush2.bf16.msra.mxu0 0
        %1987 = vmatprep.subr.bf16.mxu0 0
        %1988 = vmatpush2.bf16.msra.mxu0 0
        %1989 = vmatprep.subr.bf16.mxu0 0
        %1990 = vmatpush2.bf16.msra.mxu0 0
        %1991 = vmatprep.subr.bf16.mxu0 0
        %1992 = vmatpush2.bf16.msra.mxu0 0
        %1993 = vmatprep.subr.bf16.mxu0 0
        %1994 = vmatpush2.bf16.msra.mxu0 0
        %1995 = vmatprep.subr.bf16.mxu0 0
        %1996 = vmatpush2.bf16.msra.mxu0 0
        %1997 = vmatprep.mubr.bf16.mxu0 0
        %1998 = vmatmul.mubr.bf16.gmra.mxu0 %v1936
        %v1999 = vpop.f32.mrf.mxu0
        %v2000 = vadd.f32 0.0, %v1999
        %v2001 = vpop.f32.mrf.mxu0
        %v2002 = vadd.f32 0.0, %v2001
        %v2003 = vpop.f32.mrf.mxu0
        %v2004 = vadd.f32 0.0, %v2003
        %v2005 = vpop.f32.mrf.mxu0
        %v2006 = vadd.f32 0.0, %v2005
        %2007 = vmatprep.mubr.bf16.mxu0 0
        %2008 = vmatmul.mubr.bf16.gmra.mxu0 %v1939
        %v2009 = vpop.f32.mrf.mxu0
        %v2010 = vadd.f32 0.0, %v2009
        %v2011 = vpop.f32.mrf.mxu0
        %v2012 = vadd.f32 0.0, %v2011
        %v2013 = vpop.f32.mrf.mxu0
        %v2014 = vadd.f32 0.0, %v2013
        %v2015 = vpop.f32.mrf.mxu0
        %v2016 = vadd.f32 0.0, %v2015
        %2017 = vmatprep.mubr.bf16.mxu0 0
        %2018 = vmatmul.mubr.bf16.gmra.mxu0 %v1942
        %v2019 = vpop.f32.mrf.mxu0
        %v2020 = vadd.f32 0.0, %v2019
        %v2021 = vpop.f32.mrf.mxu0
        %v2022 = vadd.f32 0.0, %v2021
        %v2023 = vpop.f32.mrf.mxu0
        %v2024 = vadd.f32 0.0, %v2023
        %v2025 = vpop.f32.mrf.mxu0
        %v2026 = vadd.f32 0.0, %v2025
        %2027 = vmatprep.mubr.bf16.mxu0 0
        %2028 = vmatmul.mubr.bf16.gmra.mxu0 %v1945
        %v2029 = vpop.f32.mrf.mxu0
        %v2030 = vadd.f32 0.0, %v2029
        %v2031 = vpop.f32.mrf.mxu0
        %v2032 = vadd.f32 0.0, %v2031
        %v2033 = vpop.f32.mrf.mxu0
        %v2034 = vadd.f32 0.0, %v2033
        %v2035 = vpop.f32.mrf.mxu0
        %v2036 = vadd.f32 0.0, %v2035
        %2037 = vmatprep.mubr.bf16.mxu0 0
        %2038 = vmatmul.mubr.bf16.gmra.mxu0 %v1948
        %v2039 = vpop.f32.mrf.mxu0
        %v2040 = vadd.f32 0.0, %v2039
        %v2041 = vpop.f32.mrf.mxu0
        %v2042 = vadd.f32 0.0, %v2041
        %v2043 = vpop.f32.mrf.mxu0
        %v2044 = vadd.f32 0.0, %v2043
        %v2045 = vpop.f32.mrf.mxu0
        %v2046 = vadd.f32 0.0, %v2045
        %2047 = vmatprep.mubr.bf16.mxu0 0
        %2048 = vmatmul.mubr.bf16.gmra.mxu0 %v1951
        %v2049 = vpop.f32.mrf.mxu0
        %v2050 = vadd.f32 0.0, %v2049
        %v2051 = vpop.f32.mrf.mxu0
        %v2052 = vadd.f32 0.0, %v2051
        %v2053 = vpop.f32.mrf.mxu0
        %v2054 = vadd.f32 0.0, %v2053
        %v2055 = vpop.f32.mrf.mxu0
        %v2056 = vadd.f32 0.0, %v2055
        %2057 = vmatprep.mubr.bf16.mxu0 0
        %2058 = vmatmul.mubr.bf16.gmra.mxu0 %v1954
        %v2059 = vpop.f32.mrf.mxu0
        %v2060 = vadd.f32 0.0, %v2059
        %v2061 = vpop.f32.mrf.mxu0
        %v2062 = vadd.f32 0.0, %v2061
        %v2063 = vpop.f32.mrf.mxu0
        %v2064 = vadd.f32 0.0, %v2063
        %v2065 = vpop.f32.mrf.mxu0
        %v2066 = vadd.f32 0.0, %v2065
        %2067 = vmatprep.mubr.bf16.mxu0 0
        %2068 = vmatmul.mubr.bf16.gmra.mxu0 %v1957
        %v2069 = vpop.f32.mrf.mxu0
        %v2070 = vadd.f32 0.0, %v2069
        %v2071 = vpop.f32.mrf.mxu0
        %v2072 = vadd.f32 0.0, %v2071
        %v2073 = vpop.f32.mrf.mxu0
        %v2074 = vadd.f32 0.0, %v2073
        %v2075 = vpop.f32.mrf.mxu0
        %v2076 = vadd.f32 0.0, %v2075
        %2077 = vdwg.mxu0
        %v2078 = vadd.f32 %v1822, %v2000
        %v2079 = vadd.f32 %v1823, %v2002
        %v2080 = vadd.f32 %v1824, %v2004
        %v2081 = vadd.f32 %v1825, %v2006
        %v2082 = vadd.f32 %v1826, %v2010
        %v2083 = vadd.f32 %v1827, %v2012
        %v2084 = vadd.f32 %v1828, %v2014
        %v2085 = vadd.f32 %v1829, %v2016
        %v2086 = vadd.f32 %v1830, %v2020
        %v2087 = vadd.f32 %v1831, %v2022
        %v2088 = vadd.f32 %v1832, %v2024
        %v2089 = vadd.f32 %v1833, %v2026
        %v2090 = vadd.f32 %v1834, %v2030
        %v2091 = vadd.f32 %v1835, %v2032
        %v2092 = vadd.f32 %v1836, %v2034
        %v2093 = vadd.f32 %v1837, %v2036
        %v2094 = vadd.f32 %v1838, %v2040
        %v2095 = vadd.f32 %v1839, %v2042
        %v2096 = vadd.f32 %v1840, %v2044
        %v2097 = vadd.f32 %v1841, %v2046
        %v2098 = vadd.f32 %v1842, %v2050
        %v2099 = vadd.f32 %v1843, %v2052
        %v2100 = vadd.f32 %v1844, %v2054
        %v2101 = vadd.f32 %v1845, %v2056
        %v2102 = vadd.f32 %v1846, %v2060
        %v2103 = vadd.f32 %v1847, %v2062
        %v2104 = vadd.f32 %v1848, %v2064
        %v2105 = vadd.f32 %v1849, %v2066
        %v2106 = vadd.f32 %v1850, %v2070
        %v2107 = vadd.f32 %v1851, %v2072
        %v2108 = vadd.f32 %v1852, %v2074
        %v2109 = vadd.f32 %v1853, %v2076
        %s2110 = scalar_lea.vmem %s3, 448
        %v2111 = vld [vmem:[%s2110] sm:$0xf]
        %v2112 = vld [vmem:[%s2110 + $0x4] sm:$0xf]
        %v2113 = vld [vmem:[%s2110 + $0x8] sm:$0xf]
        %v2114 = vld [vmem:[%s2110 + $0xc] sm:$0xf]
        %v2115 = vld [vmem:[%s2110 + $0x10] sm:$0xf]
        %v2116 = vld [vmem:[%s2110 + $0x14] sm:$0xf]
        %v2117 = vld [vmem:[%s2110 + $0x18] sm:$0xf]
        %v2118 = vld [vmem:[%s2110 + $0x1c] sm:$0xf]
        %v2119 = vld [vmem:[%s2110 + $0x20] sm:$0xf]
        %v2120 = vld [vmem:[%s2110 + $0x24] sm:$0xf]
        %v2121 = vld [vmem:[%s2110 + $0x28] sm:$0xf]
        %v2122 = vld [vmem:[%s2110 + $0x2c] sm:$0xf]
        %v2123 = vld [vmem:[%s2110 + $0x30] sm:$0xf]
        %v2124 = vld [vmem:[%s2110 + $0x34] sm:$0xf]
        %v2125 = vld [vmem:[%s2110 + $0x38] sm:$0xf]
        %v2126 = vld [vmem:[%s2110 + $0x3c] sm:$0xf]
        %v2143 = vunpack.c.l.b16 %v2111
        %v2144 = vunpack.c.l.b16 %v2112
        %v2145 = vunpack.c.l.b16 %v2113
        %v2146 = vunpack.c.l.b16 %v2114
        %v2147 = vunpack.c.l.b16 %v2115
        %v2148 = vunpack.c.l.b16 %v2116
        %v2149 = vunpack.c.l.b16 %v2117
        %v2150 = vunpack.c.l.b16 %v2118
        %v2151 = vunpack.c.l.b16 %v2119
        %v2152 = vunpack.c.l.b16 %v2120
        %v2153 = vunpack.c.l.b16 %v2121
        %v2154 = vunpack.c.l.b16 %v2122
        %v2155 = vunpack.c.l.b16 %v2123
        %v2156 = vunpack.c.l.b16 %v2124
        %v2157 = vunpack.c.l.b16 %v2125
        %v2158 = vunpack.c.l.b16 %v2126
        %v2159 = vpack.c.b16 %v2144, %v2143
        %v2160 = vpack.c.b16 %v2146, %v2145
        %v2161 = vpack.c.b16 %v2148, %v2147
        %v2162 = vpack.c.b16 %v2150, %v2149
        %v2163 = vpack.c.b16 %v2152, %v2151
        %v2164 = vpack.c.b16 %v2154, %v2153
        %v2165 = vpack.c.b16 %v2156, %v2155
        %v2166 = vpack.c.b16 %v2158, %v2157
        %v2169 = vunpack.c.l.b16 %v1596
        %v2170 = vunpack.c.h.b16 %v1596
        %v2171 = vunpack.c.l.b16 %v1597
        %v2172 = vpack.c.b16 %v2169, %v2169
        %v2173 = vpack.c.b16 %v2170, %v2170
        %v2174 = vpack.c.b16 %v2171, %v2171
        %2175 = vrot.lane.b32.xlu0 %v2172, 112
        %v2176 = vpop.permute.xlu0 %2175
        %2177 = vrot.lane.b32.xlu0 %v2173, 112
        %v2178 = vpop.permute.xlu0 %2177
        %2179 = vrot.lane.b32.xlu0 %v2174, 112
        %v2180 = vpop.permute.xlu0 %2179
        %vm2181 = vcmask 916480
        %v2182 = vsel %vm2181, %v2176, %v2178
        %v2183 = vsel %vm2181, %v2178, %v2180
        %v2185 = vsel %vm479, %v2159, 0
        %v2188 = vsel %vm479, %v2160, 0
        %v2191 = vsel %vm479, %v2161, 0
        %v2194 = vsel %vm479, %v2162, 0
        %v2197 = vsel %vm479, %v2163, 0
        %v2200 = vsel %vm479, %v2164, 0
        %v2203 = vsel %vm479, %v2165, 0
        %v2206 = vsel %vm479, %v2166, 0
        %v2209 = vsel %vm302, %v2182, 0
        %v2212 = vsel %vm302, %v2183, 0
        %2214 = vmatprep.subr.bf16.mxu0 0
        %2215 = vmatpush1.bf16.msra.mxu0 0
        %2216 = vmatprep.subr.bf16.mxu0 0
        %2217 = vmatpush1.bf16.msra.mxu0 0
        %2218 = vmatprep.subr.bf16.mxu0 0
        %2219 = vmatpush1.bf16.msra.mxu0 0
        %2220 = vmatprep.subr.bf16.mxu0 0
        %2221 = vmatpush1.bf16.msra.mxu0 0
        %2222 = vmatprep.subr.bf16.mxu0 0
        %2223 = vmatpush1.bf16.msra.mxu0 0
        %2224 = vmatprep.subr.bf16.mxu0 0
        %2225 = vmatpush1.bf16.msra.mxu0 0
        %2226 = vmatprep.subr.bf16.mxu0 0
        %2227 = vmatpush1.bf16.msra.mxu0 0
        %2228 = vmatprep.subr.bf16.mxu0 %v2212
        %2229 = vmatpush1.bf16.msra.mxu0 %v2209
        %2230 = vmatprep.subr.bf16.mxu0 0
        %2231 = vmatpush2.bf16.msra.mxu0 0
        %2232 = vmatprep.subr.bf16.mxu0 0
        %2233 = vmatpush2.bf16.msra.mxu0 0
        %2234 = vmatprep.subr.bf16.mxu0 0
        %2235 = vmatpush2.bf16.msra.mxu0 0
        %2236 = vmatprep.subr.bf16.mxu0 0
        %2237 = vmatpush2.bf16.msra.mxu0 0
        %2238 = vmatprep.subr.bf16.mxu0 0
        %2239 = vmatpush2.bf16.msra.mxu0 0
        %2240 = vmatprep.subr.bf16.mxu0 0
        %2241 = vmatpush2.bf16.msra.mxu0 0
        %2242 = vmatprep.subr.bf16.mxu0 0
        %2243 = vmatpush2.bf16.msra.mxu0 0
        %2244 = vmatprep.subr.bf16.mxu0 0
        %2245 = vmatpush2.bf16.msra.mxu0 0
        %2246 = vmatprep.mubr.bf16.mxu0 0
        %2247 = vmatmul.mubr.bf16.gmra.mxu0 %v2185
        %v2248 = vpop.f32.mrf.mxu0
        %v2249 = vadd.f32 0.0, %v2248
        %v2250 = vpop.f32.mrf.mxu0
        %v2251 = vadd.f32 0.0, %v2250
        %v2252 = vpop.f32.mrf.mxu0
        %v2253 = vadd.f32 0.0, %v2252
        %v2254 = vpop.f32.mrf.mxu0
        %v2255 = vadd.f32 0.0, %v2254
        %2256 = vmatprep.mubr.bf16.mxu0 0
        %2257 = vmatmul.mubr.bf16.gmra.mxu0 %v2188
        %v2258 = vpop.f32.mrf.mxu0
        %v2259 = vadd.f32 0.0, %v2258
        %v2260 = vpop.f32.mrf.mxu0
        %v2261 = vadd.f32 0.0, %v2260
        %v2262 = vpop.f32.mrf.mxu0
        %v2263 = vadd.f32 0.0, %v2262
        %v2264 = vpop.f32.mrf.mxu0
        %v2265 = vadd.f32 0.0, %v2264
        %2266 = vmatprep.mubr.bf16.mxu0 0
        %2267 = vmatmul.mubr.bf16.gmra.mxu0 %v2191
        %v2268 = vpop.f32.mrf.mxu0
        %v2269 = vadd.f32 0.0, %v2268
        %v2270 = vpop.f32.mrf.mxu0
        %v2271 = vadd.f32 0.0, %v2270
        %v2272 = vpop.f32.mrf.mxu0
        %v2273 = vadd.f32 0.0, %v2272
        %v2274 = vpop.f32.mrf.mxu0
        %v2275 = vadd.f32 0.0, %v2274
        %2276 = vmatprep.mubr.bf16.mxu0 0
        %2277 = vmatmul.mubr.bf16.gmra.mxu0 %v2194
        %v2278 = vpop.f32.mrf.mxu0
        %v2279 = vadd.f32 0.0, %v2278
        %v2280 = vpop.f32.mrf.mxu0
        %v2281 = vadd.f32 0.0, %v2280
        %v2282 = vpop.f32.mrf.mxu0
        %v2283 = vadd.f32 0.0, %v2282
        %v2284 = vpop.f32.mrf.mxu0
        %v2285 = vadd.f32 0.0, %v2284
        %2286 = vmatprep.mubr.bf16.mxu0 0
        %2287 = vmatmul.mubr.bf16.gmra.mxu0 %v2197
        %v2288 = vpop.f32.mrf.mxu0
        %v2289 = vadd.f32 0.0, %v2288
        %v2290 = vpop.f32.mrf.mxu0
        %v2291 = vadd.f32 0.0, %v2290
        %v2292 = vpop.f32.mrf.mxu0
        %v2293 = vadd.f32 0.0, %v2292
        %v2294 = vpop.f32.mrf.mxu0
        %v2295 = vadd.f32 0.0, %v2294
        %2296 = vmatprep.mubr.bf16.mxu0 0
        %2297 = vmatmul.mubr.bf16.gmra.mxu0 %v2200
        %v2298 = vpop.f32.mrf.mxu0
        %v2299 = vadd.f32 0.0, %v2298
        %v2300 = vpop.f32.mrf.mxu0
        %v2301 = vadd.f32 0.0, %v2300
        %v2302 = vpop.f32.mrf.mxu0
        %v2303 = vadd.f32 0.0, %v2302
        %v2304 = vpop.f32.mrf.mxu0
        %v2305 = vadd.f32 0.0, %v2304
        %2306 = vmatprep.mubr.bf16.mxu0 0
        %2307 = vmatmul.mubr.bf16.gmra.mxu0 %v2203
        %v2308 = vpop.f32.mrf.mxu0
        %v2309 = vadd.f32 0.0, %v2308
        %v2310 = vpop.f32.mrf.mxu0
        %v2311 = vadd.f32 0.0, %v2310
        %v2312 = vpop.f32.mrf.mxu0
        %v2313 = vadd.f32 0.0, %v2312
        %v2314 = vpop.f32.mrf.mxu0
        %v2315 = vadd.f32 0.0, %v2314
        %2316 = vmatprep.mubr.bf16.mxu0 0
        %2317 = vmatmul.mubr.bf16.gmra.mxu0 %v2206
        %v2318 = vpop.f32.mrf.mxu0
        %v2319 = vadd.f32 0.0, %v2318
        %v2320 = vpop.f32.mrf.mxu0
        %v2321 = vadd.f32 0.0, %v2320
        %v2322 = vpop.f32.mrf.mxu0
        %v2323 = vadd.f32 0.0, %v2322
        %v2324 = vpop.f32.mrf.mxu0
        %v2325 = vadd.f32 0.0, %v2324
        %2326 = vdwg.mxu0
        %v2327 = vadd.f32 %v2078, %v2249
        %v2328 = vadd.f32 %v2079, %v2251
        %v2329 = vadd.f32 %v2080, %v2253
        %v2330 = vadd.f32 %v2081, %v2255
        %v2331 = vadd.f32 %v2082, %v2259
        %v2332 = vadd.f32 %v2083, %v2261
        %v2333 = vadd.f32 %v2084, %v2263
        %v2334 = vadd.f32 %v2085, %v2265
        %v2335 = vadd.f32 %v2086, %v2269
        %v2336 = vadd.f32 %v2087, %v2271
        %v2337 = vadd.f32 %v2088, %v2273
        %v2338 = vadd.f32 %v2089, %v2275
        %v2339 = vadd.f32 %v2090, %v2279
        %v2340 = vadd.f32 %v2091, %v2281
        %v2341 = vadd.f32 %v2092, %v2283
        %v2342 = vadd.f32 %v2093, %v2285
        %v2343 = vadd.f32 %v2094, %v2289
        %v2344 = vadd.f32 %v2095, %v2291
        %v2345 = vadd.f32 %v2096, %v2293
        %v2346 = vadd.f32 %v2097, %v2295
        %v2347 = vadd.f32 %v2098, %v2299
        %v2348 = vadd.f32 %v2099, %v2301
        %v2349 = vadd.f32 %v2100, %v2303
        %v2350 = vadd.f32 %v2101, %v2305
        %v2351 = vadd.f32 %v2102, %v2309
        %v2352 = vadd.f32 %v2103, %v2311
        %v2353 = vadd.f32 %v2104, %v2313
        %v2354 = vadd.f32 %v2105, %v2315
        %v2355 = vadd.f32 %v2106, %v2319
        %v2356 = vadd.f32 %v2107, %v2321
        %v2357 = vadd.f32 %v2108, %v2323
        %v2358 = vadd.f32 %v2109, %v2325
        %2359 = vrot.lane.b32.xlu0 %v841, 17
        %v2360 = vpop.permute.xlu0 %2359
        %v2361 = vrot.slane %v2360, 4
        %v2362 = vsel %vm677, %v2361, %v2360
        %v2365 = vmul.bf16 %v1596, %v2362
        %v2366 = vmul.bf16 %v1597, %v2361
        %s2367 = scalar_lea.vmem %s3, 512
        %v2368 = vld [vmem:[%s2367] sm:$0xf]
        %v2369 = vld [vmem:[%s2367 + $0x4] sm:$0xf]
        %v2370 = vld [vmem:[%s2367 + $0x8] sm:$0xf]
        %v2371 = vld [vmem:[%s2367 + $0xc] sm:$0xf]
        %v2372 = vld [vmem:[%s2367 + $0x10] sm:$0xf]
        %v2373 = vld [vmem:[%s2367 + $0x14] sm:$0xf]
        %v2374 = vld [vmem:[%s2367 + $0x18] sm:$0xf]
        %v2375 = vld [vmem:[%s2367 + $0x1c] sm:$0xf]
        %v2376 = vld [vmem:[%s2367 + $0x20] sm:$0xf]
        %v2377 = vld [vmem:[%s2367 + $0x24] sm:$0xf]
        %v2378 = vld [vmem:[%s2367 + $0x28] sm:$0xf]
        %v2379 = vld [vmem:[%s2367 + $0x2c] sm:$0xf]
        %v2380 = vld [vmem:[%s2367 + $0x30] sm:$0xf]
        %v2381 = vld [vmem:[%s2367 + $0x34] sm:$0xf]
        %v2382 = vld [vmem:[%s2367 + $0x38] sm:$0xf]
        %v2383 = vld [vmem:[%s2367 + $0x3c] sm:$0xf]
        %v2400 = vunpack.c.l.b16 %v2368
        %v2401 = vunpack.c.l.b16 %v2369
        %v2402 = vunpack.c.l.b16 %v2370
        %v2403 = vunpack.c.l.b16 %v2371
        %v2404 = vunpack.c.l.b16 %v2372
        %v2405 = vunpack.c.l.b16 %v2373
        %v2406 = vunpack.c.l.b16 %v2374
        %v2407 = vunpack.c.l.b16 %v2375
        %v2408 = vunpack.c.l.b16 %v2376
        %v2409 = vunpack.c.l.b16 %v2377
        %v2410 = vunpack.c.l.b16 %v2378
        %v2411 = vunpack.c.l.b16 %v2379
        %v2412 = vunpack.c.l.b16 %v2380
        %v2413 = vunpack.c.l.b16 %v2381
        %v2414 = vunpack.c.l.b16 %v2382
        %v2415 = vunpack.c.l.b16 %v2383
        %v2416 = vpack.c.b16 %v2401, %v2400
        %v2417 = vpack.c.b16 %v2403, %v2402
        %v2418 = vpack.c.b16 %v2405, %v2404
        %v2419 = vpack.c.b16 %v2407, %v2406
        %v2420 = vpack.c.b16 %v2409, %v2408
        %v2421 = vpack.c.b16 %v2411, %v2410
        %v2422 = vpack.c.b16 %v2413, %v2412
        %v2423 = vpack.c.b16 %v2415, %v2414
        %v2426 = vunpack.c.l.b16 %v2365
        %v2427 = vunpack.c.h.b16 %v2365
        %v2428 = vunpack.c.l.b16 %v2366
        %v2429 = vpack.c.b16 %v2426, %v2426
        %v2430 = vpack.c.b16 %v2427, %v2427
        %v2431 = vpack.c.b16 %v2428, %v2428
        %2432 = vrot.lane.b32.xlu0 %v2429, 111
        %v2433 = vpop.permute.xlu0 %2432
        %2434 = vrot.lane.b32.xlu0 %v2430, 111
        %v2435 = vpop.permute.xlu0 %2434
        %2436 = vrot.lane.b32.xlu0 %v2431, 111
        %v2437 = vpop.permute.xlu0 %2436
        %v2438 = vsel %vm383, %v2433, %v2435
        %v2439 = vsel %vm383, %v2435, %v2437
        %v2441 = vsel %vm479, %v2416, 0
        %v2444 = vsel %vm479, %v2417, 0
        %v2447 = vsel %vm479, %v2418, 0
        %v2450 = vsel %vm479, %v2419, 0
        %v2453 = vsel %vm479, %v2420, 0
        %v2456 = vsel %vm479, %v2421, 0
        %v2459 = vsel %vm479, %v2422, 0
        %v2462 = vsel %vm479, %v2423, 0
        %v2465 = vsel %vm302, %v2438, 0
        %v2468 = vsel %vm302, %v2439, 0
        %2470 = vmatprep.subr.bf16.mxu0 0
        %2471 = vmatpush1.bf16.msra.mxu0 0
        %2472 = vmatprep.subr.bf16.mxu0 0
        %2473 = vmatpush1.bf16.msra.mxu0 0
        %2474 = vmatprep.subr.bf16.mxu0 0
        %2475 = vmatpush1.bf16.msra.mxu0 0
        %2476 = vmatprep.subr.bf16.mxu0 0
        %2477 = vmatpush1.bf16.msra.mxu0 0
        %2478 = vmatprep.subr.bf16.mxu0 0
        %2479 = vmatpush1.bf16.msra.mxu0 0
        %2480 = vmatprep.subr.bf16.mxu0 0
        %2481 = vmatpush1.bf16.msra.mxu0 0
        %2482 = vmatprep.subr.bf16.mxu0 0
        %2483 = vmatpush1.bf16.msra.mxu0 0
        %2484 = vmatprep.subr.bf16.mxu0 %v2468
        %2485 = vmatpush1.bf16.msra.mxu0 %v2465
        %2486 = vmatprep.subr.bf16.mxu0 0
        %2487 = vmatpush2.bf16.msra.mxu0 0
        %2488 = vmatprep.subr.bf16.mxu0 0
        %2489 = vmatpush2.bf16.msra.mxu0 0
        %2490 = vmatprep.subr.bf16.mxu0 0
        %2491 = vmatpush2.bf16.msra.mxu0 0
        %2492 = vmatprep.subr.bf16.mxu0 0
        %2493 = vmatpush2.bf16.msra.mxu0 0
        %2494 = vmatprep.subr.bf16.mxu0 0
        %2495 = vmatpush2.bf16.msra.mxu0 0
        %2496 = vmatprep.subr.bf16.mxu0 0
        %2497 = vmatpush2.bf16.msra.mxu0 0
        %2498 = vmatprep.subr.bf16.mxu0 0
        %2499 = vmatpush2.bf16.msra.mxu0 0
        %2500 = vmatprep.subr.bf16.mxu0 0
        %2501 = vmatpush2.bf16.msra.mxu0 0
        %2502 = vmatprep.mubr.bf16.mxu0 0
        %2503 = vmatmul.mubr.bf16.gmra.mxu0 %v2441
        %v2504 = vpop.f32.mrf.mxu0
        %v2505 = vadd.f32 0.0, %v2504
        %v2506 = vpop.f32.mrf.mxu0
        %v2507 = vadd.f32 0.0, %v2506
        %v2508 = vpop.f32.mrf.mxu0
        %v2509 = vadd.f32 0.0, %v2508
        %v2510 = vpop.f32.mrf.mxu0
        %v2511 = vadd.f32 0.0, %v2510
        %2512 = vmatprep.mubr.bf16.mxu0 0
        %2513 = vmatmul.mubr.bf16.gmra.mxu0 %v2444
        %v2514 = vpop.f32.mrf.mxu0
        %v2515 = vadd.f32 0.0, %v2514
        %v2516 = vpop.f32.mrf.mxu0
        %v2517 = vadd.f32 0.0, %v2516
        %v2518 = vpop.f32.mrf.mxu0
        %v2519 = vadd.f32 0.0, %v2518
        %v2520 = vpop.f32.mrf.mxu0
        %v2521 = vadd.f32 0.0, %v2520
        %2522 = vmatprep.mubr.bf16.mxu0 0
        %2523 = vmatmul.mubr.bf16.gmra.mxu0 %v2447
        %v2524 = vpop.f32.mrf.mxu0
        %v2525 = vadd.f32 0.0, %v2524
        %v2526 = vpop.f32.mrf.mxu0
        %v2527 = vadd.f32 0.0, %v2526
        %v2528 = vpop.f32.mrf.mxu0
        %v2529 = vadd.f32 0.0, %v2528
        %v2530 = vpop.f32.mrf.mxu0
        %v2531 = vadd.f32 0.0, %v2530
        %2532 = vmatprep.mubr.bf16.mxu0 0
        %2533 = vmatmul.mubr.bf16.gmra.mxu0 %v2450
        %v2534 = vpop.f32.mrf.mxu0
        %v2535 = vadd.f32 0.0, %v2534
        %v2536 = vpop.f32.mrf.mxu0
        %v2537 = vadd.f32 0.0, %v2536
        %v2538 = vpop.f32.mrf.mxu0
        %v2539 = vadd.f32 0.0, %v2538
        %v2540 = vpop.f32.mrf.mxu0
        %v2541 = vadd.f32 0.0, %v2540
        %2542 = vmatprep.mubr.bf16.mxu0 0
        %2543 = vmatmul.mubr.bf16.gmra.mxu0 %v2453
        %v2544 = vpop.f32.mrf.mxu0
        %v2545 = vadd.f32 0.0, %v2544
        %v2546 = vpop.f32.mrf.mxu0
        %v2547 = vadd.f32 0.0, %v2546
        %v2548 = vpop.f32.mrf.mxu0
        %v2549 = vadd.f32 0.0, %v2548
        %v2550 = vpop.f32.mrf.mxu0
        %v2551 = vadd.f32 0.0, %v2550
        %2552 = vmatprep.mubr.bf16.mxu0 0
        %2553 = vmatmul.mubr.bf16.gmra.mxu0 %v2456
        %v2554 = vpop.f32.mrf.mxu0
        %v2555 = vadd.f32 0.0, %v2554
        %v2556 = vpop.f32.mrf.mxu0
        %v2557 = vadd.f32 0.0, %v2556
        %v2558 = vpop.f32.mrf.mxu0
        %v2559 = vadd.f32 0.0, %v2558
        %v2560 = vpop.f32.mrf.mxu0
        %v2561 = vadd.f32 0.0, %v2560
        %2562 = vmatprep.mubr.bf16.mxu0 0
        %2563 = vmatmul.mubr.bf16.gmra.mxu0 %v2459
        %v2564 = vpop.f32.mrf.mxu0
        %v2565 = vadd.f32 0.0, %v2564
        %v2566 = vpop.f32.mrf.mxu0
        %v2567 = vadd.f32 0.0, %v2566
        %v2568 = vpop.f32.mrf.mxu0
        %v2569 = vadd.f32 0.0, %v2568
        %v2570 = vpop.f32.mrf.mxu0
        %v2571 = vadd.f32 0.0, %v2570
        %2572 = vmatprep.mubr.bf16.mxu0 0
        %2573 = vmatmul.mubr.bf16.gmra.mxu0 %v2462
        %v2574 = vpop.f32.mrf.mxu0
        %v2575 = vadd.f32 0.0, %v2574
        %v2576 = vpop.f32.mrf.mxu0
        %v2577 = vadd.f32 0.0, %v2576
        %v2578 = vpop.f32.mrf.mxu0
        %v2579 = vadd.f32 0.0, %v2578
        %v2580 = vpop.f32.mrf.mxu0
        %v2581 = vadd.f32 0.0, %v2580
        %2582 = vdwg.mxu0
        %v2583 = vadd.f32 %v2327, %v2505
        %v2584 = vadd.f32 %v2328, %v2507
        %v2585 = vadd.f32 %v2329, %v2509
        %v2586 = vadd.f32 %v2330, %v2511
        %v2587 = vadd.f32 %v2331, %v2515
        %v2588 = vadd.f32 %v2332, %v2517
        %v2589 = vadd.f32 %v2333, %v2519
        %v2590 = vadd.f32 %v2334, %v2521
        %v2591 = vadd.f32 %v2335, %v2525
        %v2592 = vadd.f32 %v2336, %v2527
        %v2593 = vadd.f32 %v2337, %v2529
        %v2594 = vadd.f32 %v2338, %v2531
        %v2595 = vadd.f32 %v2339, %v2535
        %v2596 = vadd.f32 %v2340, %v2537
        %v2597 = vadd.f32 %v2341, %v2539
        %v2598 = vadd.f32 %v2342, %v2541
        %v2599 = vadd.f32 %v2343, %v2545
        %v2600 = vadd.f32 %v2344, %v2547
        %v2601 = vadd.f32 %v2345, %v2549
        %v2602 = vadd.f32 %v2346, %v2551
        %v2603 = vadd.f32 %v2347, %v2555
        %v2604 = vadd.f32 %v2348, %v2557
        %v2605 = vadd.f32 %v2349, %v2559
        %v2606 = vadd.f32 %v2350, %v2561
        %v2607 = vadd.f32 %v2351, %v2565
        %v2608 = vadd.f32 %v2352, %v2567
        %v2609 = vadd.f32 %v2353, %v2569
        %v2610 = vadd.f32 %v2354, %v2571
        %v2611 = vadd.f32 %v2355, %v2575
        %v2612 = vadd.f32 %v2356, %v2577
        %v2613 = vadd.f32 %v2357, %v2579
        %v2614 = vadd.f32 %v2358, %v2581
        %v2615 = vld [vmem:[%s4] sm:$0xff]
        %v2616 = vld [vmem:[%s4 + $0x8] sm:$0xff]
        %v2617 = vld [vmem:[%s4 + $0x10] sm:$0xff]
        %v2618 = vld [vmem:[%s4 + $0x18] sm:$0xff]
        %v2619 = vld [vmem:[%s4 + $0x20] sm:$0xff]
        %v2620 = vld [vmem:[%s4 + $0x28] sm:$0xff]
        %v2621 = vld [vmem:[%s4 + $0x30] sm:$0xff]
        %v2622 = vld [vmem:[%s4 + $0x38] sm:$0xff]
        %v2623 = vld [vmem:[%s4 + $0x40] sm:$0xff]
        %v2624 = vld [vmem:[%s4 + $0x48] sm:$0xff]
        %v2625 = vld [vmem:[%s4 + $0x50] sm:$0xff]
        %v2626 = vld [vmem:[%s4 + $0x58] sm:$0xff]
        %v2627 = vld [vmem:[%s4 + $0x60] sm:$0xff]
        %v2628 = vld [vmem:[%s4 + $0x68] sm:$0xff]
        %v2629 = vld [vmem:[%s4 + $0x70] sm:$0xff]
        %v2630 = vld [vmem:[%s4 + $0x78] sm:$0xff]
        %2632 = vset.pattern.permute.xlu0 0
        %2633 = vperm.xlu0 %2632, %v2615
        %v2634 = vpop.permute.xlu0 %2633
        %2637 = vset.pattern.permute.xlu0 0
        %2638 = vperm.xlu0 %2637, %v2616
        %v2639 = vpop.permute.xlu0 %2638
        %2642 = vset.pattern.permute.xlu0 0
        %2643 = vperm.xlu0 %2642, %v2617
        %v2644 = vpop.permute.xlu0 %2643
        %2647 = vset.pattern.permute.xlu0 0
        %2648 = vperm.xlu0 %2647, %v2618
        %v2649 = vpop.permute.xlu0 %2648
        %2652 = vset.pattern.permute.xlu0 0
        %2653 = vperm.xlu0 %2652, %v2619
        %v2654 = vpop.permute.xlu0 %2653
        %2657 = vset.pattern.permute.xlu0 0
        %2658 = vperm.xlu0 %2657, %v2620
        %v2659 = vpop.permute.xlu0 %2658
        %2662 = vset.pattern.permute.xlu0 0
        %2663 = vperm.xlu0 %2662, %v2621
        %v2664 = vpop.permute.xlu0 %2663
        %2667 = vset.pattern.permute.xlu0 0
        %2668 = vperm.xlu0 %2667, %v2622
        %v2669 = vpop.permute.xlu0 %2668
        %2672 = vset.pattern.permute.xlu0 0
        %2673 = vperm.xlu0 %2672, %v2623
        %v2674 = vpop.permute.xlu0 %2673
        %2677 = vset.pattern.permute.xlu0 0
        %2678 = vperm.xlu0 %2677, %v2624
        %v2679 = vpop.permute.xlu0 %2678
        %2682 = vset.pattern.permute.xlu0 0
        %2683 = vperm.xlu0 %2682, %v2625
        %v2684 = vpop.permute.xlu0 %2683
        %2687 = vset.pattern.permute.xlu0 0
        %2688 = vperm.xlu0 %2687, %v2626
        %v2689 = vpop.permute.xlu0 %2688
        %2692 = vset.pattern.permute.xlu0 0
        %2693 = vperm.xlu0 %2692, %v2627
        %v2694 = vpop.permute.xlu0 %2693
        %2697 = vset.pattern.permute.xlu0 0
        %2698 = vperm.xlu0 %2697, %v2628
        %v2699 = vpop.permute.xlu0 %2698
        %2702 = vset.pattern.permute.xlu0 0
        %2703 = vperm.xlu0 %2702, %v2629
        %v2704 = vpop.permute.xlu0 %2703
        %2707 = vset.pattern.permute.xlu0 0
        %2708 = vperm.xlu0 %2707, %v2630
        %v2709 = vpop.permute.xlu0 %2708
        %v2711 = vadd.f32 %v2583, %v2634
        %v2712 = vadd.f32 %v2584, %v2634
        %v2713 = vadd.f32 %v2585, %v2639
        %v2714 = vadd.f32 %v2586, %v2639
        %v2715 = vadd.f32 %v2587, %v2644
        %v2716 = vadd.f32 %v2588, %v2644
        %v2717 = vadd.f32 %v2589, %v2649
        %v2718 = vadd.f32 %v2590, %v2649
        %v2719 = vadd.f32 %v2591, %v2654
        %v2720 = vadd.f32 %v2592, %v2654
        %v2721 = vadd.f32 %v2593, %v2659
        %v2722 = vadd.f32 %v2594, %v2659
        %v2723 = vadd.f32 %v2595, %v2664
        %v2724 = vadd.f32 %v2596, %v2664
        %v2725 = vadd.f32 %v2597, %v2669
        %v2726 = vadd.f32 %v2598, %v2669
        %v2727 = vadd.f32 %v2599, %v2674
        %v2728 = vadd.f32 %v2600, %v2674
        %v2729 = vadd.f32 %v2601, %v2679
        %v2730 = vadd.f32 %v2602, %v2679
        %v2731 = vadd.f32 %v2603, %v2684
        %v2732 = vadd.f32 %v2604, %v2684
        %v2733 = vadd.f32 %v2605, %v2689
        %v2734 = vadd.f32 %v2606, %v2689
        %v2735 = vadd.f32 %v2607, %v2694
        %v2736 = vadd.f32 %v2608, %v2694
        %v2737 = vadd.f32 %v2609, %v2699
        %v2738 = vadd.f32 %v2610, %v2699
        %v2739 = vadd.f32 %v2611, %v2704
        %v2740 = vadd.f32 %v2612, %v2704
        %v2741 = vadd.f32 %v2613, %v2709
        %v2742 = vadd.f32 %v2614, %v2709
        %v2743 = vmax.f32 %v2711, 0.0
        %v2744 = vmax.f32 %v2712, 0.0
        %v2745 = vmax.f32 %v2713, 0.0
        %v2746 = vmax.f32 %v2714, 0.0
        %v2747 = vmax.f32 %v2715, 0.0
        %v2748 = vmax.f32 %v2716, 0.0
        %v2749 = vmax.f32 %v2717, 0.0
        %v2750 = vmax.f32 %v2718, 0.0
        %v2751 = vmax.f32 %v2719, 0.0
        %v2752 = vmax.f32 %v2720, 0.0
        %v2753 = vmax.f32 %v2721, 0.0
        %v2754 = vmax.f32 %v2722, 0.0
        %v2755 = vmax.f32 %v2723, 0.0
        %v2756 = vmax.f32 %v2724, 0.0
        %v2757 = vmax.f32 %v2725, 0.0
        %v2758 = vmax.f32 %v2726, 0.0
        %v2759 = vmax.f32 %v2727, 0.0
        %v2760 = vmax.f32 %v2728, 0.0
        %v2761 = vmax.f32 %v2729, 0.0
        %v2762 = vmax.f32 %v2730, 0.0
        %v2763 = vmax.f32 %v2731, 0.0
        %v2764 = vmax.f32 %v2732, 0.0
        %v2765 = vmax.f32 %v2733, 0.0
        %v2766 = vmax.f32 %v2734, 0.0
        %v2767 = vmax.f32 %v2735, 0.0
        %v2768 = vmax.f32 %v2736, 0.0
        %v2769 = vmax.f32 %v2737, 0.0
        %v2770 = vmax.f32 %v2738, 0.0
        %v2771 = vmax.f32 %v2739, 0.0
        %v2772 = vmax.f32 %v2740, 0.0
        %v2773 = vmax.f32 %v2741, 0.0
        %v2774 = vmax.f32 %v2742, 0.0
        %v2775 = vpack.c.bf16 %v2745, %v2743
        %v2776 = vpack.c.bf16 %v2746, %v2744
        %v2777 = vpack.c.bf16 %v2749, %v2747
        %v2778 = vpack.c.bf16 %v2750, %v2748
        %v2779 = vpack.c.bf16 %v2753, %v2751
        %v2780 = vpack.c.bf16 %v2754, %v2752
        %v2781 = vpack.c.bf16 %v2757, %v2755
        %v2782 = vpack.c.bf16 %v2758, %v2756
        %v2783 = vpack.c.bf16 %v2761, %v2759
        %v2784 = vpack.c.bf16 %v2762, %v2760
        %v2785 = vpack.c.bf16 %v2765, %v2763
        %v2786 = vpack.c.bf16 %v2766, %v2764
        %v2787 = vpack.c.bf16 %v2769, %v2767
        %v2788 = vpack.c.bf16 %v2770, %v2768
        %v2789 = vpack.c.bf16 %v2773, %v2771
        %v2790 = vpack.c.bf16 %v2774, %v2772
        %2791 = vst [vmem:[#allocation3] sm:$0xf] 0
        %2792 = vst [vmem:[#allocation3 + $0x10] sm:$0xf] 0
        %2793 = vst [vmem:[#allocation3 + $0x20] sm:$0xf] 0
        %2794 = vst [vmem:[#allocation3 + $0x30] sm:$0xf] 0
        %2795 = vst [vmem:[#allocation3 + $0x40] sm:$0xf] 0
        %2796 = vst [vmem:[#allocation3 + $0x50] sm:$0xf] 0
        %2797 = vst [vmem:[#allocation3 + $0x60] sm:$0xf] 0
        %2798 = vst [vmem:[#allocation3 + $0x70] sm:$0xf] 0
        %2799 = vst [vmem:[#allocation3 + $0x80] sm:$0xf] 0
        %2800 = vst [vmem:[#allocation3 + $0x90] sm:$0xf] 0
        %2801 = vst [vmem:[#allocation3 + $0xa0] sm:$0xf] 0
        %2802 = vst [vmem:[#allocation3 + $0xb0] sm:$0xf] 0
        %2803 = vst [vmem:[#allocation3 + $0xc0] sm:$0xf] 0
        %2804 = vst [vmem:[#allocation3 + $0xd0] sm:$0xf] 0
        %2805 = vst [vmem:[#allocation3 + $0xe0] sm:$0xf] 0
        %2806 = vst [vmem:[#allocation3 + $0xf0] sm:$0xf] 0
        %2807 = vst [vmem:[#allocation3 + $0xc] sm:$0xf] 0
        %2808 = vst [vmem:[#allocation3 + $0x1c] sm:$0xf] 0
        %2809 = vst [vmem:[#allocation3 + $0x2c] sm:$0xf] 0
        %2810 = vst [vmem:[#allocation3 + $0x3c] sm:$0xf] 0
        %2811 = vst [vmem:[#allocation3 + $0x4c] sm:$0xf] 0
        %2812 = vst [vmem:[#allocation3 + $0x5c] sm:$0xf] 0
        %2813 = vst [vmem:[#allocation3 + $0x6c] sm:$0xf] 0
        %2814 = vst [vmem:[#allocation3 + $0x7c] sm:$0xf] 0
        %2815 = vst [vmem:[#allocation3 + $0x8c] sm:$0xf] 0
        %2816 = vst [vmem:[#allocation3 + $0x9c] sm:$0xf] 0
        %2817 = vst [vmem:[#allocation3 + $0xac] sm:$0xf] 0
        %2818 = vst [vmem:[#allocation3 + $0xbc] sm:$0xf] 0
        %2819 = vst [vmem:[#allocation3 + $0xcc] sm:$0xf] 0
        %2820 = vst [vmem:[#allocation3 + $0xdc] sm:$0xf] 0
        %2821 = vst [vmem:[#allocation3 + $0xec] sm:$0xf] 0
        %2822 = vst [vmem:[#allocation3 + $0xfc] sm:$0xf] 0
        %v2839 = vunpack.c.l.b16 %v2775
        %v2840 = vunpack.c.l.b16 %v2776
        %v2841 = vunpack.c.h.b16 %v2775
        %v2842 = vunpack.c.h.b16 %v2776
        %v2843 = vunpack.c.l.b16 %v2777
        %v2844 = vunpack.c.l.b16 %v2778
        %v2845 = vunpack.c.h.b16 %v2777
        %v2846 = vunpack.c.h.b16 %v2778
        %v2847 = vunpack.c.l.b16 %v2779
        %v2848 = vunpack.c.l.b16 %v2780
        %v2849 = vunpack.c.h.b16 %v2779
        %v2850 = vunpack.c.h.b16 %v2780
        %v2851 = vunpack.c.l.b16 %v2781
        %v2852 = vunpack.c.l.b16 %v2782
        %v2853 = vunpack.c.h.b16 %v2781
        %v2854 = vunpack.c.h.b16 %v2782
        %v2855 = vunpack.c.l.b16 %v2783
        %v2856 = vunpack.c.l.b16 %v2784
        %v2857 = vunpack.c.h.b16 %v2783
        %v2858 = vunpack.c.h.b16 %v2784
        %v2859 = vunpack.c.l.b16 %v2785
        %v2860 = vunpack.c.l.b16 %v2786
        %v2861 = vunpack.c.h.b16 %v2785
        %v2862 = vunpack.c.h.b16 %v2786
        %v2863 = vunpack.c.l.b16 %v2787
        %v2864 = vunpack.c.l.b16 %v2788
        %v2865 = vunpack.c.h.b16 %v2787
        %v2866 = vunpack.c.h.b16 %v2788
        %v2867 = vunpack.c.l.b16 %v2789
        %v2868 = vunpack.c.l.b16 %v2790
        %v2869 = vunpack.c.h.b16 %v2789
        %v2870 = vunpack.c.h.b16 %v2790
        %v2871 = vpack.c.b16 %v2840, %v2839
        %v2872 = vpack.c.b16 %v2842, %v2841
        %v2873 = vpack.c.b16 %v2844, %v2843
        %v2874 = vpack.c.b16 %v2846, %v2845
        %v2875 = vpack.c.b16 %v2848, %v2847
        %v2876 = vpack.c.b16 %v2850, %v2849
        %v2877 = vpack.c.b16 %v2852, %v2851
        %v2878 = vpack.c.b16 %v2854, %v2853
        %v2879 = vpack.c.b16 %v2856, %v2855
        %v2880 = vpack.c.b16 %v2858, %v2857
        %v2881 = vpack.c.b16 %v2860, %v2859
        %v2882 = vpack.c.b16 %v2862, %v2861
        %v2883 = vpack.c.b16 %v2864, %v2863
        %v2884 = vpack.c.b16 %v2866, %v2865
        %v2885 = vpack.c.b16 %v2868, %v2867
        %v2886 = vpack.c.b16 %v2870, %v2869
        %2903 = vst [vmem:[#allocation3 + $0x4] sm:$0xff] %v2871
        %2904 = vst [vmem:[#allocation3 + $0x14] sm:$0xff] %v2872
        %2905 = vst [vmem:[#allocation3 + $0x24] sm:$0xff] %v2873
        %2906 = vst [vmem:[#allocation3 + $0x34] sm:$0xff] %v2874
        %2907 = vst [vmem:[#allocation3 + $0x44] sm:$0xff] %v2875
        %2908 = vst [vmem:[#allocation3 + $0x54] sm:$0xff] %v2876
        %2909 = vst [vmem:[#allocation3 + $0x64] sm:$0xff] %v2877
        %2910 = vst [vmem:[#allocation3 + $0x74] sm:$0xff] %v2878
        %2911 = vst [vmem:[#allocation3 + $0x84] sm:$0xff] %v2879
        %2912 = vst [vmem:[#allocation3 + $0x94] sm:$0xff] %v2880
        %2913 = vst [vmem:[#allocation3 + $0xa4] sm:$0xff] %v2881
        %2914 = vst [vmem:[#allocation3 + $0xb4] sm:$0xff] %v2882
        %2915 = vst [vmem:[#allocation3 + $0xc4] sm:$0xff] %v2883
        %2916 = vst [vmem:[#allocation3 + $0xd4] sm:$0xff] %v2884
        %2917 = vst [vmem:[#allocation3 + $0xe4] sm:$0xff] %v2885
        %2918 = vst [vmem:[#allocation3 + $0xf4] sm:$0xff] %v2886
        %v2919 = vld [vmem:[#allocation3] sm:$0xff]
        %v2920 = vld [vmem:[#allocation3 + $0x8] sm:$0xf]
        %v2921 = vld [vmem:[#allocation3 + $0x10] sm:$0xff]
        %v2922 = vld [vmem:[#allocation3 + $0x18] sm:$0xf]
        %v2923 = vld [vmem:[#allocation3 + $0x20] sm:$0xff]
        %v2924 = vld [vmem:[#allocation3 + $0x28] sm:$0xf]
        %v2925 = vld [vmem:[#allocation3 + $0x30] sm:$0xff]
        %v2926 = vld [vmem:[#allocation3 + $0x38] sm:$0xf]
        %v2927 = vld [vmem:[#allocation3 + $0x40] sm:$0xff]
        %v2928 = vld [vmem:[#allocation3 + $0x48] sm:$0xf]
        %v2929 = vld [vmem:[#allocation3 + $0x50] sm:$0xff]
        %v2930 = vld [vmem:[#allocation3 + $0x58] sm:$0xf]
        %v2931 = vld [vmem:[#allocation3 + $0x60] sm:$0xff]
        %v2932 = vld [vmem:[#allocation3 + $0x68] sm:$0xf]
        %v2933 = vld [vmem:[#allocation3 + $0x70] sm:$0xff]
        %v2934 = vld [vmem:[#allocation3 + $0x78] sm:$0xf]
        %v2935 = vld [vmem:[#allocation3 + $0x80] sm:$0xff]
        %v2936 = vld [vmem:[#allocation3 + $0x88] sm:$0xf]
        %v2937 = vld [vmem:[#allocation3 + $0x90] sm:$0xff]
        %v2938 = vld [vmem:[#allocation3 + $0x98] sm:$0xf]
        %v2939 = vld [vmem:[#allocation3 + $0xa0] sm:$0xff]
        %v2940 = vld [vmem:[#allocation3 + $0xa8] sm:$0xf]
        %v2941 = vld [vmem:[#allocation3 + $0xb0] sm:$0xff]
        %v2942 = vld [vmem:[#allocation3 + $0xb8] sm:$0xf]
        %v2943 = vld [vmem:[#allocation3 + $0xc0] sm:$0xff]
        %v2944 = vld [vmem:[#allocation3 + $0xc8] sm:$0xf]
        %v2945 = vld [vmem:[#allocation3 + $0xd0] sm:$0xff]
        %v2946 = vld [vmem:[#allocation3 + $0xd8] sm:$0xf]
        %v2947 = vld [vmem:[#allocation3 + $0xe0] sm:$0xff]
        %v2948 = vld [vmem:[#allocation3 + $0xe8] sm:$0xf]
        %v2949 = vld [vmem:[#allocation3 + $0xf0] sm:$0xff]
        %v2950 = vld [vmem:[#allocation3 + $0xf8] sm:$0xf]
        %v2951 = vld [vmem:[%s5] sm:$0xf]
        %v2984 = vunpack.c.l.b16 %v2919
        %v2985 = vunpack.c.h.b16 %v2919
        %v2986 = vunpack.c.l.b16 %v2920
        %v2987 = vunpack.c.l.b16 %v2921
        %v2988 = vunpack.c.h.b16 %v2921
        %v2989 = vunpack.c.l.b16 %v2922
        %v2990 = vunpack.c.l.b16 %v2923
        %v2991 = vunpack.c.h.b16 %v2923
        %v2992 = vunpack.c.l.b16 %v2924
        %v2993 = vunpack.c.l.b16 %v2925
        %v2994 = vunpack.c.h.b16 %v2925
        %v2995 = vunpack.c.l.b16 %v2926
        %v2996 = vunpack.c.l.b16 %v2927
        %v2997 = vunpack.c.h.b16 %v2927
        %v2998 = vunpack.c.l.b16 %v2928
        %v2999 = vunpack.c.l.b16 %v2929
        %v3000 = vunpack.c.h.b16 %v2929
        %v3001 = vunpack.c.l.b16 %v2930
        %v3002 = vunpack.c.l.b16 %v2931
        %v3003 = vunpack.c.h.b16 %v2931
        %v3004 = vunpack.c.l.b16 %v2932
        %v3005 = vunpack.c.l.b16 %v2933
        %v3006 = vunpack.c.h.b16 %v2933
        %v3007 = vunpack.c.l.b16 %v2934
        %v3008 = vunpack.c.l.b16 %v2935
        %v3009 = vunpack.c.h.b16 %v2935
        %v3010 = vunpack.c.l.b16 %v2936
        %v3011 = vunpack.c.l.b16 %v2937
        %v3012 = vunpack.c.h.b16 %v2937
        %v3013 = vunpack.c.l.b16 %v2938
        %v3014 = vunpack.c.l.b16 %v2939
        %v3015 = vunpack.c.h.b16 %v2939
        %v3016 = vunpack.c.l.b16 %v2940
        %v3017 = vunpack.c.l.b16 %v2941
        %v3018 = vunpack.c.h.b16 %v2941
        %v3019 = vunpack.c.l.b16 %v2942
        %v3020 = vunpack.c.l.b16 %v2943
        %v3021 = vunpack.c.h.b16 %v2943
        %v3022 = vunpack.c.l.b16 %v2944
        %v3023 = vunpack.c.l.b16 %v2945
        %v3024 = vunpack.c.h.b16 %v2945
        %v3025 = vunpack.c.l.b16 %v2946
        %v3026 = vunpack.c.l.b16 %v2947
        %v3027 = vunpack.c.h.b16 %v2947
        %v3028 = vunpack.c.l.b16 %v2948
        %v3029 = vunpack.c.l.b16 %v2949
        %v3030 = vunpack.c.h.b16 %v2949
        %v3031 = vunpack.c.l.b16 %v2950
        %v3032 = vpack.c.b16 %v2987, %v2984
        %v3033 = vpack.c.b16 %v2988, %v2985
        %v3034 = vpack.c.b16 %v2989, %v2986
        %v3035 = vpack.c.b16 %v2993, %v2990
        %v3036 = vpack.c.b16 %v2994, %v2991
        %v3037 = vpack.c.b16 %v2995, %v2992
        %v3038 = vpack.c.b16 %v2999, %v2996
        %v3039 = vpack.c.b16 %v3000, %v2997
        %v3040 = vpack.c.b16 %v3001, %v2998
        %v3041 = vpack.c.b16 %v3005, %v3002
        %v3042 = vpack.c.b16 %v3006, %v3003
        %v3043 = vpack.c.b16 %v3007, %v3004
        %v3044 = vpack.c.b16 %v3011, %v3008
        %v3045 = vpack.c.b16 %v3012, %v3009
        %v3046 = vpack.c.b16 %v3013, %v3010
        %v3047 = vpack.c.b16 %v3017, %v3014
        %v3048 = vpack.c.b16 %v3018, %v3015
        %v3049 = vpack.c.b16 %v3019, %v3016
        %v3050 = vpack.c.b16 %v3023, %v3020
        %v3051 = vpack.c.b16 %v3024, %v3021
        %v3052 = vpack.c.b16 %v3025, %v3022
        %v3053 = vpack.c.b16 %v3029, %v3026
        %v3054 = vpack.c.b16 %v3030, %v3027
        %v3055 = vpack.c.b16 %v3031, %v3028
        %3056 = vrot.lane.b32.xlu0 %v3032, 17
        %v3057 = vpop.permute.xlu0 %3056
        %3058 = vrot.lane.b32.xlu0 %v3033, 17
        %v3059 = vpop.permute.xlu0 %3058
        %3060 = vrot.lane.b32.xlu0 %v3034, 17
        %v3061 = vpop.permute.xlu0 %3060
        %3062 = vrot.lane.b32.xlu0 %v3035, 17
        %v3063 = vpop.permute.xlu0 %3062
        %3064 = vrot.lane.b32.xlu0 %v3036, 17
        %v3065 = vpop.permute.xlu0 %3064
        %3066 = vrot.lane.b32.xlu0 %v3037, 17
        %v3067 = vpop.permute.xlu0 %3066
        %3068 = vrot.lane.b32.xlu0 %v3038, 17
        %v3069 = vpop.permute.xlu0 %3068
        %3070 = vrot.lane.b32.xlu0 %v3039, 17
        %v3071 = vpop.permute.xlu0 %3070
        %3072 = vrot.lane.b32.xlu0 %v3040, 17
        %v3073 = vpop.permute.xlu0 %3072
        %3074 = vrot.lane.b32.xlu0 %v3041, 17
        %v3075 = vpop.permute.xlu0 %3074
        %3076 = vrot.lane.b32.xlu0 %v3042, 17
        %v3077 = vpop.permute.xlu0 %3076
        %3078 = vrot.lane.b32.xlu0 %v3043, 17
        %v3079 = vpop.permute.xlu0 %3078
        %3080 = vrot.lane.b32.xlu0 %v3044, 17
        %v3081 = vpop.permute.xlu0 %3080
        %3082 = vrot.lane.b32.xlu0 %v3045, 17
        %v3083 = vpop.permute.xlu0 %3082
        %3084 = vrot.lane.b32.xlu0 %v3046, 17
        %v3085 = vpop.permute.xlu0 %3084
        %3086 = vrot.lane.b32.xlu0 %v3047, 17
        %v3087 = vpop.permute.xlu0 %3086
        %3088 = vrot.lane.b32.xlu0 %v3048, 17
        %v3089 = vpop.permute.xlu0 %3088
        %3090 = vrot.lane.b32.xlu0 %v3049, 17
        %v3091 = vpop.permute.xlu0 %3090
        %3092 = vrot.lane.b32.xlu0 %v3050, 17
        %v3093 = vpop.permute.xlu0 %3092
        %3094 = vrot.lane.b32.xlu0 %v3051, 17
        %v3095 = vpop.permute.xlu0 %3094
        %3096 = vrot.lane.b32.xlu0 %v3052, 17
        %v3097 = vpop.permute.xlu0 %3096
        %3098 = vrot.lane.b32.xlu0 %v3053, 17
        %v3099 = vpop.permute.xlu0 %3098
        %3100 = vrot.lane.b32.xlu0 %v3054, 17
        %v3101 = vpop.permute.xlu0 %3100
        %3102 = vrot.lane.b32.xlu0 %v3055, 17
        %v3103 = vpop.permute.xlu0 %3102
        %v3104 = vsel %vm677, %v3057, %v3059
        %v3105 = vsel %vm677, %v3059, %v3061
        %v3106 = vsel %vm677, %v3063, %v3065
        %v3107 = vsel %vm677, %v3065, %v3067
        %v3108 = vsel %vm677, %v3069, %v3071
        %v3109 = vsel %vm677, %v3071, %v3073
        %v3110 = vsel %vm677, %v3075, %v3077
        %v3111 = vsel %vm677, %v3077, %v3079
        %v3112 = vsel %vm677, %v3081, %v3083
        %v3113 = vsel %vm677, %v3083, %v3085
        %v3114 = vsel %vm677, %v3087, %v3089
        %v3115 = vsel %vm677, %v3089, %v3091
        %v3116 = vsel %vm677, %v3093, %v3095
        %v3117 = vsel %vm677, %v3095, %v3097
        %v3118 = vsel %vm677, %v3099, %v3101
        %v3119 = vsel %vm677, %v3101, %v3103
        %3136 = vmatprep.subr.bf16.mxu0 %v3119
        %3137 = vmatpush1.bf16.msra.mxu0 %v3118
        %3138 = vmatprep.subr.bf16.mxu0 %v3117
        %3139 = vmatpush1.bf16.msra.mxu0 %v3116
        %3140 = vmatprep.subr.bf16.mxu0 %v3115
        %3141 = vmatpush1.bf16.msra.mxu0 %v3114
        %3142 = vmatprep.subr.bf16.mxu0 %v3113
        %3143 = vmatpush1.bf16.msra.mxu0 %v3112
        %3144 = vmatprep.subr.bf16.mxu0 %v3111
        %3145 = vmatpush1.bf16.msra.mxu0 %v3110
        %3146 = vmatprep.subr.bf16.mxu0 %v3109
        %3147 = vmatpush1.bf16.msra.mxu0 %v3108
        %3148 = vmatprep.subr.bf16.mxu0 %v3107
        %3149 = vmatpush1.bf16.msra.mxu0 %v3106
        %3150 = vmatprep.subr.bf16.mxu0 %v3105
        %3151 = vmatpush1.bf16.msra.mxu0 %v3104
        %3152 = vmatprep.subr.bf16.mxu0 0
        %3153 = vmatpush2.bf16.msra.mxu0 0
        %3154 = vmatprep.subr.bf16.mxu0 0
        %3155 = vmatpush2.bf16.msra.mxu0 0
        %3156 = vmatprep.subr.bf16.mxu0 0
        %3157 = vmatpush2.bf16.msra.mxu0 0
        %3158 = vmatprep.subr.bf16.mxu0 0
        %3159 = vmatpush2.bf16.msra.mxu0 0
        %3160 = vmatprep.subr.bf16.mxu0 0
        %3161 = vmatpush2.bf16.msra.mxu0 0
        %3162 = vmatprep.subr.bf16.mxu0 0
        %3163 = vmatpush2.bf16.msra.mxu0 0
        %3164 = vmatprep.subr.bf16.mxu0 0
        %3165 = vmatpush2.bf16.msra.mxu0 0
        %3166 = vmatprep.subr.bf16.mxu0 0
        %3167 = vmatpush2.bf16.msra.mxu0 0
        %3168 = vmatprep.mubr.bf16.mxu0 0
        %3169 = vmatmul.mubr.bf16.gmra.mxu0 %v2951
        %v3170 = vpop.f32.mrf.mxu0
        %v3171 = vadd.f32 0.0, %v3170
        %v3172 = vpop.f32.mrf.mxu0
        %v3173 = vadd.f32 0.0, %v3172
        %v3174 = vpop.f32.mrf.mxu0
        %v3175 = vpop.f32.mrf.mxu0
        %3176 = vdwg.mxu0
        %v3177 = vlaneseq
        %v3178 = vshrl.u32 %v3177, 7
        %v3179 = vsub.s32 0, %v3178
        %v3180 = vrot.slane %v341, %v3179
        %v3181 = vlaneseq
        %v3182 = vshrl.u32 %v3181, 7
        %v3183 = vsub.s32 2, %v3182
        %v3184 = vrot.slane %v341, %v3183
        %v3187 = vlaneseq
        %v3188 = vshrl.u32 %v3187, 7
        %v3189 = vsub.s32 0, %v3188
        %v3190 = vrot.slane %v3180, %v3189
        %v3191 = vlaneseq
        %v3192 = vshrl.u32 %v3191, 7
        %v3193 = vsub.s32 0, %v3192
        %v3194 = vrot.slane %v3184, %v3193
        %v3195 = vmul.f32 %v3171, %v3190
        %v3196 = vmul.f32 %v3173, %v3194
        %s3197 = scalar_lea.vmem %s5, 4
        %v3198 = vld [vmem:[%s3197] sm:$0xf]
        %3199 = vrot.lane.b32.xlu0 %v3032, 16
        %v3200 = vpop.permute.xlu0 %3199
        %3201 = vrot.lane.b32.xlu0 %v3033, 16
        %v3202 = vpop.permute.xlu0 %3201
        %3203 = vrot.lane.b32.xlu0 %v3034, 16
        %v3204 = vpop.permute.xlu0 %3203
        %3205 = vrot.lane.b32.xlu0 %v3035, 16
        %v3206 = vpop.permute.xlu0 %3205
        %3207 = vrot.lane.b32.xlu0 %v3036, 16
        %v3208 = vpop.permute.xlu0 %3207
        %3209 = vrot.lane.b32.xlu0 %v3037, 16
        %v3210 = vpop.permute.xlu0 %3209
        %3211 = vrot.lane.b32.xlu0 %v3038, 16
        %v3212 = vpop.permute.xlu0 %3211
        %3213 = vrot.lane.b32.xlu0 %v3039, 16
        %v3214 = vpop.permute.xlu0 %3213
        %3215 = vrot.lane.b32.xlu0 %v3040, 16
        %v3216 = vpop.permute.xlu0 %3215
        %3217 = vrot.lane.b32.xlu0 %v3041, 16
        %v3218 = vpop.permute.xlu0 %3217
        %3219 = vrot.lane.b32.xlu0 %v3042, 16
        %v3220 = vpop.permute.xlu0 %3219
        %3221 = vrot.lane.b32.xlu0 %v3043, 16
        %v3222 = vpop.permute.xlu0 %3221
        %3223 = vrot.lane.b32.xlu0 %v3044, 16
        %v3224 = vpop.permute.xlu0 %3223
        %3225 = vrot.lane.b32.xlu0 %v3045, 16
        %v3226 = vpop.permute.xlu0 %3225
        %3227 = vrot.lane.b32.xlu0 %v3046, 16
        %v3228 = vpop.permute.xlu0 %3227
        %3229 = vrot.lane.b32.xlu0 %v3047, 16
        %v3230 = vpop.permute.xlu0 %3229
        %3231 = vrot.lane.b32.xlu0 %v3048, 16
        %v3232 = vpop.permute.xlu0 %3231
        %3233 = vrot.lane.b32.xlu0 %v3049, 16
        %v3234 = vpop.permute.xlu0 %3233
        %3235 = vrot.lane.b32.xlu0 %v3050, 16
        %v3236 = vpop.permute.xlu0 %3235
        %3237 = vrot.lane.b32.xlu0 %v3051, 16
        %v3238 = vpop.permute.xlu0 %3237
        %3239 = vrot.lane.b32.xlu0 %v3052, 16
        %v3240 = vpop.permute.xlu0 %3239
        %3241 = vrot.lane.b32.xlu0 %v3053, 16
        %v3242 = vpop.permute.xlu0 %3241
        %3243 = vrot.lane.b32.xlu0 %v3054, 16
        %v3244 = vpop.permute.xlu0 %3243
        %3245 = vrot.lane.b32.xlu0 %v3055, 16
        %v3246 = vpop.permute.xlu0 %3245
        %v3247 = vsel %vm476, %v3200, %v3202
        %v3248 = vsel %vm476, %v3202, %v3204
        %v3249 = vsel %vm476, %v3206, %v3208
        %v3250 = vsel %vm476, %v3208, %v3210
        %v3251 = vsel %vm476, %v3212, %v3214
        %v3252 = vsel %vm476, %v3214, %v3216
        %v3253 = vsel %vm476, %v3218, %v3220
        %v3254 = vsel %vm476, %v3220, %v3222
        %v3255 = vsel %vm476, %v3224, %v3226
        %v3256 = vsel %vm476, %v3226, %v3228
        %v3257 = vsel %vm476, %v3230, %v3232
        %v3258 = vsel %vm476, %v3232, %v3234
        %v3259 = vsel %vm476, %v3236, %v3238
        %v3260 = vsel %vm476, %v3238, %v3240
        %v3261 = vsel %vm476, %v3242, %v3244
        %v3262 = vsel %vm476, %v3244, %v3246
        %3279 = vmatprep.subr.bf16.mxu0 %v3262
        %3280 = vmatpush1.bf16.msra.mxu0 %v3261
        %3281 = vmatprep.subr.bf16.mxu0 %v3260
        %3282 = vmatpush1.bf16.msra.mxu0 %v3259
        %3283 = vmatprep.subr.bf16.mxu0 %v3258
        %3284 = vmatpush1.bf16.msra.mxu0 %v3257
        %3285 = vmatprep.subr.bf16.mxu0 %v3256
        %3286 = vmatpush1.bf16.msra.mxu0 %v3255
        %3287 = vmatprep.subr.bf16.mxu0 %v3254
        %3288 = vmatpush1.bf16.msra.mxu0 %v3253
        %3289 = vmatprep.subr.bf16.mxu0 %v3252
        %3290 = vmatpush1.bf16.msra.mxu0 %v3251
        %3291 = vmatprep.subr.bf16.mxu0 %v3250
        %3292 = vmatpush1.bf16.msra.mxu0 %v3249
        %3293 = vmatprep.subr.bf16.mxu0 %v3248
        %3294 = vmatpush1.bf16.msra.mxu0 %v3247
        %3295 = vmatprep.subr.bf16.mxu0 0
        %3296 = vmatpush2.bf16.msra.mxu0 0
        %3297 = vmatprep.subr.bf16.mxu0 0
        %3298 = vmatpush2.bf16.msra.mxu0 0
        %3299 = vmatprep.subr.bf16.mxu0 0
        %3300 = vmatpush2.bf16.msra.mxu0 0
        %3301 = vmatprep.subr.bf16.mxu0 0
        %3302 = vmatpush2.bf16.msra.mxu0 0
        %3303 = vmatprep.subr.bf16.mxu0 0
        %3304 = vmatpush2.bf16.msra.mxu0 0
        %3305 = vmatprep.subr.bf16.mxu0 0
        %3306 = vmatpush2.bf16.msra.mxu0 0
        %3307 = vmatprep.subr.bf16.mxu0 0
        %3308 = vmatpush2.bf16.msra.mxu0 0
        %3309 = vmatprep.subr.bf16.mxu0 0
        %3310 = vmatpush2.bf16.msra.mxu0 0
        %3311 = vmatprep.mubr.bf16.mxu0 0
        %3312 = vmatmul.mubr.bf16.gmra.mxu0 %v3198
        %v3313 = vpop.f32.mrf.mxu0
        %v3314 = vadd.f32 0.0, %v3313
        %v3315 = vpop.f32.mrf.mxu0
        %v3316 = vadd.f32 0.0, %v3315
        %v3317 = vpop.f32.mrf.mxu0
        %v3318 = vpop.f32.mrf.mxu0
        %3319 = vdwg.mxu0
        %v3320 = vadd.f32 %v3195, %v3314
        %v3321 = vadd.f32 %v3196, %v3316
        %s3322 = scalar_lea.vmem %s5, 8
        %v3323 = vld [vmem:[%s3322] sm:$0xf]
        %3324 = vrot.lane.b32.xlu0 %v3032, 15
        %v3325 = vpop.permute.xlu0 %3324
        %3326 = vrot.lane.b32.xlu0 %v3033, 15
        %v3327 = vpop.permute.xlu0 %3326
        %3328 = vrot.lane.b32.xlu0 %v3034, 15
        %v3329 = vpop.permute.xlu0 %3328
        %3330 = vrot.lane.b32.xlu0 %v3035, 15
        %v3331 = vpop.permute.xlu0 %3330
        %3332 = vrot.lane.b32.xlu0 %v3036, 15
        %v3333 = vpop.permute.xlu0 %3332
        %3334 = vrot.lane.b32.xlu0 %v3037, 15
        %v3335 = vpop.permute.xlu0 %3334
        %3336 = vrot.lane.b32.xlu0 %v3038, 15
        %v3337 = vpop.permute.xlu0 %3336
        %3338 = vrot.lane.b32.xlu0 %v3039, 15
        %v3339 = vpop.permute.xlu0 %3338
        %3340 = vrot.lane.b32.xlu0 %v3040, 15
        %v3341 = vpop.permute.xlu0 %3340
        %3342 = vrot.lane.b32.xlu0 %v3041, 15
        %v3343 = vpop.permute.xlu0 %3342
        %3344 = vrot.lane.b32.xlu0 %v3042, 15
        %v3345 = vpop.permute.xlu0 %3344
        %3346 = vrot.lane.b32.xlu0 %v3043, 15
        %v3347 = vpop.permute.xlu0 %3346
        %3348 = vrot.lane.b32.xlu0 %v3044, 15
        %v3349 = vpop.permute.xlu0 %3348
        %3350 = vrot.lane.b32.xlu0 %v3045, 15
        %v3351 = vpop.permute.xlu0 %3350
        %3352 = vrot.lane.b32.xlu0 %v3046, 15
        %v3353 = vpop.permute.xlu0 %3352
        %3354 = vrot.lane.b32.xlu0 %v3047, 15
        %v3355 = vpop.permute.xlu0 %3354
        %3356 = vrot.lane.b32.xlu0 %v3048, 15
        %v3357 = vpop.permute.xlu0 %3356
        %3358 = vrot.lane.b32.xlu0 %v3049, 15
        %v3359 = vpop.permute.xlu0 %3358
        %3360 = vrot.lane.b32.xlu0 %v3050, 15
        %v3361 = vpop.permute.xlu0 %3360
        %3362 = vrot.lane.b32.xlu0 %v3051, 15
        %v3363 = vpop.permute.xlu0 %3362
        %3364 = vrot.lane.b32.xlu0 %v3052, 15
        %v3365 = vpop.permute.xlu0 %3364
        %3366 = vrot.lane.b32.xlu0 %v3053, 15
        %v3367 = vpop.permute.xlu0 %3366
        %3368 = vrot.lane.b32.xlu0 %v3054, 15
        %v3369 = vpop.permute.xlu0 %3368
        %3370 = vrot.lane.b32.xlu0 %v3055, 15
        %v3371 = vpop.permute.xlu0 %3370
        %v3372 = vsel %vm922, %v3325, %v3327
        %v3373 = vsel %vm922, %v3327, %v3329
        %v3374 = vsel %vm922, %v3331, %v3333
        %v3375 = vsel %vm922, %v3333, %v3335
        %v3376 = vsel %vm922, %v3337, %v3339
        %v3377 = vsel %vm922, %v3339, %v3341
        %v3378 = vsel %vm922, %v3343, %v3345
        %v3379 = vsel %vm922, %v3345, %v3347
        %v3380 = vsel %vm922, %v3349, %v3351
        %v3381 = vsel %vm922, %v3351, %v3353
        %v3382 = vsel %vm922, %v3355, %v3357
        %v3383 = vsel %vm922, %v3357, %v3359
        %v3384 = vsel %vm922, %v3361, %v3363
        %v3385 = vsel %vm922, %v3363, %v3365
        %v3386 = vsel %vm922, %v3367, %v3369
        %v3387 = vsel %vm922, %v3369, %v3371
        %3404 = vmatprep.subr.bf16.mxu0 %v3387
        %3405 = vmatpush1.bf16.msra.mxu0 %v3386
        %3406 = vmatprep.subr.bf16.mxu0 %v3385
        %3407 = vmatpush1.bf16.msra.mxu0 %v3384
        %3408 = vmatprep.subr.bf16.mxu0 %v3383
        %3409 = vmatpush1.bf16.msra.mxu0 %v3382
        %3410 = vmatprep.subr.bf16.mxu0 %v3381
        %3411 = vmatpush1.bf16.msra.mxu0 %v3380
        %3412 = vmatprep.subr.bf16.mxu0 %v3379
        %3413 = vmatpush1.bf16.msra.mxu0 %v3378
        %3414 = vmatprep.subr.bf16.mxu0 %v3377
        %3415 = vmatpush1.bf16.msra.mxu0 %v3376
        %3416 = vmatprep.subr.bf16.mxu0 %v3375
        %3417 = vmatpush1.bf16.msra.mxu0 %v3374
        %3418 = vmatprep.subr.bf16.mxu0 %v3373
        %3419 = vmatpush1.bf16.msra.mxu0 %v3372
        %3420 = vmatprep.subr.bf16.mxu0 0
        %3421 = vmatpush2.bf16.msra.mxu0 0
        %3422 = vmatprep.subr.bf16.mxu0 0
        %3423 = vmatpush2.bf16.msra.mxu0 0
        %3424 = vmatprep.subr.bf16.mxu0 0
        %3425 = vmatpush2.bf16.msra.mxu0 0
        %3426 = vmatprep.subr.bf16.mxu0 0
        %3427 = vmatpush2.bf16.msra.mxu0 0
        %3428 = vmatprep.subr.bf16.mxu0 0
        %3429 = vmatpush2.bf16.msra.mxu0 0
        %3430 = vmatprep.subr.bf16.mxu0 0
        %3431 = vmatpush2.bf16.msra.mxu0 0
        %3432 = vmatprep.subr.bf16.mxu0 0
        %3433 = vmatpush2.bf16.msra.mxu0 0
        %3434 = vmatprep.subr.bf16.mxu0 0
        %3435 = vmatpush2.bf16.msra.mxu0 0
        %3436 = vmatprep.mubr.bf16.mxu0 0
        %3437 = vmatmul.mubr.bf16.gmra.mxu0 %v3323
        %v3438 = vpop.f32.mrf.mxu0
        %v3439 = vadd.f32 0.0, %v3438
        %v3440 = vpop.f32.mrf.mxu0
        %v3441 = vadd.f32 0.0, %v3440
        %v3442 = vpop.f32.mrf.mxu0
        %v3443 = vpop.f32.mrf.mxu0
        %3444 = vdwg.mxu0
        %v3445 = vlaneseq
        %v3446 = vshrl.u32 %v3445, 7
        %v3447 = vsub.s32 1, %v3446
        %v3448 = vrot.slane %v341, %v3447
        %v3449 = vlaneseq
        %v3450 = vshrl.u32 %v3449, 7
        %v3451 = vsub.s32 3, %v3450
        %v3452 = vrot.slane %v341, %v3451
        %v3455 = vlaneseq
        %v3456 = vshrl.u32 %v3455, 7
        %v3457 = vsub.s32 1, %v3456
        %v3458 = vrot.slane %v3448, %v3457
        %v3459 = vlaneseq
        %v3460 = vshrl.u32 %v3459, 7
        %v3461 = vsub.s32 1, %v3460
        %v3462 = vrot.slane %v3452, %v3461
        %v3463 = vmul.f32 %v3439, %v3458
        %v3464 = vmul.f32 %v3441, %v3462
        %v3465 = vadd.f32 %v3320, %v3463
        %v3466 = vadd.f32 %v3321, %v3464
        %s3467 = scalar_lea.vmem %s5, 12
        %v3468 = vld [vmem:[%s3467] sm:$0xf]
        %3469 = vrot.lane.b32.xlu0 %v3032, 1
        %v3470 = vpop.permute.xlu0 %3469
        %3471 = vrot.lane.b32.xlu0 %v3033, 1
        %v3472 = vpop.permute.xlu0 %3471
        %3473 = vrot.lane.b32.xlu0 %v3034, 1
        %v3474 = vpop.permute.xlu0 %3473
        %3475 = vrot.lane.b32.xlu0 %v3035, 1
        %v3476 = vpop.permute.xlu0 %3475
        %3477 = vrot.lane.b32.xlu0 %v3036, 1
        %v3478 = vpop.permute.xlu0 %3477
        %3479 = vrot.lane.b32.xlu0 %v3037, 1
        %v3480 = vpop.permute.xlu0 %3479
        %3481 = vrot.lane.b32.xlu0 %v3038, 1
        %v3482 = vpop.permute.xlu0 %3481
        %3483 = vrot.lane.b32.xlu0 %v3039, 1
        %v3484 = vpop.permute.xlu0 %3483
        %3485 = vrot.lane.b32.xlu0 %v3040, 1
        %v3486 = vpop.permute.xlu0 %3485
        %3487 = vrot.lane.b32.xlu0 %v3041, 1
        %v3488 = vpop.permute.xlu0 %3487
        %3489 = vrot.lane.b32.xlu0 %v3042, 1
        %v3490 = vpop.permute.xlu0 %3489
        %3491 = vrot.lane.b32.xlu0 %v3043, 1
        %v3492 = vpop.permute.xlu0 %3491
        %3493 = vrot.lane.b32.xlu0 %v3044, 1
        %v3494 = vpop.permute.xlu0 %3493
        %3495 = vrot.lane.b32.xlu0 %v3045, 1
        %v3496 = vpop.permute.xlu0 %3495
        %3497 = vrot.lane.b32.xlu0 %v3046, 1
        %v3498 = vpop.permute.xlu0 %3497
        %3499 = vrot.lane.b32.xlu0 %v3047, 1
        %v3500 = vpop.permute.xlu0 %3499
        %3501 = vrot.lane.b32.xlu0 %v3048, 1
        %v3502 = vpop.permute.xlu0 %3501
        %3503 = vrot.lane.b32.xlu0 %v3049, 1
        %v3504 = vpop.permute.xlu0 %3503
        %3505 = vrot.lane.b32.xlu0 %v3050, 1
        %v3506 = vpop.permute.xlu0 %3505
        %3507 = vrot.lane.b32.xlu0 %v3051, 1
        %v3508 = vpop.permute.xlu0 %3507
        %3509 = vrot.lane.b32.xlu0 %v3052, 1
        %v3510 = vpop.permute.xlu0 %3509
        %3511 = vrot.lane.b32.xlu0 %v3053, 1
        %v3512 = vpop.permute.xlu0 %3511
        %3513 = vrot.lane.b32.xlu0 %v3054, 1
        %v3514 = vpop.permute.xlu0 %3513
        %3515 = vrot.lane.b32.xlu0 %v3055, 1
        %v3516 = vpop.permute.xlu0 %3515
        %v3517 = vsel %vm1180, %v3470, %v3472
        %v3518 = vsel %vm1180, %v3472, %v3474
        %v3519 = vsel %vm1180, %v3476, %v3478
        %v3520 = vsel %vm1180, %v3478, %v3480
        %v3521 = vsel %vm1180, %v3482, %v3484
        %v3522 = vsel %vm1180, %v3484, %v3486
        %v3523 = vsel %vm1180, %v3488, %v3490
        %v3524 = vsel %vm1180, %v3490, %v3492
        %v3525 = vsel %vm1180, %v3494, %v3496
        %v3526 = vsel %vm1180, %v3496, %v3498
        %v3527 = vsel %vm1180, %v3500, %v3502
        %v3528 = vsel %vm1180, %v3502, %v3504
        %v3529 = vsel %vm1180, %v3506, %v3508
        %v3530 = vsel %vm1180, %v3508, %v3510
        %v3531 = vsel %vm1180, %v3512, %v3514
        %v3532 = vsel %vm1180, %v3514, %v3516
        %3549 = vmatprep.subr.bf16.mxu0 %v3532
        %3550 = vmatpush1.bf16.msra.mxu0 %v3531
        %3551 = vmatprep.subr.bf16.mxu0 %v3530
        %3552 = vmatpush1.bf16.msra.mxu0 %v3529
        %3553 = vmatprep.subr.bf16.mxu0 %v3528
        %3554 = vmatpush1.bf16.msra.mxu0 %v3527
        %3555 = vmatprep.subr.bf16.mxu0 %v3526
        %3556 = vmatpush1.bf16.msra.mxu0 %v3525
        %3557 = vmatprep.subr.bf16.mxu0 %v3524
        %3558 = vmatpush1.bf16.msra.mxu0 %v3523
        %3559 = vmatprep.subr.bf16.mxu0 %v3522
        %3560 = vmatpush1.bf16.msra.mxu0 %v3521
        %3561 = vmatprep.subr.bf16.mxu0 %v3520
        %3562 = vmatpush1.bf16.msra.mxu0 %v3519
        %3563 = vmatprep.subr.bf16.mxu0 %v3518
        %3564 = vmatpush1.bf16.msra.mxu0 %v3517
        %3565 = vmatprep.subr.bf16.mxu0 0
        %3566 = vmatpush2.bf16.msra.mxu0 0
        %3567 = vmatprep.subr.bf16.mxu0 0
        %3568 = vmatpush2.bf16.msra.mxu0 0
        %3569 = vmatprep.subr.bf16.mxu0 0
        %3570 = vmatpush2.bf16.msra.mxu0 0
        %3571 = vmatprep.subr.bf16.mxu0 0
        %3572 = vmatpush2.bf16.msra.mxu0 0
        %3573 = vmatprep.subr.bf16.mxu0 0
        %3574 = vmatpush2.bf16.msra.mxu0 0
        %3575 = vmatprep.subr.bf16.mxu0 0
        %3576 = vmatpush2.bf16.msra.mxu0 0
        %3577 = vmatprep.subr.bf16.mxu0 0
        %3578 = vmatpush2.bf16.msra.mxu0 0
        %3579 = vmatprep.subr.bf16.mxu0 0
        %3580 = vmatpush2.bf16.msra.mxu0 0
        %3581 = vmatprep.mubr.bf16.mxu0 0
        %3582 = vmatmul.mubr.bf16.gmra.mxu0 %v3468
        %v3583 = vpop.f32.mrf.mxu0
        %v3584 = vadd.f32 0.0, %v3583
        %v3585 = vpop.f32.mrf.mxu0
        %v3586 = vadd.f32 0.0, %v3585
        %v3587 = vpop.f32.mrf.mxu0
        %v3588 = vpop.f32.mrf.mxu0
        %3589 = vdwg.mxu0
        %v3590 = vmul.f32 %v3584, %v3190
        %v3591 = vmul.f32 %v3586, %v3194
        %v3592 = vadd.f32 %v3465, %v3590
        %v3593 = vadd.f32 %v3466, %v3591
        %s3594 = scalar_lea.vmem %s5, 16
        %v3595 = vld [vmem:[%s3594] sm:$0xf]
        %3596 = vmatprep.subr.bf16.mxu0 %v2790
        %3597 = vmatpush1.bf16.msra.mxu0 %v2789
        %3598 = vmatprep.subr.bf16.mxu0 %v2788
        %3599 = vmatpush1.bf16.msra.mxu0 %v2787
        %3600 = vmatprep.subr.bf16.mxu0 %v2786
        %3601 = vmatpush1.bf16.msra.mxu0 %v2785
        %3602 = vmatprep.subr.bf16.mxu0 %v2784
        %3603 = vmatpush1.bf16.msra.mxu0 %v2783
        %3604 = vmatprep.subr.bf16.mxu0 %v2782
        %3605 = vmatpush1.bf16.msra.mxu0 %v2781
        %3606 = vmatprep.subr.bf16.mxu0 %v2780
        %3607 = vmatpush1.bf16.msra.mxu0 %v2779
        %3608 = vmatprep.subr.bf16.mxu0 %v2778
        %3609 = vmatpush1.bf16.msra.mxu0 %v2777
        %3610 = vmatprep.subr.bf16.mxu0 %v2776
        %3611 = vmatpush1.bf16.msra.mxu0 %v2775
        %3612 = vmatprep.subr.bf16.mxu0 0
        %3613 = vmatpush2.bf16.msra.mxu0 0
        %3614 = vmatprep.subr.bf16.mxu0 0
        %3615 = vmatpush2.bf16.msra.mxu0 0
        %3616 = vmatprep.subr.bf16.mxu0 0
        %3617 = vmatpush2.bf16.msra.mxu0 0
        %3618 = vmatprep.subr.bf16.mxu0 0
        %3619 = vmatpush2.bf16.msra.mxu0 0
        %3620 = vmatprep.subr.bf16.mxu0 0
        %3621 = vmatpush2.bf16.msra.mxu0 0
        %3622 = vmatprep.subr.bf16.mxu0 0
        %3623 = vmatpush2.bf16.msra.mxu0 0
        %3624 = vmatprep.subr.bf16.mxu0 0
        %3625 = vmatpush2.bf16.msra.mxu0 0
        %3626 = vmatprep.subr.bf16.mxu0 0
        %3627 = vmatpush2.bf16.msra.mxu0 0
        %3628 = vmatprep.mubr.bf16.mxu0 0
        %3629 = vmatmul.mubr.bf16.gmra.mxu0 %v3595
        %v3630 = vpop.f32.mrf.mxu0
        %v3631 = vadd.f32 0.0, %v3630
        %v3632 = vpop.f32.mrf.mxu0
        %v3633 = vadd.f32 0.0, %v3632
        %v3634 = vpop.f32.mrf.mxu0
        %v3635 = vpop.f32.mrf.mxu0
        %3636 = vdwg.mxu0
        %v3637 = vadd.f32 %v3592, %v3631
        %v3638 = vadd.f32 %v3593, %v3633
        %v3639 = vld [vmem:[#allocation3 + $0x4] sm:$0xff]
        %v3640 = vld [vmem:[#allocation3 + $0xc] sm:$0xf]
        %v3641 = vld [vmem:[#allocation3 + $0x14] sm:$0xff]
        %v3642 = vld [vmem:[#allocation3 + $0x1c] sm:$0xf]
        %v3643 = vld [vmem:[#allocation3 + $0x24] sm:$0xff]
        %v3644 = vld [vmem:[#allocation3 + $0x2c] sm:$0xf]
        %v3645 = vld [vmem:[#allocation3 + $0x34] sm:$0xff]
        %v3646 = vld [vmem:[#allocation3 + $0x3c] sm:$0xf]
        %v3647 = vld [vmem:[#allocation3 + $0x44] sm:$0xff]
        %v3648 = vld [vmem:[#allocation3 + $0x4c] sm:$0xf]
        %v3649 = vld [vmem:[#allocation3 + $0x54] sm:$0xff]
        %v3650 = vld [vmem:[#allocation3 + $0x5c] sm:$0xf]
        %v3651 = vld [vmem:[#allocation3 + $0x64] sm:$0xff]
        %v3652 = vld [vmem:[#allocation3 + $0x6c] sm:$0xf]
        %v3653 = vld [vmem:[#allocation3 + $0x74] sm:$0xff]
        %v3654 = vld [vmem:[#allocation3 + $0x7c] sm:$0xf]
        %v3655 = vld [vmem:[#allocation3 + $0x84] sm:$0xff]
        %v3656 = vld [vmem:[#allocation3 + $0x8c] sm:$0xf]
        %v3657 = vld [vmem:[#allocation3 + $0x94] sm:$0xff]
        %v3658 = vld [vmem:[#allocation3 + $0x9c] sm:$0xf]
        %v3659 = vld [vmem:[#allocation3 + $0xa4] sm:$0xff]
        %v3660 = vld [vmem:[#allocation3 + $0xac] sm:$0xf]
        %v3661 = vld [vmem:[#allocation3 + $0xb4] sm:$0xff]
        %v3662 = vld [vmem:[#allocation3 + $0xbc] sm:$0xf]
        %v3663 = vld [vmem:[#allocation3 + $0xc4] sm:$0xff]
        %v3664 = vld [vmem:[#allocation3 + $0xcc] sm:$0xf]
        %v3665 = vld [vmem:[#allocation3 + $0xd4] sm:$0xff]
        %v3666 = vld [vmem:[#allocation3 + $0xdc] sm:$0xf]
        %v3667 = vld [vmem:[#allocation3 + $0xe4] sm:$0xff]
        %v3668 = vld [vmem:[#allocation3 + $0xec] sm:$0xf]
        %v3669 = vld [vmem:[#allocation3 + $0xf4] sm:$0xff]
        %v3670 = vld [vmem:[#allocation3 + $0xfc] sm:$0xf]
        %s3671 = scalar_lea.vmem %s5, 20
        %v3672 = vld [vmem:[%s3671] sm:$0xf]
        %v3705 = vunpack.c.l.b16 %v3639
        %v3706 = vunpack.c.h.b16 %v3639
        %v3707 = vunpack.c.l.b16 %v3640
        %v3708 = vunpack.c.l.b16 %v3641
        %v3709 = vunpack.c.h.b16 %v3641
        %v3710 = vunpack.c.l.b16 %v3642
        %v3711 = vunpack.c.l.b16 %v3643
        %v3712 = vunpack.c.h.b16 %v3643
        %v3713 = vunpack.c.l.b16 %v3644
        %v3714 = vunpack.c.l.b16 %v3645
        %v3715 = vunpack.c.h.b16 %v3645
        %v3716 = vunpack.c.l.b16 %v3646
        %v3717 = vunpack.c.l.b16 %v3647
        %v3718 = vunpack.c.h.b16 %v3647
        %v3719 = vunpack.c.l.b16 %v3648
        %v3720 = vunpack.c.l.b16 %v3649
        %v3721 = vunpack.c.h.b16 %v3649
        %v3722 = vunpack.c.l.b16 %v3650
        %v3723 = vunpack.c.l.b16 %v3651
        %v3724 = vunpack.c.h.b16 %v3651
        %v3725 = vunpack.c.l.b16 %v3652
        %v3726 = vunpack.c.l.b16 %v3653
        %v3727 = vunpack.c.h.b16 %v3653
        %v3728 = vunpack.c.l.b16 %v3654
        %v3729 = vunpack.c.l.b16 %v3655
        %v3730 = vunpack.c.h.b16 %v3655
        %v3731 = vunpack.c.l.b16 %v3656
        %v3732 = vunpack.c.l.b16 %v3657
        %v3733 = vunpack.c.h.b16 %v3657
        %v3734 = vunpack.c.l.b16 %v3658
        %v3735 = vunpack.c.l.b16 %v3659
        %v3736 = vunpack.c.h.b16 %v3659
        %v3737 = vunpack.c.l.b16 %v3660
        %v3738 = vunpack.c.l.b16 %v3661
        %v3739 = vunpack.c.h.b16 %v3661
        %v3740 = vunpack.c.l.b16 %v3662
        %v3741 = vunpack.c.l.b16 %v3663
        %v3742 = vunpack.c.h.b16 %v3663
        %v3743 = vunpack.c.l.b16 %v3664
        %v3744 = vunpack.c.l.b16 %v3665
        %v3745 = vunpack.c.h.b16 %v3665
        %v3746 = vunpack.c.l.b16 %v3666
        %v3747 = vunpack.c.l.b16 %v3667
        %v3748 = vunpack.c.h.b16 %v3667
        %v3749 = vunpack.c.l.b16 %v3668
        %v3750 = vunpack.c.l.b16 %v3669
        %v3751 = vunpack.c.h.b16 %v3669
        %v3752 = vunpack.c.l.b16 %v3670
        %v3753 = vpack.c.b16 %v3708, %v3705
        %v3754 = vpack.c.b16 %v3709, %v3706
        %v3755 = vpack.c.b16 %v3710, %v3707
        %v3756 = vpack.c.b16 %v3714, %v3711
        %v3757 = vpack.c.b16 %v3715, %v3712
        %v3758 = vpack.c.b16 %v3716, %v3713
        %v3759 = vpack.c.b16 %v3720, %v3717
        %v3760 = vpack.c.b16 %v3721, %v3718
        %v3761 = vpack.c.b16 %v3722, %v3719
        %v3762 = vpack.c.b16 %v3726, %v3723
        %v3763 = vpack.c.b16 %v3727, %v3724
        %v3764 = vpack.c.b16 %v3728, %v3725
        %v3765 = vpack.c.b16 %v3732, %v3729
        %v3766 = vpack.c.b16 %v3733, %v3730
        %v3767 = vpack.c.b16 %v3734, %v3731
        %v3768 = vpack.c.b16 %v3738, %v3735
        %v3769 = vpack.c.b16 %v3739, %v3736
        %v3770 = vpack.c.b16 %v3740, %v3737
        %v3771 = vpack.c.b16 %v3744, %v3741
        %v3772 = vpack.c.b16 %v3745, %v3742
        %v3773 = vpack.c.b16 %v3746, %v3743
        %v3774 = vpack.c.b16 %v3750, %v3747
        %v3775 = vpack.c.b16 %v3751, %v3748
        %v3776 = vpack.c.b16 %v3752, %v3749
        %3777 = vrot.lane.b32.xlu0 %v3753, 127
        %v3778 = vpop.permute.xlu0 %3777
        %3779 = vrot.lane.b32.xlu0 %v3754, 127
        %v3780 = vpop.permute.xlu0 %3779
        %3781 = vrot.lane.b32.xlu0 %v3755, 127
        %v3782 = vpop.permute.xlu0 %3781
        %3783 = vrot.lane.b32.xlu0 %v3756, 127
        %v3784 = vpop.permute.xlu0 %3783
        %3785 = vrot.lane.b32.xlu0 %v3757, 127
        %v3786 = vpop.permute.xlu0 %3785
        %3787 = vrot.lane.b32.xlu0 %v3758, 127
        %v3788 = vpop.permute.xlu0 %3787
        %3789 = vrot.lane.b32.xlu0 %v3759, 127
        %v3790 = vpop.permute.xlu0 %3789
        %3791 = vrot.lane.b32.xlu0 %v3760, 127
        %v3792 = vpop.permute.xlu0 %3791
        %3793 = vrot.lane.b32.xlu0 %v3761, 127
        %v3794 = vpop.permute.xlu0 %3793
        %3795 = vrot.lane.b32.xlu0 %v3762, 127
        %v3796 = vpop.permute.xlu0 %3795
        %3797 = vrot.lane.b32.xlu0 %v3763, 127
        %v3798 = vpop.permute.xlu0 %3797
        %3799 = vrot.lane.b32.xlu0 %v3764, 127
        %v3800 = vpop.permute.xlu0 %3799
        %3801 = vrot.lane.b32.xlu0 %v3765, 127
        %v3802 = vpop.permute.xlu0 %3801
        %3803 = vrot.lane.b32.xlu0 %v3766, 127
        %v3804 = vpop.permute.xlu0 %3803
        %3805 = vrot.lane.b32.xlu0 %v3767, 127
        %v3806 = vpop.permute.xlu0 %3805
        %3807 = vrot.lane.b32.xlu0 %v3768, 127
        %v3808 = vpop.permute.xlu0 %3807
        %3809 = vrot.lane.b32.xlu0 %v3769, 127
        %v3810 = vpop.permute.xlu0 %3809
        %3811 = vrot.lane.b32.xlu0 %v3770, 127
        %v3812 = vpop.permute.xlu0 %3811
        %3813 = vrot.lane.b32.xlu0 %v3771, 127
        %v3814 = vpop.permute.xlu0 %3813
        %3815 = vrot.lane.b32.xlu0 %v3772, 127
        %v3816 = vpop.permute.xlu0 %3815
        %3817 = vrot.lane.b32.xlu0 %v3773, 127
        %v3818 = vpop.permute.xlu0 %3817
        %3819 = vrot.lane.b32.xlu0 %v3774, 127
        %v3820 = vpop.permute.xlu0 %3819
        %3821 = vrot.lane.b32.xlu0 %v3775, 127
        %v3822 = vpop.permute.xlu0 %3821
        %3823 = vrot.lane.b32.xlu0 %v3776, 127
        %v3824 = vpop.permute.xlu0 %3823
        %v3825 = vsel %vm1103, %v3778, %v3780
        %v3826 = vsel %vm1103, %v3780, %v3782
        %v3827 = vsel %vm1103, %v3784, %v3786
        %v3828 = vsel %vm1103, %v3786, %v3788
        %v3829 = vsel %vm1103, %v3790, %v3792
        %v3830 = vsel %vm1103, %v3792, %v3794
        %v3831 = vsel %vm1103, %v3796, %v3798
        %v3832 = vsel %vm1103, %v3798, %v3800
        %v3833 = vsel %vm1103, %v3802, %v3804
        %v3834 = vsel %vm1103, %v3804, %v3806
        %v3835 = vsel %vm1103, %v3808, %v3810
        %v3836 = vsel %vm1103, %v3810, %v3812
        %v3837 = vsel %vm1103, %v3814, %v3816
        %v3838 = vsel %vm1103, %v3816, %v3818
        %v3839 = vsel %vm1103, %v3820, %v3822
        %v3840 = vsel %vm1103, %v3822, %v3824
        %3857 = vmatprep.subr.bf16.mxu0 %v3840
        %3858 = vmatpush1.bf16.msra.mxu0 %v3839
        %3859 = vmatprep.subr.bf16.mxu0 %v3838
        %3860 = vmatpush1.bf16.msra.mxu0 %v3837
        %3861 = vmatprep.subr.bf16.mxu0 %v3836
        %3862 = vmatpush1.bf16.msra.mxu0 %v3835
        %3863 = vmatprep.subr.bf16.mxu0 %v3834
        %3864 = vmatpush1.bf16.msra.mxu0 %v3833
        %3865 = vmatprep.subr.bf16.mxu0 %v3832
        %3866 = vmatpush1.bf16.msra.mxu0 %v3831
        %3867 = vmatprep.subr.bf16.mxu0 %v3830
        %3868 = vmatpush1.bf16.msra.mxu0 %v3829
        %3869 = vmatprep.subr.bf16.mxu0 %v3828
        %3870 = vmatpush1.bf16.msra.mxu0 %v3827
        %3871 = vmatprep.subr.bf16.mxu0 %v3826
        %3872 = vmatpush1.bf16.msra.mxu0 %v3825
        %3873 = vmatprep.subr.bf16.mxu0 0
        %3874 = vmatpush2.bf16.msra.mxu0 0
        %3875 = vmatprep.subr.bf16.mxu0 0
        %3876 = vmatpush2.bf16.msra.mxu0 0
        %3877 = vmatprep.subr.bf16.mxu0 0
        %3878 = vmatpush2.bf16.msra.mxu0 0
        %3879 = vmatprep.subr.bf16.mxu0 0
        %3880 = vmatpush2.bf16.msra.mxu0 0
        %3881 = vmatprep.subr.bf16.mxu0 0
        %3882 = vmatpush2.bf16.msra.mxu0 0
        %3883 = vmatprep.subr.bf16.mxu0 0
        %3884 = vmatpush2.bf16.msra.mxu0 0
        %3885 = vmatprep.subr.bf16.mxu0 0
        %3886 = vmatpush2.bf16.msra.mxu0 0
        %3887 = vmatprep.subr.bf16.mxu0 0
        %3888 = vmatpush2.bf16.msra.mxu0 0
        %3889 = vmatprep.mubr.bf16.mxu0 0
        %3890 = vmatmul.mubr.bf16.gmra.mxu0 %v3672
        %v3891 = vpop.f32.mrf.mxu0
        %v3892 = vadd.f32 0.0, %v3891
        %v3893 = vpop.f32.mrf.mxu0
        %v3894 = vadd.f32 0.0, %v3893
        %v3895 = vpop.f32.mrf.mxu0
        %v3896 = vpop.f32.mrf.mxu0
        %3897 = vdwg.mxu0
        %v3898 = vmul.f32 %v3892, %v3458
        %v3899 = vmul.f32 %v3894, %v3462
        %v3900 = vadd.f32 %v3637, %v3898
        %v3901 = vadd.f32 %v3638, %v3899
        %s3902 = scalar_lea.vmem %s5, 24
        %v3903 = vld [vmem:[%s3902] sm:$0xf]
        %3904 = vrot.lane.b32.xlu0 %v3753, 113
        %v3905 = vpop.permute.xlu0 %3904
        %3906 = vrot.lane.b32.xlu0 %v3754, 113
        %v3907 = vpop.permute.xlu0 %3906
        %3908 = vrot.lane.b32.xlu0 %v3755, 113
        %v3909 = vpop.permute.xlu0 %3908
        %3910 = vrot.lane.b32.xlu0 %v3756, 113
        %v3911 = vpop.permute.xlu0 %3910
        %3912 = vrot.lane.b32.xlu0 %v3757, 113
        %v3913 = vpop.permute.xlu0 %3912
        %3914 = vrot.lane.b32.xlu0 %v3758, 113
        %v3915 = vpop.permute.xlu0 %3914
        %3916 = vrot.lane.b32.xlu0 %v3759, 113
        %v3917 = vpop.permute.xlu0 %3916
        %3918 = vrot.lane.b32.xlu0 %v3760, 113
        %v3919 = vpop.permute.xlu0 %3918
        %3920 = vrot.lane.b32.xlu0 %v3761, 113
        %v3921 = vpop.permute.xlu0 %3920
        %3922 = vrot.lane.b32.xlu0 %v3762, 113
        %v3923 = vpop.permute.xlu0 %3922
        %3924 = vrot.lane.b32.xlu0 %v3763, 113
        %v3925 = vpop.permute.xlu0 %3924
        %3926 = vrot.lane.b32.xlu0 %v3764, 113
        %v3927 = vpop.permute.xlu0 %3926
        %3928 = vrot.lane.b32.xlu0 %v3765, 113
        %v3929 = vpop.permute.xlu0 %3928
        %3930 = vrot.lane.b32.xlu0 %v3766, 113
        %v3931 = vpop.permute.xlu0 %3930
        %3932 = vrot.lane.b32.xlu0 %v3767, 113
        %v3933 = vpop.permute.xlu0 %3932
        %3934 = vrot.lane.b32.xlu0 %v3768, 113
        %v3935 = vpop.permute.xlu0 %3934
        %3936 = vrot.lane.b32.xlu0 %v3769, 113
        %v3937 = vpop.permute.xlu0 %3936
        %3938 = vrot.lane.b32.xlu0 %v3770, 113
        %v3939 = vpop.permute.xlu0 %3938
        %3940 = vrot.lane.b32.xlu0 %v3771, 113
        %v3941 = vpop.permute.xlu0 %3940
        %3942 = vrot.lane.b32.xlu0 %v3772, 113
        %v3943 = vpop.permute.xlu0 %3942
        %3944 = vrot.lane.b32.xlu0 %v3773, 113
        %v3945 = vpop.permute.xlu0 %3944
        %3946 = vrot.lane.b32.xlu0 %v3774, 113
        %v3947 = vpop.permute.xlu0 %3946
        %3948 = vrot.lane.b32.xlu0 %v3775, 113
        %v3949 = vpop.permute.xlu0 %3948
        %3950 = vrot.lane.b32.xlu0 %v3776, 113
        %v3951 = vpop.permute.xlu0 %3950
        %v3952 = vsel %vm845, %v3905, %v3907
        %v3953 = vsel %vm845, %v3907, %v3909
        %v3954 = vsel %vm845, %v3911, %v3913
        %v3955 = vsel %vm845, %v3913, %v3915
        %v3956 = vsel %vm845, %v3917, %v3919
        %v3957 = vsel %vm845, %v3919, %v3921
        %v3958 = vsel %vm845, %v3923, %v3925
        %v3959 = vsel %vm845, %v3925, %v3927
        %v3960 = vsel %vm845, %v3929, %v3931
        %v3961 = vsel %vm845, %v3931, %v3933
        %v3962 = vsel %vm845, %v3935, %v3937
        %v3963 = vsel %vm845, %v3937, %v3939
        %v3964 = vsel %vm845, %v3941, %v3943
        %v3965 = vsel %vm845, %v3943, %v3945
        %v3966 = vsel %vm845, %v3947, %v3949
        %v3967 = vsel %vm845, %v3949, %v3951
        %3984 = vmatprep.subr.bf16.mxu0 %v3967
        %3985 = vmatpush1.bf16.msra.mxu0 %v3966
        %3986 = vmatprep.subr.bf16.mxu0 %v3965
        %3987 = vmatpush1.bf16.msra.mxu0 %v3964
        %3988 = vmatprep.subr.bf16.mxu0 %v3963
        %3989 = vmatpush1.bf16.msra.mxu0 %v3962
        %3990 = vmatprep.subr.bf16.mxu0 %v3961
        %3991 = vmatpush1.bf16.msra.mxu0 %v3960
        %3992 = vmatprep.subr.bf16.mxu0 %v3959
        %3993 = vmatpush1.bf16.msra.mxu0 %v3958
        %3994 = vmatprep.subr.bf16.mxu0 %v3957
        %3995 = vmatpush1.bf16.msra.mxu0 %v3956
        %3996 = vmatprep.subr.bf16.mxu0 %v3955
        %3997 = vmatpush1.bf16.msra.mxu0 %v3954
        %3998 = vmatprep.subr.bf16.mxu0 %v3953
        %3999 = vmatpush1.bf16.msra.mxu0 %v3952
        %4000 = vmatprep.subr.bf16.mxu0 0
        %4001 = vmatpush2.bf16.msra.mxu0 0
        %4002 = vmatprep.subr.bf16.mxu0 0
        %4003 = vmatpush2.bf16.msra.mxu0 0
        %4004 = vmatprep.subr.bf16.mxu0 0
        %4005 = vmatpush2.bf16.msra.mxu0 0
        %4006 = vmatprep.subr.bf16.mxu0 0
        %4007 = vmatpush2.bf16.msra.mxu0 0
        %4008 = vmatprep.subr.bf16.mxu0 0
        %4009 = vmatpush2.bf16.msra.mxu0 0
        %4010 = vmatprep.subr.bf16.mxu0 0
        %4011 = vmatpush2.bf16.msra.mxu0 0
        %4012 = vmatprep.subr.bf16.mxu0 0
        %4013 = vmatpush2.bf16.msra.mxu0 0
        %4014 = vmatprep.subr.bf16.mxu0 0
        %4015 = vmatpush2.bf16.msra.mxu0 0
        %4016 = vmatprep.mubr.bf16.mxu0 0
        %4017 = vmatmul.mubr.bf16.gmra.mxu0 %v3903
        %v4018 = vpop.f32.mrf.mxu0
        %v4019 = vadd.f32 0.0, %v4018
        %v4020 = vpop.f32.mrf.mxu0
        %v4021 = vadd.f32 0.0, %v4020
        %v4022 = vpop.f32.mrf.mxu0
        %v4023 = vpop.f32.mrf.mxu0
        %4024 = vdwg.mxu0
        %v4025 = vmul.f32 %v4019, %v3190
        %v4026 = vmul.f32 %v4021, %v3194
        %v4027 = vadd.f32 %v3900, %v4025
        %v4028 = vadd.f32 %v3901, %v4026
        %s4029 = scalar_lea.vmem %s5, 28
        %v4030 = vld [vmem:[%s4029] sm:$0xf]
        %4031 = vrot.lane.b32.xlu0 %v3753, 112
        %v4032 = vpop.permute.xlu0 %4031
        %4033 = vrot.lane.b32.xlu0 %v3754, 112
        %v4034 = vpop.permute.xlu0 %4033
        %4035 = vrot.lane.b32.xlu0 %v3755, 112
        %v4036 = vpop.permute.xlu0 %4035
        %4037 = vrot.lane.b32.xlu0 %v3756, 112
        %v4038 = vpop.permute.xlu0 %4037
        %4039 = vrot.lane.b32.xlu0 %v3757, 112
        %v4040 = vpop.permute.xlu0 %4039
        %4041 = vrot.lane.b32.xlu0 %v3758, 112
        %v4042 = vpop.permute.xlu0 %4041
        %4043 = vrot.lane.b32.xlu0 %v3759, 112
        %v4044 = vpop.permute.xlu0 %4043
        %4045 = vrot.lane.b32.xlu0 %v3760, 112
        %v4046 = vpop.permute.xlu0 %4045
        %4047 = vrot.lane.b32.xlu0 %v3761, 112
        %v4048 = vpop.permute.xlu0 %4047
        %4049 = vrot.lane.b32.xlu0 %v3762, 112
        %v4050 = vpop.permute.xlu0 %4049
        %4051 = vrot.lane.b32.xlu0 %v3763, 112
        %v4052 = vpop.permute.xlu0 %4051
        %4053 = vrot.lane.b32.xlu0 %v3764, 112
        %v4054 = vpop.permute.xlu0 %4053
        %4055 = vrot.lane.b32.xlu0 %v3765, 112
        %v4056 = vpop.permute.xlu0 %4055
        %4057 = vrot.lane.b32.xlu0 %v3766, 112
        %v4058 = vpop.permute.xlu0 %4057
        %4059 = vrot.lane.b32.xlu0 %v3767, 112
        %v4060 = vpop.permute.xlu0 %4059
        %4061 = vrot.lane.b32.xlu0 %v3768, 112
        %v4062 = vpop.permute.xlu0 %4061
        %4063 = vrot.lane.b32.xlu0 %v3769, 112
        %v4064 = vpop.permute.xlu0 %4063
        %4065 = vrot.lane.b32.xlu0 %v3770, 112
        %v4066 = vpop.permute.xlu0 %4065
        %4067 = vrot.lane.b32.xlu0 %v3771, 112
        %v4068 = vpop.permute.xlu0 %4067
        %4069 = vrot.lane.b32.xlu0 %v3772, 112
        %v4070 = vpop.permute.xlu0 %4069
        %4071 = vrot.lane.b32.xlu0 %v3773, 112
        %v4072 = vpop.permute.xlu0 %4071
        %4073 = vrot.lane.b32.xlu0 %v3774, 112
        %v4074 = vpop.permute.xlu0 %4073
        %4075 = vrot.lane.b32.xlu0 %v3775, 112
        %v4076 = vpop.permute.xlu0 %4075
        %4077 = vrot.lane.b32.xlu0 %v3776, 112
        %v4078 = vpop.permute.xlu0 %4077
        %v4079 = vsel %vm2181, %v4032, %v4034
        %v4080 = vsel %vm2181, %v4034, %v4036
        %v4081 = vsel %vm2181, %v4038, %v4040
        %v4082 = vsel %vm2181, %v4040, %v4042
        %v4083 = vsel %vm2181, %v4044, %v4046
        %v4084 = vsel %vm2181, %v4046, %v4048
        %v4085 = vsel %vm2181, %v4050, %v4052
        %v4086 = vsel %vm2181, %v4052, %v4054
        %v4087 = vsel %vm2181, %v4056, %v4058
        %v4088 = vsel %vm2181, %v4058, %v4060
        %v4089 = vsel %vm2181, %v4062, %v4064
        %v4090 = vsel %vm2181, %v4064, %v4066
        %v4091 = vsel %vm2181, %v4068, %v4070
        %v4092 = vsel %vm2181, %v4070, %v4072
        %v4093 = vsel %vm2181, %v4074, %v4076
        %v4094 = vsel %vm2181, %v4076, %v4078
        %4111 = vmatprep.subr.bf16.mxu0 %v4094
        %4112 = vmatpush1.bf16.msra.mxu0 %v4093
        %4113 = vmatprep.subr.bf16.mxu0 %v4092
        %4114 = vmatpush1.bf16.msra.mxu0 %v4091
        %4115 = vmatprep.subr.bf16.mxu0 %v4090
        %4116 = vmatpush1.bf16.msra.mxu0 %v4089
        %4117 = vmatprep.subr.bf16.mxu0 %v4088
        %4118 = vmatpush1.bf16.msra.mxu0 %v4087
        %4119 = vmatprep.subr.bf16.mxu0 %v4086
        %4120 = vmatpush1.bf16.msra.mxu0 %v4085
        %4121 = vmatprep.subr.bf16.mxu0 %v4084
        %4122 = vmatpush1.bf16.msra.mxu0 %v4083
        %4123 = vmatprep.subr.bf16.mxu0 %v4082
        %4124 = vmatpush1.bf16.msra.mxu0 %v4081
        %4125 = vmatprep.subr.bf16.mxu0 %v4080
        %4126 = vmatpush1.bf16.msra.mxu0 %v4079
        %4127 = vmatprep.subr.bf16.mxu0 0
        %4128 = vmatpush2.bf16.msra.mxu0 0
        %4129 = vmatprep.subr.bf16.mxu0 0
        %4130 = vmatpush2.bf16.msra.mxu0 0
        %4131 = vmatprep.subr.bf16.mxu0 0
        %4132 = vmatpush2.bf16.msra.mxu0 0
        %4133 = vmatprep.subr.bf16.mxu0 0
        %4134 = vmatpush2.bf16.msra.mxu0 0
        %4135 = vmatprep.subr.bf16.mxu0 0
        %4136 = vmatpush2.bf16.msra.mxu0 0
        %4137 = vmatprep.subr.bf16.mxu0 0
        %4138 = vmatpush2.bf16.msra.mxu0 0
        %4139 = vmatprep.subr.bf16.mxu0 0
        %4140 = vmatpush2.bf16.msra.mxu0 0
        %4141 = vmatprep.subr.bf16.mxu0 0
        %4142 = vmatpush2.bf16.msra.mxu0 0
        %4143 = vmatprep.mubr.bf16.mxu0 0
        %4144 = vmatmul.mubr.bf16.gmra.mxu0 %v4030
        %v4145 = vpop.f32.mrf.mxu0
        %v4146 = vadd.f32 0.0, %v4145
        %v4147 = vpop.f32.mrf.mxu0
        %v4148 = vadd.f32 0.0, %v4147
        %v4149 = vpop.f32.mrf.mxu0
        %v4150 = vpop.f32.mrf.mxu0
        %4151 = vdwg.mxu0
        %v4152 = vadd.f32 %v4027, %v4146
        %v4153 = vadd.f32 %v4028, %v4148
        %s4154 = scalar_lea.vmem %s5, 32
        %v4155 = vld [vmem:[%s4154] sm:$0xf]
        %4156 = vrot.lane.b32.xlu0 %v3753, 111
        %v4157 = vpop.permute.xlu0 %4156
        %4158 = vrot.lane.b32.xlu0 %v3754, 111
        %v4159 = vpop.permute.xlu0 %4158
        %4160 = vrot.lane.b32.xlu0 %v3755, 111
        %v4161 = vpop.permute.xlu0 %4160
        %4162 = vrot.lane.b32.xlu0 %v3756, 111
        %v4163 = vpop.permute.xlu0 %4162
        %4164 = vrot.lane.b32.xlu0 %v3757, 111
        %v4165 = vpop.permute.xlu0 %4164
        %4166 = vrot.lane.b32.xlu0 %v3758, 111
        %v4167 = vpop.permute.xlu0 %4166
        %4168 = vrot.lane.b32.xlu0 %v3759, 111
        %v4169 = vpop.permute.xlu0 %4168
        %4170 = vrot.lane.b32.xlu0 %v3760, 111
        %v4171 = vpop.permute.xlu0 %4170
        %4172 = vrot.lane.b32.xlu0 %v3761, 111
        %v4173 = vpop.permute.xlu0 %4172
        %4174 = vrot.lane.b32.xlu0 %v3762, 111
        %v4175 = vpop.permute.xlu0 %4174
        %4176 = vrot.lane.b32.xlu0 %v3763, 111
        %v4177 = vpop.permute.xlu0 %4176
        %4178 = vrot.lane.b32.xlu0 %v3764, 111
        %v4179 = vpop.permute.xlu0 %4178
        %4180 = vrot.lane.b32.xlu0 %v3765, 111
        %v4181 = vpop.permute.xlu0 %4180
        %4182 = vrot.lane.b32.xlu0 %v3766, 111
        %v4183 = vpop.permute.xlu0 %4182
        %4184 = vrot.lane.b32.xlu0 %v3767, 111
        %v4185 = vpop.permute.xlu0 %4184
        %4186 = vrot.lane.b32.xlu0 %v3768, 111
        %v4187 = vpop.permute.xlu0 %4186
        %4188 = vrot.lane.b32.xlu0 %v3769, 111
        %v4189 = vpop.permute.xlu0 %4188
        %4190 = vrot.lane.b32.xlu0 %v3770, 111
        %v4191 = vpop.permute.xlu0 %4190
        %4192 = vrot.lane.b32.xlu0 %v3771, 111
        %v4193 = vpop.permute.xlu0 %4192
        %4194 = vrot.lane.b32.xlu0 %v3772, 111
        %v4195 = vpop.permute.xlu0 %4194
        %4196 = vrot.lane.b32.xlu0 %v3773, 111
        %v4197 = vpop.permute.xlu0 %4196
        %4198 = vrot.lane.b32.xlu0 %v3774, 111
        %v4199 = vpop.permute.xlu0 %4198
        %4200 = vrot.lane.b32.xlu0 %v3775, 111
        %v4201 = vpop.permute.xlu0 %4200
        %4202 = vrot.lane.b32.xlu0 %v3776, 111
        %v4203 = vpop.permute.xlu0 %4202
        %v4204 = vsel %vm383, %v4157, %v4159
        %v4205 = vsel %vm383, %v4159, %v4161
        %v4206 = vsel %vm383, %v4163, %v4165
        %v4207 = vsel %vm383, %v4165, %v4167
        %v4208 = vsel %vm383, %v4169, %v4171
        %v4209 = vsel %vm383, %v4171, %v4173
        %v4210 = vsel %vm383, %v4175, %v4177
        %v4211 = vsel %vm383, %v4177, %v4179
        %v4212 = vsel %vm383, %v4181, %v4183
        %v4213 = vsel %vm383, %v4183, %v4185
        %v4214 = vsel %vm383, %v4187, %v4189
        %v4215 = vsel %vm383, %v4189, %v4191
        %v4216 = vsel %vm383, %v4193, %v4195
        %v4217 = vsel %vm383, %v4195, %v4197
        %v4218 = vsel %vm383, %v4199, %v4201
        %v4219 = vsel %vm383, %v4201, %v4203
        %4236 = vmatprep.subr.bf16.mxu0 %v4219
        %4237 = vmatpush1.bf16.msra.mxu0 %v4218
        %4238 = vmatprep.subr.bf16.mxu0 %v4217
        %4239 = vmatpush1.bf16.msra.mxu0 %v4216
        %4240 = vmatprep.subr.bf16.mxu0 %v4215
        %4241 = vmatpush1.bf16.msra.mxu0 %v4214
        %4242 = vmatprep.subr.bf16.mxu0 %v4213
        %4243 = vmatpush1.bf16.msra.mxu0 %v4212
        %4244 = vmatprep.subr.bf16.mxu0 %v4211
        %4245 = vmatpush1.bf16.msra.mxu0 %v4210
        %4246 = vmatprep.subr.bf16.mxu0 %v4209
        %4247 = vmatpush1.bf16.msra.mxu0 %v4208
        %4248 = vmatprep.subr.bf16.mxu0 %v4207
        %4249 = vmatpush1.bf16.msra.mxu0 %v4206
        %4250 = vmatprep.subr.bf16.mxu0 %v4205
        %4251 = vmatpush1.bf16.msra.mxu0 %v4204
        %4252 = vmatprep.subr.bf16.mxu0 0
        %4253 = vmatpush2.bf16.msra.mxu0 0
        %4254 = vmatprep.subr.bf16.mxu0 0
        %4255 = vmatpush2.bf16.msra.mxu0 0
        %4256 = vmatprep.subr.bf16.mxu0 0
        %4257 = vmatpush2.bf16.msra.mxu0 0
        %4258 = vmatprep.subr.bf16.mxu0 0
        %4259 = vmatpush2.bf16.msra.mxu0 0
        %4260 = vmatprep.subr.bf16.mxu0 0
        %4261 = vmatpush2.bf16.msra.mxu0 0
        %4262 = vmatprep.subr.bf16.mxu0 0
        %4263 = vmatpush2.bf16.msra.mxu0 0
        %4264 = vmatprep.subr.bf16.mxu0 0
        %4265 = vmatpush2.bf16.msra.mxu0 0
        %4266 = vmatprep.subr.bf16.mxu0 0
        %4267 = vmatpush2.bf16.msra.mxu0 0
        %4268 = vmatprep.mubr.bf16.mxu0 0
        %4269 = vmatmul.mubr.bf16.gmra.mxu0 %v4155
        %v4270 = vpop.f32.mrf.mxu0
        %v4271 = vadd.f32 0.0, %v4270
        %v4272 = vpop.f32.mrf.mxu0
        %v4273 = vadd.f32 0.0, %v4272
        %v4274 = vpop.f32.mrf.mxu0
        %v4275 = vpop.f32.mrf.mxu0
        %4276 = vdwg.mxu0
        %v4277 = vmul.f32 %v4271, %v3458
        %v4278 = vmul.f32 %v4273, %v3462
        %v4279 = vadd.f32 %v4152, %v4277
        %v4280 = vadd.f32 %v4153, %v4278
        %v4281 = vld [vmem:[%s6] sm:$0xff]
        %4283 = vset.pattern.permute.xlu0 0
        %4284 = vperm.xlu0 %4283, %v4281
        %v4285 = vpop.permute.xlu0 %4284
        %v4287 = vadd.f32 %v4279, %v4285
        %v4288 = vadd.f32 %v4280, %v4285
        %v4289 = vadd.f32 %v4287, 1.0
        %v4290 = vadd.f32 %v4288, 1.0
        %v4293 = vcombine.low %v4289, %v4290
        %v4295 = vmul.f32 %v340, %v4293
        %v4298 = vcombine.high %v4287, %v4288
        %v4300 = vadd.f32 %v4295, %v4298
        %4301 = vst [vmem:[%s286] sm:$0xff] %v4300
        %s4302 = sand.u32 %s186, 1
        %s4303 = scalar_lea.sflag [#allocation5], %s4302
        %s4304 = sand.u32 %s186, 1
        %s4305 = smul.addr %s4304, 8
        %s4306 = scalar_lea.vmem [#allocation4], %s4305
        // Predicated region
        $region49: #{tpu_custom_call.1} parent=47 // pred_check
          %p4307 = pneg %p196
        $region50: #{tpu_custom_call.1} parent=47 // pred_check_branch
          %4309 = sbr.rel (%p4307) target = $region52
        $region51: #{tpu_custom_call.1} parent=47 // pred_region
          %s4311 = ssub.s32 128, 128
          %4312 = vsyncadd %s4303, %s4311
          %s4313 = smul.addr %s21, 2
          %s4314 = smul.addr %s4313, 64
          %s4315 = scalar_lea.hbm %s7, %s4314
          %s4317 = sshll.u32 %s4306, 4
          %s4318 = int_to_ptr.vmem [resolvable:$true] %s4317
          %4320 = dma.vmem_to_hbm [thread:$0]  %s4318, 128, %s4315, %s4303
        $region52: #{tpu_custom_call.1} parent=47 // pred_fallthru
          _
      $region48: #{tpu_custom_call.1} parent=5 // pred_fallthru
        _
      %p4321 = scmp.le.s32.totalorder 2, %s16
      // Predicated region
      $region53: #{tpu_custom_call.1} parent=5 // pred_check
        %p4322 = pneg %p4321
      $region54: #{tpu_custom_call.1} parent=5 // pred_check_branch
        %4324 = sbr.rel (%p4322) target = $region56
      $region55: #{tpu_custom_call.1} parent=5 // pred_region
        %s4325 = ssub.s32 %s16, 2
        // Predicated region
        $region57: #{tpu_custom_call.1} parent=55 // pred_check
          %p4326 = pneg %p202
        $region58: #{tpu_custom_call.1} parent=55 // pred_check_branch
          %4328 = sbr.rel (%p4326) target = $region60
        $region59: #{tpu_custom_call.1} parent=55 // pred_region
          %s4329 = sand.u32 %s187, 1
          %s4330 = scalar_lea.sflag [#allocation5], %s4329
          %s4331 = sand.u32 %s187, 1
          %s4332 = smul.addr %s4331, 8
          %s4333 = scalar_lea.vmem [#allocation4], %s4332
          %4334 = dma.done %s4330, 128
        $region60: #{tpu_custom_call.1} parent=55 // pred_fallthru
          _
      $region56: #{tpu_custom_call.1} parent=5 // pred_fallthru
        _
    $region6: #{tpu_custom_call.1} parent=1 // loop_footer
      %s20 = sadd.s32 1, %s16
    $region7: #{tpu_custom_call.1} parent=1 // loop_footer_branch
      %15 = sbr.rel target = $region3
    $region8: #{tpu_custom_call.1} parent=1 // loop_exit
      _
    %4335 = vsyncpa [#allocation5], 1
    %s4336 = scalar_lea.sflag [#allocation5], 1
    %4337 = vsyncpa %s4336, 1

</llo_original>
